<compile_context>
chip_gen: v5e
topology: v5e:2x2
jax: 0.10.0
libtpu: 0.0.40
codegen_flags: <defaults>
</compile_context>

<pallas_src>
import math

import jax
import jax.numpy as jnp
from jax.experimental import pallas as pl
from jax.experimental.pallas import tpu as pltpu


# Lane-padded contraction / output dims (multiples of 128).
_K1_PAD = 128    # conv1 im2col K: 5*5*3  = 75  -> 128
_K2_PAD = 256    # conv2 im2col K: 5*5*6  = 150 -> 256
_KFC_PAD = 512   # fc1 input K:    16*5*5 = 400 -> 512
_N_PAD = 128     # all fc output dims -> 128 (lane-dense stores)


def _round_up(x, m):
    return (x + m - 1) // m * m


def _row_tile(m, cap):
    """Row tile: big enough to amortize per-step overhead; >=2 grid steps
    whenever m allows it (keeps both v7x TensorCores busy)."""
    if m < 16:
        return m                                   # tiny: one full-extent block
    return min(cap, _round_up(pl.cdiv(m, 2), 8))


# ----------------------------- Pallas kernels ------------------------------

def _conv_pool_kernel(p_ref, w_ref, b_ref, o_ref):
    """Fused valid-conv (im2col matmul) + 2x2/stride-2 max-pool + bias + ReLU.

    p_ref: [4, TM, Kp] bf16 -- im2col patches for the 4 positions of each 2x2
                               pool window; rows are batch-flattened (b, i, j)
    w_ref: [Kp, O]     bf16 -- zero-padded along Kp
    b_ref: [1, O]      f32
    o_ref: [TM, O]     bf16 -- pooled, ReLU'd conv output rows
    """
    w = w_ref[...]
    d0 = jnp.dot(p_ref[0], w, preferred_element_type=jnp.float32)
    d1 = jnp.dot(p_ref[1], w, preferred_element_type=jnp.float32)
    d2 = jnp.dot(p_ref[2], w, preferred_element_type=jnp.float32)
    d3 = jnp.dot(p_ref[3], w, preferred_element_type=jnp.float32)
    m = jnp.maximum(jnp.maximum(d0, d1), jnp.maximum(d2, d3))
    o_ref[...] = jnp.maximum(m + b_ref[...], 0.0).astype(o_ref.dtype)


def _mlp_kernel(x_ref, w1_ref, b1_ref, w2_ref, b2_ref, w3_ref, b3_ref, o_ref):
    """fc1+ReLU -> fc2+ReLU -> fc3, one kernel; K padded to 512, N to 128."""
    h = jnp.dot(x_ref[...], w1_ref[...], preferred_element_type=jnp.float32)
    h = jnp.maximum(h + b1_ref[...], 0.0)
    h = jnp.dot(h.astype(jnp.bfloat16), w2_ref[...],
                preferred_element_type=jnp.float32)
    h = jnp.maximum(h + b2_ref[...], 0.0)
    h = jnp.dot(h.astype(jnp.bfloat16), w3_ref[...],
                preferred_element_type=jnp.float32)
    o_ref[...] = h + b3_ref[...]


# ---------------------------- pallas_call wrappers ---------------------------

def conv_pool_pallas(patches, w, b):
    """patches: [4, M, Kp] bf16; w: [Kp, O] bf16; b: [1, O] f32 -> [M, O] bf16."""
    _, M, Kp = patches.shape
    _, O = w.shape
    TM = _row_tile(M, 1024)
    return pl.pallas_call(
        _conv_pool_kernel,
        out_shape=jax.ShapeDtypeStruct((M, O), jnp.bfloat16),
        grid=(pl.cdiv(M, TM),),
        in_specs=[
            pl.BlockSpec((4, TM, Kp), lambda i: (0, i, 0)),
            pl.BlockSpec((Kp, O), lambda i: (0, 0)),
            pl.BlockSpec((1, O), lambda i: (0, 0)),
        ],
        out_specs=pl.BlockSpec((TM, O), lambda i: (i, 0)),
        compiler_params=pltpu.CompilerParams(
            dimension_semantics=("parallel",)),
    )(patches, w, b)


def mlp_pallas(x, w1, b1, w2, b2, w3, b3):
    """x: [B, 512] bf16; weights bf16 (K/N padded); biases f32 [1, 128]."""
    B, K = x.shape
    N = w1.shape[1]
    TB = _row_tile(B, 512)
    return pl.pallas_call(
        _mlp_kernel,
        out_shape=jax.ShapeDtypeStruct((B, N), jnp.float32),
        grid=(pl.cdiv(B, TB),),
        in_specs=[
            pl.BlockSpec((TB, K), lambda i: (i, 0)),
            pl.BlockSpec((K, N), lambda i: (0, 0)),
            pl.BlockSpec((1, N), lambda i: (0, 0)),
            pl.BlockSpec((N, N), lambda i: (0, 0)),
            pl.BlockSpec((1, N), lambda i: (0, 0)),
            pl.BlockSpec((N, N), lambda i: (0, 0)),
            pl.BlockSpec((1, N), lambda i: (0, 0)),
        ],
        out_specs=pl.BlockSpec((TB, N), lambda i: (i, 0)),
        compiler_params=pltpu.CompilerParams(
            dimension_semantics=("parallel",)),
    )(x, w1, b1, w2, b2, w3, b3)


# ------------------------------- JAX glue -----------------------------------

def _pool_patches(x, k, k_pad):
    """NHWC bf16 -> ([4, B*Hp*Wp, k_pad], (Hp, Wp)).

    Element [2*pi+pj, b*Hp*Wp + i*Wp + j, (di*k+dj)*C + ci]
        = x[b, 2i+pi+di, 2j+pj+dj, ci]
    i.e. the conv im2col patch for conv-output pixel (2i+pi, 2j+pj), grouped
    by the four positions of each 2x2 pool window and batch-flattened along
    rows.  Columns are zero-padded to k_pad (lane multiple).  Pure data
    movement (strided slices + stack + pad), fused by XLA inside the jit.
    """
    B, H, W, C = x.shape
    Ho, Wo = H - k + 1, W - k + 1
    Hp, Wp = Ho // 2, Wo // 2
    groups = []
    for pi in range(2):
        for pj in range(2):
            taps = []
            for di in range(k):
                for dj in range(k):
                    taps.append(x[:, pi + di: pi + di + 2 * Hp: 2,
                                  pj + dj: pj + dj + 2 * Wp: 2, :])
            g = jnp.stack(taps, axis=3)                   # [B, Hp, Wp, k*k, C]
            groups.append(g.reshape(B * Hp * Wp, k * k * C))
    p = jnp.stack(groups, axis=0)                         # [4, B*Hp*Wp, k*k*C]
    if k_pad > k * k * C:
        p = jnp.pad(p, ((0, 0), (0, 0), (0, k_pad - k * k * C)))
    return p, (Hp, Wp)


# ----------------------- deterministic parameter init -----------------------

def _kaiming_uniform(key, shape, fan_in):
    # Matches nn.init.kaiming_uniform_(w, nonlinearity='relu'): bound=sqrt(6/fan_in)
    bound = math.sqrt(6.0 / fan_in)
    return jax.random.uniform(key, shape, jnp.float32, -bound, bound)


def _bias_uniform(key, shape, fan_in):
    bound = 1.0 / math.sqrt(fan_in)
    return jax.random.uniform(key, shape, jnp.float32, -bound, bound)


def init_params(key):
    ks = jax.random.split(key, 10)
    return {
        "conv1_w": _kaiming_uniform(ks[0], (6, 3, 5, 5), 3 * 5 * 5),
        "conv1_b": _bias_uniform(ks[1], (6,), 3 * 5 * 5),
        "conv2_w": _kaiming_uniform(ks[2], (16, 6, 5, 5), 6 * 5 * 5),
        "conv2_b": _bias_uniform(ks[3], (16,), 6 * 5 * 5),
        "fc1_w": _kaiming_uniform(ks[4], (120, 400), 400),  # torch [out, in]
        "fc1_b": _bias_uniform(ks[5], (120,), 400),
        "fc2_w": _kaiming_uniform(ks[6], (84, 120), 120),
        "fc2_b": _bias_uniform(ks[7], (84,), 120),
        "fc3_w": _kaiming_uniform(ks[8], (10, 84), 84),
        "fc3_b": _bias_uniform(ks[9], (10,), 84),
    }


def prepare_params(params):
    """One-time layout work: transpose / permute / pad / cast kernel weights."""
    def conv_w(w, k_pad):
        # [O, Cin, k, k] -> [k_pad, O] with (kh, kw, cin) row order, zero-padded
        O, Cin, k, _ = w.shape
        wm = jnp.transpose(w, (2, 3, 1, 0)).reshape(k * k * Cin, O)
        wm = jnp.pad(wm, ((0, k_pad - wm.shape[0]), (0, 0)))
        return wm.astype(jnp.bfloat16)

    def pad_to(a, rows, cols):
        return jnp.pad(a, ((0, rows - a.shape[0]), (0, cols - a.shape[1])))

    def pad_bias(b):
        return jnp.pad(b, (0, _N_PAD - b.shape[0])).reshape(1, _N_PAD).astype(jnp.float32)

    # fc1: torch.flatten uses (C, H, W) order; our conv2 output flattens as
    # (H*W, C).  Permute fc1's input dim once here instead of per forward.
    w1 = params["fc1_w"].reshape(120, 16, 25)             # [n, c, s]
    w1 = jnp.transpose(w1, (2, 1, 0)).reshape(400, 120)   # row index = s*16 + c
    w2 = params["fc2_w"].T                                # [120, 84]
    w3 = params["fc3_w"].T                                # [84, 10]

    return {
        "c1_w": conv_w(params["conv1_w"], _K1_PAD),
        "c1_b": params["conv1_b"].reshape(1, -1).astype(jnp.float32),
        "c2_w": conv_w(params["conv2_w"], _K2_PAD),
        "c2_b": params["conv2_b"].reshape(1, -1).astype(jnp.float32),
        "fc1_w": pad_to(w1, _KFC_PAD, _N_PAD).astype(jnp.bfloat16),
        "fc1_b": pad_bias(params["fc1_b"]),
        "fc2_w": pad_to(w2, _N_PAD, _N_PAD).astype(jnp.bfloat16),
        "fc2_b": pad_bias(params["fc2_b"]),
        "fc3_w": pad_to(w3, _N_PAD, _N_PAD).astype(jnp.bfloat16),
        "fc3_b": pad_bias(params["fc3_b"]),
    }


# ------------------------------ forward pass --------------------------------

@jax.jit
def lenet5_variant2_forward(x_nchw, pp):
    # x_nchw: [B, 3, 32, 32]
    x = jnp.transpose(x_nchw, (0, 2, 3, 1)).astype(jnp.bfloat16)   # NHWC, bf16
    B = x.shape[0]

    # conv1 + ReLU + pool1 (fused kernel, batch-flattened rows)
    p1, (hp1, wp1) = _pool_patches(x, 5, pp["c1_w"].shape[0])      # [4, B*196, 128]
    y1 = conv_pool_pallas(p1, pp["c1_w"], pp["c1_b"])              # [B*196, 6] bf16
    x2 = y1.reshape(B, hp1, wp1, pp["c1_w"].shape[1])              # [B,14,14,6]

    # conv2 + ReLU + pool2 (fused kernel)
    p2, _ = _pool_patches(x2, 5, pp["c2_w"].shape[0])              # [4, B*25, 256]
    y2 = conv_pool_pallas(p2, pp["c2_w"], pp["c2_b"])              # [B*25, 16] bf16
    # flatten in (spatial, channel) order -- fc1 weight columns were permuted
    # in prepare_params to exactly match torch.flatten's (C,H,W) order.
    feats = y2.reshape(B, -1)                                      # [B, 400] bf16
    feats = jnp.pad(feats, ((0, 0), (0, pp["fc1_w"].shape[0] - feats.shape[1])))

    # fc1 -> fc2 -> fc3 (fused kernel, K padded to 512, N padded to 128)
    logits = mlp_pallas(feats, pp["fc1_w"], pp["fc1_b"], pp["fc2_w"],
                        pp["fc2_b"], pp["fc3_w"], pp["fc3_b"])     # [B, 128] f32
    return logits[:, :10]


if __name__ == "__main__":
    key = jax.random.PRNGKey(0)
    pkey, xkey = jax.random.split(key)
    params = init_params(pkey)
    prepped = prepare_params(params)
    # CIFAR-10 style input (fc1 expects 16*5*5 => 32x32 spatial). Small batch.
    x = jax.random.normal(xkey, (2, 3, 32, 32), dtype=jnp.float32)
    out = lenet5_variant2_forward(x, prepped)
    out = jax.block_until_ready(out)
    assert out.shape == (2, 10), out.shape
    assert out.dtype == jnp.float32
    print("KERNEL_OK")
</pallas_src>

<mosaic_0001>
module attributes {stable_mosaic.version = 11 : i64} {
  func.func @_conv_pool_kernel(%arg0: i32, %arg1: memref<4x200x128xbf16, #tpu.memory_space<vmem>>, %arg2: memref<128x6xbf16, #tpu.memory_space<vmem>>, %arg3: memref<1x6xf32, #tpu.memory_space<vmem>>, %arg4: memref<200x6xbf16, #tpu.memory_space<vmem>>) attributes {dimension_semantics = [#tpu.dimension_semantics<parallel>], iteration_bounds = array<i64: 2>, scalar_prefetch = 0 : i64, scratch_operands = 0 : i64, tpu.core_type = #tpu.core_type<tc>, window_params = [{transform_indices = @transform_0, window_bounds = array<i64: 4, 200, 128>}, {pipeline_mode = #tpu.pipeline_mode<synchronous>, transform_indices = @transform_1, window_bounds = array<i64: 128, 6>}, {pipeline_mode = #tpu.pipeline_mode<synchronous>, transform_indices = @transform_2, window_bounds = array<i64: 1, 6>}, {transform_indices = @transform_3, window_bounds = array<i64: 200, 6>}]} {
    %c0 = arith.constant 0 : index
    %c0_0 = arith.constant 0 : index
    %0 = vector.load %arg2[%c0, %c0_0] : memref<128x6xbf16, #tpu.memory_space<vmem>>, vector<128x6xbf16>
    %c0_1 = arith.constant 0 : index
    %c0_2 = arith.constant 0 : index
    %c0_3 = arith.constant 0 : index
    %1 = vector.load %arg1[%c0_1, %c0_2, %c0_3] : memref<4x200x128xbf16, #tpu.memory_space<vmem>>, vector<1x200x128xbf16>
    %2 = vector.shape_cast %1 : vector<1x200x128xbf16> to vector<200x128xbf16>
    %cst = arith.constant dense<0.000000e+00> : vector<200x6xf32>
    %3 = tpu.matmul %2, %0, %cst {dimension_numbers = #tpu.dot_dimension_numbers<[1], [0], [0], [1], [0, 0, 1, 1], [], []>} : vector<200x128xbf16>, vector<128x6xbf16>, vector<200x6xf32> -> vector<200x6xf32>
    %c1 = arith.constant 1 : index
    %c0_4 = arith.constant 0 : index
    %c0_5 = arith.constant 0 : index
    %4 = vector.load %arg1[%c1, %c0_4, %c0_5] : memref<4x200x128xbf16, #tpu.memory_space<vmem>>, vector<1x200x128xbf16>
    %5 = vector.shape_cast %4 : vector<1x200x128xbf16> to vector<200x128xbf16>
    %cst_6 = arith.constant dense<0.000000e+00> : vector<200x6xf32>
    %6 = tpu.matmul %5, %0, %cst_6 {dimension_numbers = #tpu.dot_dimension_numbers<[1], [0], [0], [1], [0, 0, 1, 1], [], []>} : vector<200x128xbf16>, vector<128x6xbf16>, vector<200x6xf32> -> vector<200x6xf32>
    %c2 = arith.constant 2 : index
    %c0_7 = arith.constant 0 : index
    %c0_8 = arith.constant 0 : index
    %7 = vector.load %arg1[%c2, %c0_7, %c0_8] : memref<4x200x128xbf16, #tpu.memory_space<vmem>>, vector<1x200x128xbf16>
    %8 = vector.shape_cast %7 : vector<1x200x128xbf16> to vector<200x128xbf16>
    %cst_9 = arith.constant dense<0.000000e+00> : vector<200x6xf32>
    %9 = tpu.matmul %8, %0, %cst_9 {dimension_numbers = #tpu.dot_dimension_numbers<[1], [0], [0], [1], [0, 0, 1, 1], [], []>} : vector<200x128xbf16>, vector<128x6xbf16>, vector<200x6xf32> -> vector<200x6xf32>
    %c3 = arith.constant 3 : index
    %c0_10 = arith.constant 0 : index
    %c0_11 = arith.constant 0 : index
    %10 = vector.load %arg1[%c3, %c0_10, %c0_11] : memref<4x200x128xbf16, #tpu.memory_space<vmem>>, vector<1x200x128xbf16>
    %11 = vector.shape_cast %10 : vector<1x200x128xbf16> to vector<200x128xbf16>
    %cst_12 = arith.constant dense<0.000000e+00> : vector<200x6xf32>
    %12 = tpu.matmul %11, %0, %cst_12 {dimension_numbers = #tpu.dot_dimension_numbers<[1], [0], [0], [1], [0, 0, 1, 1], [], []>} : vector<200x128xbf16>, vector<128x6xbf16>, vector<200x6xf32> -> vector<200x6xf32>
    %13 = arith.maximumf %3, %6 : vector<200x6xf32>
    %14 = arith.maximumf %9, %12 : vector<200x6xf32>
    %15 = arith.maximumf %13, %14 : vector<200x6xf32>
    %c0_13 = arith.constant 0 : index
    %c0_14 = arith.constant 0 : index
    %16 = vector.load %arg3[%c0_13, %c0_14] : memref<1x6xf32, #tpu.memory_space<vmem>>, vector<1x6xf32>
    %17 = vector.broadcast %16 : vector<1x6xf32> to vector<200x6xf32>
    %18 = arith.addf %15, %17 : vector<200x6xf32>
    %cst_15 = arith.constant 0.000000e+00 : f32
    %19 = vector.broadcast %cst_15 : f32 to vector<200x6xf32>
    %20 = arith.maximumf %18, %19 : vector<200x6xf32>
    %21 = arith.truncf %20 : vector<200x6xf32> to vector<200x6xbf16>
    %c0_16 = arith.constant 0 : index
    %c0_17 = arith.constant 0 : index
    %22 = vector.load %arg4[%c0_16, %c0_17] : memref<200x6xbf16, #tpu.memory_space<vmem>>, vector<200x6xbf16>
    tpu.vector_store %arg4[%c0_16, %c0_17], %21 {strides = array<i32>} : memref<200x6xbf16, #tpu.memory_space<vmem>>, vector<200x6xbf16>,
    return
  }
  func.func @transform_0(%arg0: i32) -> (i32, i32, i32) {
    %c0_i32 = arith.constant 0 : i32
    %c0_i32_0 = arith.constant 0 : i32
    %c0_i32_1 = arith.constant 0 : i32
    return %c0_i32, %arg0, %c0_i32_0 : i32, i32, i32
  }
  func.func @transform_1(%arg0: i32) -> (i32, i32) {
    %c0_i32 = arith.constant 0 : i32
    %c0_i32_0 = arith.constant 0 : i32
    %c0_i32_1 = arith.constant 0 : i32
    return %c0_i32, %c0_i32_0 : i32, i32
  }
  func.func @transform_2(%arg0: i32) -> (i32, i32) {
    %c0_i32 = arith.constant 0 : i32
    %c0_i32_0 = arith.constant 0 : i32
    %c0_i32_1 = arith.constant 0 : i32
    return %c0_i32, %c0_i32_0 : i32, i32
  }
  func.func @transform_3(%arg0: i32) -> (i32, i32) {
    %c0_i32 = arith.constant 0 : i32
    %c0_i32_0 = arith.constant 0 : i32
    return %arg0, %c0_i32 : i32, i32
  }
}

module attributes {stable_mosaic.version = 11 : i64} {
  func.func @_conv_pool_kernel(%arg0: i32, %arg1: memref<4x32x256xbf16, #tpu.memory_space<vmem>>, %arg2: memref<256x16xbf16, #tpu.memory_space<vmem>>, %arg3: memref<1x16xf32, #tpu.memory_space<vmem>>, %arg4: memref<32x16xbf16, #tpu.memory_space<vmem>>) attributes {dimension_semantics = [#tpu.dimension_semantics<parallel>], iteration_bounds = array<i64: 2>, scalar_prefetch = 0 : i64, scratch_operands = 0 : i64, tpu.core_type = #tpu.core_type<tc>, window_params = [{transform_indices = @transform_0, window_bounds = array<i64: 4, 32, 256>}, {pipeline_mode = #tpu.pipeline_mode<synchronous>, transform_indices = @transform_1, window_bounds = array<i64: 256, 16>}, {pipeline_mode = #tpu.pipeline_mode<synchronous>, transform_indices = @transform_2, window_bounds = array<i64: 1, 16>}, {transform_indices = @transform_3, window_bounds = array<i64: 32, 16>}]} {
    %c0 = arith.constant 0 : index
    %c0_0 = arith.constant 0 : index
    %0 = vector.load %arg2[%c0, %c0_0] : memref<256x16xbf16, #tpu.memory_space<vmem>>, vector<256x16xbf16>
    %c0_1 = arith.constant 0 : index
    %c0_2 = arith.constant 0 : index
    %c0_3 = arith.constant 0 : index
    %1 = vector.load %arg1[%c0_1, %c0_2, %c0_3] : memref<4x32x256xbf16, #tpu.memory_space<vmem>>, vector<1x32x256xbf16>
    %2 = vector.shape_cast %1 : vector<1x32x256xbf16> to vector<32x256xbf16>
    %cst = arith.constant dense<0.000000e+00> : vector<32x16xf32>
    %3 = tpu.matmul %2, %0, %cst {dimension_numbers = #tpu.dot_dimension_numbers<[1], [0], [0], [1], [0, 0, 1, 1], [], []>} : vector<32x256xbf16>, vector<256x16xbf16>, vector<32x16xf32> -> vector<32x16xf32>
    %c1 = arith.constant 1 : index
    %c0_4 = arith.constant 0 : index
    %c0_5 = arith.constant 0 : index
    %4 = vector.load %arg1[%c1, %c0_4, %c0_5] : memref<4x32x256xbf16, #tpu.memory_space<vmem>>, vector<1x32x256xbf16>
    %5 = vector.shape_cast %4 : vector<1x32x256xbf16> to vector<32x256xbf16>
    %cst_6 = arith.constant dense<0.000000e+00> : vector<32x16xf32>
    %6 = tpu.matmul %5, %0, %cst_6 {dimension_numbers = #tpu.dot_dimension_numbers<[1], [0], [0], [1], [0, 0, 1, 1], [], []>} : vector<32x256xbf16>, vector<256x16xbf16>, vector<32x16xf32> -> vector<32x16xf32>
    %c2 = arith.constant 2 : index
    %c0_7 = arith.constant 0 : index
    %c0_8 = arith.constant 0 : index
    %7 = vector.load %arg1[%c2, %c0_7, %c0_8] : memref<4x32x256xbf16, #tpu.memory_space<vmem>>, vector<1x32x256xbf16>
    %8 = vector.shape_cast %7 : vector<1x32x256xbf16> to vector<32x256xbf16>
    %cst_9 = arith.constant dense<0.000000e+00> : vector<32x16xf32>
    %9 = tpu.matmul %8, %0, %cst_9 {dimension_numbers = #tpu.dot_dimension_numbers<[1], [0], [0], [1], [0, 0, 1, 1], [], []>} : vector<32x256xbf16>, vector<256x16xbf16>, vector<32x16xf32> -> vector<32x16xf32>
    %c3 = arith.constant 3 : index
    %c0_10 = arith.constant 0 : index
    %c0_11 = arith.constant 0 : index
    %10 = vector.load %arg1[%c3, %c0_10, %c0_11] : memref<4x32x256xbf16, #tpu.memory_space<vmem>>, vector<1x32x256xbf16>
    %11 = vector.shape_cast %10 : vector<1x32x256xbf16> to vector<32x256xbf16>
    %cst_12 = arith.constant dense<0.000000e+00> : vector<32x16xf32>
    %12 = tpu.matmul %11, %0, %cst_12 {dimension_numbers = #tpu.dot_dimension_numbers<[1], [0], [0], [1], [0, 0, 1, 1], [], []>} : vector<32x256xbf16>, vector<256x16xbf16>, vector<32x16xf32> -> vector<32x16xf32>
    %13 = arith.maximumf %3, %6 : vector<32x16xf32>
    %14 = arith.maximumf %9, %12 : vector<32x16xf32>
    %15 = arith.maximumf %13, %14 : vector<32x16xf32>
    %c0_13 = arith.constant 0 : index
    %c0_14 = arith.constant 0 : index
    %16 = vector.load %arg3[%c0_13, %c0_14] : memref<1x16xf32, #tpu.memory_space<vmem>>, vector<1x16xf32>
    %17 = vector.broadcast %16 : vector<1x16xf32> to vector<32x16xf32>
    %18 = arith.addf %15, %17 : vector<32x16xf32>
    %cst_15 = arith.constant 0.000000e+00 : f32
    %19 = vector.broadcast %cst_15 : f32 to vector<32x16xf32>
    %20 = arith.maximumf %18, %19 : vector<32x16xf32>
    %21 = arith.truncf %20 : vector<32x16xf32> to vector<32x16xbf16>
    %c0_16 = arith.constant 0 : index
    %c0_17 = arith.constant 0 : index
    %22 = vector.load %arg4[%c0_16, %c0_17] : memref<32x16xbf16, #tpu.memory_space<vmem>>, vector<32x16xbf16>
    tpu.vector_store %arg4[%c0_16, %c0_17], %21 {strides = array<i32>} : memref<32x16xbf16, #tpu.memory_space<vmem>>, vector<32x16xbf16>,
    return
  }
  func.func @transform_0(%arg0: i32) -> (i32, i32, i32) {
    %c0_i32 = arith.constant 0 : i32
    %c0_i32_0 = arith.constant 0 : i32
    %c0_i32_1 = arith.constant 0 : i32
    return %c0_i32, %arg0, %c0_i32_0 : i32, i32, i32
  }
  func.func @transform_1(%arg0: i32) -> (i32, i32) {
    %c0_i32 = arith.constant 0 : i32
    %c0_i32_0 = arith.constant 0 : i32
    %c0_i32_1 = arith.constant 0 : i32
    return %c0_i32, %c0_i32_0 : i32, i32
  }
  func.func @transform_2(%arg0: i32) -> (i32, i32) {
    %c0_i32 = arith.constant 0 : i32
    %c0_i32_0 = arith.constant 0 : i32
    %c0_i32_1 = arith.constant 0 : i32
    return %c0_i32, %c0_i32_0 : i32, i32
  }
  func.func @transform_3(%arg0: i32) -> (i32, i32) {
    %c0_i32 = arith.constant 0 : i32
    %c0_i32_0 = arith.constant 0 : i32
    return %arg0, %c0_i32 : i32, i32
  }
}

module attributes {stable_mosaic.version = 11 : i64} {
  func.func @_mlp_kernel(%arg0: i32, %arg1: memref<2x512xbf16, #tpu.memory_space<vmem>>, %arg2: memref<512x128xbf16, #tpu.memory_space<vmem>>, %arg3: memref<1x128xf32, #tpu.memory_space<vmem>>, %arg4: memref<128x128xbf16, #tpu.memory_space<vmem>>, %arg5: memref<1x128xf32, #tpu.memory_space<vmem>>, %arg6: memref<128x128xbf16, #tpu.memory_space<vmem>>, %arg7: memref<1x128xf32, #tpu.memory_space<vmem>>, %arg8: memref<2x128xf32, #tpu.memory_space<vmem>>) attributes {dimension_semantics = [#tpu.dimension_semantics<parallel>], iteration_bounds = array<i64: 1>, scalar_prefetch = 0 : i64, scratch_operands = 0 : i64, tpu.core_type = #tpu.core_type<tc>, window_params = [{transform_indices = @transform_0, window_bounds = array<i64: 2, 512>}, {pipeline_mode = #tpu.pipeline_mode<synchronous>, transform_indices = @transform_1, window_bounds = array<i64: 512, 128>}, {pipeline_mode = #tpu.pipeline_mode<synchronous>, transform_indices = @transform_2, window_bounds = array<i64: 1, 128>}, {pipeline_mode = #tpu.pipeline_mode<synchronous>, transform_indices = @transform_3, window_bounds = array<i64: 128, 128>}, {pipeline_mode = #tpu.pipeline_mode<synchronous>, transform_indices = @transform_4, window_bounds = array<i64: 1, 128>}, {pipeline_mode = #tpu.pipeline_mode<synchronous>, transform_indices = @transform_5, window_bounds = array<i64: 128, 128>}, {pipeline_mode = #tpu.pipeline_mode<synchronous>, transform_indices = @transform_6, window_bounds = array<i64: 1, 128>}, {transform_indices = @transform_7, window_bounds = array<i64: 2, 128>}]} {
    %c0 = arith.constant 0 : index
    %c0_0 = arith.constant 0 : index
    %0 = vector.load %arg1[%c0, %c0_0] : memref<2x512xbf16, #tpu.memory_space<vmem>>, vector<2x512xbf16>
    %c0_1 = arith.constant 0 : index
    %c0_2 = arith.constant 0 : index
    %1 = vector.load %arg2[%c0_1, %c0_2] : memref<512x128xbf16, #tpu.memory_space<vmem>>, vector<512x128xbf16>
    %cst = arith.constant dense<0.000000e+00> : vector<2x128xf32>
    %2 = tpu.matmul %0, %1, %cst {dimension_numbers = #tpu.dot_dimension_numbers<[1], [0], [0], [1], [0, 0, 1, 1], [], []>} : vector<2x512xbf16>, vector<512x128xbf16>, vector<2x128xf32> -> vector<2x128xf32>
    %c0_3 = arith.constant 0 : index
    %c0_4 = arith.constant 0 : index
    %3 = vector.load %arg3[%c0_3, %c0_4] : memref<1x128xf32, #tpu.memory_space<vmem>>, vector<1x128xf32>
    %4 = vector.broadcast %3 : vector<1x128xf32> to vector<2x128xf32>
    %5 = arith.addf %2, %4 : vector<2x128xf32>
    %cst_5 = arith.constant 0.000000e+00 : f32
    %6 = vector.broadcast %cst_5 : f32 to vector<2x128xf32>
    %7 = arith.maximumf %5, %6 : vector<2x128xf32>
    %8 = arith.truncf %7 : vector<2x128xf32> to vector<2x128xbf16>
    %c0_6 = arith.constant 0 : index
    %c0_7 = arith.constant 0 : index
    %9 = vector.load %arg4[%c0_6, %c0_7] : memref<128x128xbf16, #tpu.memory_space<vmem>>, vector<128x128xbf16>
    %cst_8 = arith.constant dense<0.000000e+00> : vector<2x128xf32>
    %10 = tpu.matmul %8, %9, %cst_8 {dimension_numbers = #tpu.dot_dimension_numbers<[1], [0], [0], [1], [0, 0, 1, 1], [], []>} : vector<2x128xbf16>, vector<128x128xbf16>, vector<2x128xf32> -> vector<2x128xf32>
    %c0_9 = arith.constant 0 : index
    %c0_10 = arith.constant 0 : index
    %11 = vector.load %arg5[%c0_9, %c0_10] : memref<1x128xf32, #tpu.memory_space<vmem>>, vector<1x128xf32>
    %12 = vector.broadcast %11 : vector<1x128xf32> to vector<2x128xf32>
    %13 = arith.addf %10, %12 : vector<2x128xf32>
    %cst_11 = arith.constant 0.000000e+00 : f32
    %14 = vector.broadcast %cst_11 : f32 to vector<2x128xf32>
    %15 = arith.maximumf %13, %14 : vector<2x128xf32>
    %16 = arith.truncf %15 : vector<2x128xf32> to vector<2x128xbf16>
    %c0_12 = arith.constant 0 : index
    %c0_13 = arith.constant 0 : index
    %17 = vector.load %arg6[%c0_12, %c0_13] : memref<128x128xbf16, #tpu.memory_space<vmem>>, vector<128x128xbf16>
    %cst_14 = arith.constant dense<0.000000e+00> : vector<2x128xf32>
    %18 = tpu.matmul %16, %17, %cst_14 {dimension_numbers = #tpu.dot_dimension_numbers<[1], [0], [0], [1], [0, 0, 1, 1], [], []>} : vector<2x128xbf16>, vector<128x128xbf16>, vector<2x128xf32> -> vector<2x128xf32>
    %c0_15 = arith.constant 0 : index
    %c0_16 = arith.constant 0 : index
    %19 = vector.load %arg7[%c0_15, %c0_16] : memref<1x128xf32, #tpu.memory_space<vmem>>, vector<1x128xf32>
    %20 = vector.broadcast %19 : vector<1x128xf32> to vector<2x128xf32>
    %21 = arith.addf %18, %20 : vector<2x128xf32>
    %c0_17 = arith.constant 0 : index
    %c0_18 = arith.constant 0 : index
    %22 = vector.load %arg8[%c0_17, %c0_18] : memref<2x128xf32, #tpu.memory_space<vmem>>, vector<2x128xf32>
    tpu.vector_store %arg8[%c0_17, %c0_18], %21 {strides = array<i32>} : memref<2x128xf32, #tpu.memory_space<vmem>>, vector<2x128xf32>,
    return
  }
  func.func @transform_0(%arg0: i32) -> (i32, i32) {
    %c0_i32 = arith.constant 0 : i32
    %c0_i32_0 = arith.constant 0 : i32
    return %arg0, %c0_i32 : i32, i32
  }
  func.func @transform_1(%arg0: i32) -> (i32, i32) {
    %c0_i32 = arith.constant 0 : i32
    %c0_i32_0 = arith.constant 0 : i32
    %c0_i32_1 = arith.constant 0 : i32
    return %c0_i32, %c0_i32_0 : i32, i32
  }
  func.func @transform_2(%arg0: i32) -> (i32, i32) {
    %c0_i32 = arith.constant 0 : i32
    %c0_i32_0 = arith.constant 0 : i32
    %c0_i32_1 = arith.constant 0 : i32
    return %c0_i32, %c0_i32_0 : i32, i32
  }
  func.func @transform_3(%arg0: i32) -> (i32, i32) {
    %c0_i32 = arith.constant 0 : i32
    %c0_i32_0 = arith.constant 0 : i32
    %c0_i32_1 = arith.constant 0 : i32
    return %c0_i32, %c0_i32_0 : i32, i32
  }
  func.func @transform_4(%arg0: i32) -> (i32, i32) {
    %c0_i32 = arith.constant 0 : i32
    %c0_i32_0 = arith.constant 0 : i32
    %c0_i32_1 = arith.constant 0 : i32
    return %c0_i32, %c0_i32_0 : i32, i32
  }
  func.func @transform_5(%arg0: i32) -> (i32, i32) {
    %c0_i32 = arith.constant 0 : i32
    %c0_i32_0 = arith.constant 0 : i32
    %c0_i32_1 = arith.constant 0 : i32
    return %c0_i32, %c0_i32_0 : i32, i32
  }
  func.func @transform_6(%arg0: i32) -> (i32, i32) {
    %c0_i32 = arith.constant 0 : i32
    %c0_i32_0 = arith.constant 0 : i32
    %c0_i32_1 = arith.constant 0 : i32
    return %c0_i32, %c0_i32_0 : i32, i32
  }
  func.func @transform_7(%arg0: i32) -> (i32, i32) {
    %c0_i32 = arith.constant 0 : i32
    %c0_i32_0 = arith.constant 0 : i32
    return %arg0, %c0_i32 : i32, i32
  }
}

</mosaic_0001>

<llo_original>
// kernel: lenet5_variant2_forward.3
$region0: #{lenet5_variant2_forward.3}
  #allocation0 [shape = 'u32[]', space=smem, size = 0x4, offset = 0x4, fixed_abs, tag = 'smem constant byte address 0x4 - core index']
  #allocation1 [shape = 'u32[72,128]{1,0:T(1,128)}', space=vmem, size = 0x9000, scoped, tag = 'internal scratch']
  %s0 = inlined_call_operand.vmem [shape: bf16[4,392,128], index: 0, kind: input, shape index: {}]
  %s1 = inlined_call_operand.vmem [shape: bf16[128,6], index: 1, kind: input, shape index: {}]
  %s2 = inlined_call_operand.vmem [shape: f32[1,6], index: 2, kind: input, shape index: {}]
  %s3 = inlined_call_operand.vmem [shape: bf16[392,6], index: 3, kind: output, shape index: {}]
  %s4 = sld [smem:[#allocation0]]
  $region151: #{lenet5_variant2_forward.3} parent=0
    _
  %s6 = ssub.s32 1, %s4
  %s7 = scalar_select 0, %s6, %s4
  $region1: #{lenet5_variant2_forward.3} parent=0
    #allocation2 [shape = 'u8[409600]{0}', space=vmem, size = 0x64000, scoped, tag = 'input window, operand 0']
    #allocation3 [shape = 'u8[102400]{0}', space=vmem, size = 0x19000, scoped, tag = 'output window, operand 0']
    loop: start=0, step=1, limit=4
    $region2: #{lenet5_variant2_forward.3} parent=1 // loop_pre_header
      _
    $region3: #{lenet5_variant2_forward.3} parent=1 // loop_header
      %s9 = sphi 0, %s13
      %p10 = scmp.ge.s32.totalorder %s9, 4
      %s19 = sphi 0, %s21
      %s22 = sphi 0, %s19
      %s23 = sphi 0, %s22
      %s39 = sphi 0, %s23
      %s43 = sphi 0, %s43
      %s45 = sphi 0, %s43
      %s46 = sphi 0, %s45
      %s60 = sphi 0, %s46
      %s64 = sphi 0, %s64
      %s66 = sphi 0, %s64
      %s67 = sphi 0, %s66
      %s81 = sphi 0, %s67
      %s87 = sphi 0, %s89
      %s90 = sphi 0, %s87
      %s91 = sphi 0, %s90
      %s107 = sphi 0, %s91
    $region4: #{lenet5_variant2_forward.3} parent=1 // loop_header_branch
      %12 = sbr.rel (%p10) target = $region8
    $region5: #{lenet5_variant2_forward.3} parent=1 // loop_body
      %s14 = ssub.s32 %s9, 1
      %s15 = ssub.s32 %s9, 2
      %s16 = sadd.s32 %s9, 1
      %s17 = ssub.s32 %s9, %s16
      %p18 = scmp.eq.s32.totalorder %s17, 0
      %s20 = sadd.s32 %s19, 1
      %s21 = scalar_select %p18, %s19, %s20
      %p24 = pneg %p18
      %p25 = scmp.eq.s32.totalorder %s9, 1
      %p26 = por %p24, %p25
      %p27 = scmp.ne.s32.totalorder %s19, %s22
      %p28 = scmp.eq.s32.totalorder %s9, 0
      %p29 = por %p27, %p28
      %p30 = scmp.ne.s32.totalorder %s19, %s22
      %p31 = scmp.eq.s32.totalorder %s14, 1
      %p32 = por %p30, %p31
      %p33 = scmp.ne.s32.totalorder %s22, %s23
      %p34 = scmp.eq.s32.totalorder %s14, 0
      %p35 = por %p33, %p34
      %p36 = scmp.ne.s32.totalorder %s22, %s23
      %p37 = scmp.eq.s32.totalorder %s15, 1
      %p38 = por %p36, %p37
      %p40 = scmp.ne.s32.totalorder %s23, %s39
      %p41 = scmp.eq.s32.totalorder %s15, 0
      %p42 = por %p40, %p41
      %s44 = sadd.s32 %s43, 1
      %p47 = scmp.eq.s32.totalorder %s9, 1
      %p48 = scmp.ne.s32.totalorder %s43, %s45
      %p49 = scmp.eq.s32.totalorder %s9, 0
      %p50 = por %p48, %p49
      %p51 = scmp.ne.s32.totalorder %s43, %s45
      %p52 = scmp.eq.s32.totalorder %s14, 1
      %p53 = por %p51, %p52
      %p54 = scmp.ne.s32.totalorder %s45, %s46
      %p55 = scmp.eq.s32.totalorder %s14, 0
      %p56 = por %p54, %p55
      %p57 = scmp.ne.s32.totalorder %s45, %s46
      %p58 = scmp.eq.s32.totalorder %s15, 1
      %p59 = por %p57, %p58
      %p61 = scmp.ne.s32.totalorder %s46, %s60
      %p62 = scmp.eq.s32.totalorder %s15, 0
      %p63 = por %p61, %p62
      %s65 = sadd.s32 %s64, 1
      %p68 = scmp.eq.s32.totalorder %s9, 1
      %p69 = scmp.ne.s32.totalorder %s64, %s66
      %p70 = scmp.eq.s32.totalorder %s9, 0
      %p71 = por %p69, %p70
      %p72 = scmp.ne.s32.totalorder %s64, %s66
      %p73 = scmp.eq.s32.totalorder %s14, 1
      %p74 = por %p72, %p73
      %p75 = scmp.ne.s32.totalorder %s66, %s67
      %p76 = scmp.eq.s32.totalorder %s14, 0
      %p77 = por %p75, %p76
      %p78 = scmp.ne.s32.totalorder %s66, %s67
      %p79 = scmp.eq.s32.totalorder %s15, 1
      %p80 = por %p78, %p79
      %p82 = scmp.ne.s32.totalorder %s67, %s81
      %p83 = scmp.eq.s32.totalorder %s15, 0
      %p84 = por %p82, %p83
      %s85 = ssub.s32 %s9, %s16
      %p86 = scmp.eq.s32.totalorder %s85, 0
      %s88 = sadd.s32 %s87, 1
      %s89 = scalar_select %p86, %s87, %s88
      %p92 = pneg %p86
      %p93 = scmp.eq.s32.totalorder %s9, 1
      %p94 = por %p92, %p93
      %p95 = scmp.ne.s32.totalorder %s87, %s90
      %p96 = scmp.eq.s32.totalorder %s9, 0
      %p97 = por %p95, %p96
      %p98 = scmp.ne.s32.totalorder %s87, %s90
      %p99 = scmp.eq.s32.totalorder %s14, 1
      %p100 = por %p98, %p99
      %p101 = scmp.ne.s32.totalorder %s90, %s91
      %p102 = scmp.eq.s32.totalorder %s14, 0
      %p103 = por %p101, %p102
      %p104 = scmp.ne.s32.totalorder %s90, %s91
      %p105 = scmp.eq.s32.totalorder %s15, 1
      %p106 = por %p104, %p105
      %p108 = scmp.ne.s32.totalorder %s91, %s107
      %p109 = scmp.eq.s32.totalorder %s15, 0
      %p110 = por %p108, %p109
      %p111 = scmp.le.s32.totalorder 1, %s9
      %p112 = scmp.lt.s32.totalorder %s9, 3
      %p113 = pnand %p111, %p112
      %p114 = pneg %p113
      // Predicated region
      $region9: #{lenet5_variant2_forward.3} parent=5 // pred_check
        _
      $region10: #{lenet5_variant2_forward.3} parent=5 // pred_check_branch
        %116 = sbr.rel (%p113) target = $region12
      $region11: #{lenet5_variant2_forward.3} parent=5 // pred_region
        %s117 = ssub.s32 %s9, 1
        // Predicated region
        $region13: #{lenet5_variant2_forward.3} parent=11 // pred_check
          %p118 = pneg %p56
        $region14: #{lenet5_variant2_forward.3} parent=11 // pred_check_branch
          %120 = sbr.rel (%p118) target = $region16
        $region15: #{lenet5_variant2_forward.3} parent=11 // pred_region
          _
        $region16: #{lenet5_variant2_forward.3} parent=11 // pred_fallthru
          _
        // Predicated region
        $region17: #{lenet5_variant2_forward.3} parent=11 // pred_check
          %p121 = pneg %p77
        $region18: #{lenet5_variant2_forward.3} parent=11 // pred_check_branch
          %123 = sbr.rel (%p121) target = $region20
        $region19: #{lenet5_variant2_forward.3} parent=11 // pred_region
          _
        $region20: #{lenet5_variant2_forward.3} parent=11 // pred_fallthru
          _
      $region12: #{lenet5_variant2_forward.3} parent=5 // pred_fallthru
        _
      %p124 = scmp.lt.s32.totalorder %s9, 2
      // Predicated region
      $region21: #{lenet5_variant2_forward.3} parent=5 // pred_check
        %p125 = pneg %p124
      $region22: #{lenet5_variant2_forward.3} parent=5 // pred_check_branch
        %127 = sbr.rel (%p125) target = $region24
      $region23: #{lenet5_variant2_forward.3} parent=5 // pred_region
        // Predicated region
        $region25: #{lenet5_variant2_forward.3} parent=23 // pred_check
          %p128 = pneg %p29
        $region26: #{lenet5_variant2_forward.3} parent=23 // pred_check_branch
          %130 = sbr.rel (%p128) target = $region28
        $region27: #{lenet5_variant2_forward.3} parent=23 // pred_region
          %s131 = sand.u32 %s19, 1
          %s132 = sand.u32 %s19, 1
          %s133 = smul.addr %s132, 400
          %s134 = scalar_lea.vmem [#allocation2], %s133
          %s135 = smul.u32 25, %s9
          %s136 = ssub.s32 49, %s135
          %p137 = scmp.lt.s32.totalorder %s136, 25
          %s138 = scalar_select %p137, %s136, 25
          %s139 = smul.u32 16, %s138
          %p140 = scmp.ne.s32.totalorder 0, %s139
          %s141 = smul.addr %s135, 4
          %s142 = scalar_lea.vmem %s0, %s141
          // Predicated region
          $region29: #{lenet5_variant2_forward.3} parent=27 // pred_check
            %p143 = pneg %p140
          $region30: #{lenet5_variant2_forward.3} parent=27 // pred_check_branch
            %145 = sbr.rel (%p143) target = $region32
          $region31: #{lenet5_variant2_forward.3} parent=27 // pred_region
            // Predicated region
            $region33: #{lenet5_variant2_forward.3} parent=31 // pred_check
              _
            $region34: #{lenet5_variant2_forward.3} parent=31 // pred_check_branch
              %147 = sbr.rel target = $region36
            $region35: #{lenet5_variant2_forward.3} parent=31 // pred_region
              // Predicated region
              $region55: #{lenet5_variant2_forward.3} parent=35 // pred_check
                _
              $region56: #{lenet5_variant2_forward.3} parent=35 // pred_check_branch
                %265 = sbr.rel (0) target = $region58
              $region57: #{lenet5_variant2_forward.3} parent=35 // pred_region
                %s266 = sshrl.u32 %s138, 4
                // While loop
                $region59: #{lenet5_variant2_forward.3} parent=57 // loop_pre_header
                  _
                $region60: #{lenet5_variant2_forward.3} parent=57 // loop_header
                  %s268 = sphi 0, %s270
                  %p269 = scmp.ge.s32.totalorder %s268, %s266
                  %s273 = sphi 0, %s278
                  %s274 = sphi %s142, %s281
                  %s275 = sphi %s134, %s282
                $region61: #{lenet5_variant2_forward.3} parent=57 // loop_header_branch
                  %272 = sbr.rel (%p269) target = $region65
                $region62: #{lenet5_variant2_forward.3} parent=57 // loop_body
                  %s276 = sadd.s32 1, %s273
                  %p277 = scmp.ge.s32.totalorder %s276, %s266
                  %s278 = scalar_select %p277, 0, %s276
                  %s279 = smul.u32 %s278, 64
                  %s280 = smul.u32 %s278, 64
                  %s281 = scalar_lea.vmem %s142, %s279
                  %s282 = scalar_lea.vmem %s134, %s280 [#allocation2]
                $region63: #{lenet5_variant2_forward.3} parent=57 // loop_footer
                  %s270 = sadd.s32 %s268, 1
                $region64: #{lenet5_variant2_forward.3} parent=57 // loop_footer_branch
                  %267 = sbr.rel target = $region60
                $region65: #{lenet5_variant2_forward.3} parent=57 // loop_exit
                  _
                %s283 = sshrl.u32 %s138, 4
                %s284 = sand.u32 %s138, 15
                %s285 = smul.u32 %s283, 16
                %s286 = smul.u32 4, %s285
                %s287 = scalar_lea.vmem %s142, %s286
                %s288 = smul.u32 4, %s285
                %s289 = scalar_lea.vmem %s134, %s288 [#allocation2]
                // While loop
                $region66: #{lenet5_variant2_forward.3} parent=57 // loop_pre_header
                  _
                $region67: #{lenet5_variant2_forward.3} parent=57 // loop_header
                  %s291 = sphi 0, %s293
                  %p292 = scmp.ge.s32.totalorder %s291, %s284
                  %s296 = sphi 0, %s301
                  %s297 = sphi %s287, %s304
                  %s298 = sphi %s289, %s305
                $region68: #{lenet5_variant2_forward.3} parent=57 // loop_header_branch
                  %295 = sbr.rel (%p292) target = $region72
                $region69: #{lenet5_variant2_forward.3} parent=57 // loop_body
                  %s299 = sadd.s32 1, %s296
                  %p300 = scmp.ge.s32.totalorder %s299, %s284
                  %s301 = scalar_select %p300, 0, %s299
                  %s302 = smul.u32 %s301, 4
                  %s303 = smul.u32 %s301, 4
                  %s304 = scalar_lea.vmem %s287, %s302
                  %s305 = scalar_lea.vmem %s289, %s303 [#allocation2]
                $region70: #{lenet5_variant2_forward.3} parent=57 // loop_footer
                  %s293 = sadd.s32 %s291, 1
                $region71: #{lenet5_variant2_forward.3} parent=57 // loop_footer_branch
                  %290 = sbr.rel target = $region67
                $region72: #{lenet5_variant2_forward.3} parent=57 // loop_exit
                  _
                %s307 = ssub.s32 16, 1
                %s308 = sshrl.u32 %s138, 3
                // While loop
                $region73: #{lenet5_variant2_forward.3} parent=57 // loop_pre_header
                  _
                $region74: #{lenet5_variant2_forward.3} parent=57 // loop_header
                  %s310 = sphi 0, %s312
                  %p311 = scmp.ge.s32.totalorder %s310, %s308
                  %s315 = sphi 0, %s384
                  %s316 = sphi %s142, %s387
                  %s317 = sphi %s134, %s388
                $region75: #{lenet5_variant2_forward.3} parent=57 // loop_header_branch
                  %314 = sbr.rel (%p311) target = $region79
                $region76: #{lenet5_variant2_forward.3} parent=57 // loop_body
                  %v318 = vld [vmem:[%s316] sm:%s307]
                  %319 = vst [vmem:[%s317] sm:%s307] %v318
                  %v320 = vld [vmem:[%s316 + $0x4] sm:%s307]
                  %321 = vst [vmem:[%s317 + $0x4] sm:%s307] %v320
                  %v322 = vld [vmem:[%s316 + $0x8] sm:%s307]
                  %323 = vst [vmem:[%s317 + $0x8] sm:%s307] %v322
                  %v324 = vld [vmem:[%s316 + $0xc] sm:%s307]
                  %325 = vst [vmem:[%s317 + $0xc] sm:%s307] %v324
                  %v326 = vld [vmem:[%s316 + $0x10] sm:%s307]
                  %327 = vst [vmem:[%s317 + $0x10] sm:%s307] %v326
                  %v328 = vld [vmem:[%s316 + $0x14] sm:%s307]
                  %329 = vst [vmem:[%s317 + $0x14] sm:%s307] %v328
                  %v330 = vld [vmem:[%s316 + $0x18] sm:%s307]
                  %331 = vst [vmem:[%s317 + $0x18] sm:%s307] %v330
                  %v332 = vld [vmem:[%s316 + $0x1c] sm:%s307]
                  %333 = vst [vmem:[%s317 + $0x1c] sm:%s307] %v332
                  %v334 = vld [vmem:[%s316 + $0xc4] sm:%s307]
                  %335 = vst [vmem:[%s317 + $0x64] sm:%s307] %v334
                  %v336 = vld [vmem:[%s316 + $0xc8] sm:%s307]
                  %337 = vst [vmem:[%s317 + $0x68] sm:%s307] %v336
                  %v338 = vld [vmem:[%s316 + $0xcc] sm:%s307]
                  %339 = vst [vmem:[%s317 + $0x6c] sm:%s307] %v338
                  %v340 = vld [vmem:[%s316 + $0xd0] sm:%s307]
                  %341 = vst [vmem:[%s317 + $0x70] sm:%s307] %v340
                  %v342 = vld [vmem:[%s316 + $0xd4] sm:%s307]
                  %343 = vst [vmem:[%s317 + $0x74] sm:%s307] %v342
                  %v344 = vld [vmem:[%s316 + $0xd8] sm:%s307]
                  %345 = vst [vmem:[%s317 + $0x78] sm:%s307] %v344
                  %v346 = vld [vmem:[%s316 + $0xdc] sm:%s307]
                  %347 = vst [vmem:[%s317 + $0x7c] sm:%s307] %v346
                  %v348 = vld [vmem:[%s316 + $0xe0] sm:%s307]
                  %349 = vst [vmem:[%s317 + $0x80] sm:%s307] %v348
                  %v350 = vld [vmem:[%s316 + $0x188] sm:%s307]
                  %351 = vst [vmem:[%s317 + $0xc8] sm:%s307] %v350
                  %v352 = vld [vmem:[%s316 + $0x18c] sm:%s307]
                  %353 = vst [vmem:[%s317 + $0xcc] sm:%s307] %v352
                  %v354 = vld [vmem:[%s316 + $0x190] sm:%s307]
                  %355 = vst [vmem:[%s317 + $0xd0] sm:%s307] %v354
                  %v356 = vld [vmem:[%s316 + $0x194] sm:%s307]
                  %357 = vst [vmem:[%s317 + $0xd4] sm:%s307] %v356
                  %v358 = vld [vmem:[%s316 + $0x198] sm:%s307]
                  %359 = vst [vmem:[%s317 + $0xd8] sm:%s307] %v358
                  %v360 = vld [vmem:[%s316 + $0x19c] sm:%s307]
                  %361 = vst [vmem:[%s317 + $0xdc] sm:%s307] %v360
                  %v362 = vld [vmem:[%s316 + $0x1a0] sm:%s307]
                  %363 = vst [vmem:[%s317 + $0xe0] sm:%s307] %v362
                  %v364 = vld [vmem:[%s316 + $0x1a4] sm:%s307]
                  %365 = vst [vmem:[%s317 + $0xe4] sm:%s307] %v364
                  %v366 = vld [vmem:[%s316 + $0x24c] sm:%s307]
                  %367 = vst [vmem:[%s317 + $0x12c] sm:%s307] %v366
                  %v368 = vld [vmem:[%s316 + $0x250] sm:%s307]
                  %369 = vst [vmem:[%s317 + $0x130] sm:%s307] %v368
                  %v370 = vld [vmem:[%s316 + $0x254] sm:%s307]
                  %371 = vst [vmem:[%s317 + $0x134] sm:%s307] %v370
                  %v372 = vld [vmem:[%s316 + $0x258] sm:%s307]
                  %373 = vst [vmem:[%s317 + $0x138] sm:%s307] %v372
                  %v374 = vld [vmem:[%s316 + $0x25c] sm:%s307]
                  %375 = vst [vmem:[%s317 + $0x13c] sm:%s307] %v374
                  %v376 = vld [vmem:[%s316 + $0x260] sm:%s307]
                  %377 = vst [vmem:[%s317 + $0x140] sm:%s307] %v376
                  %v378 = vld [vmem:[%s316 + $0x264] sm:%s307]
                  %379 = vst [vmem:[%s317 + $0x144] sm:%s307] %v378
                  %v380 = vld [vmem:[%s316 + $0x268] sm:%s307]
                  %381 = vst [vmem:[%s317 + $0x148] sm:%s307] %v380
                  %s382 = sadd.s32 1, %s315
                  %p383 = scmp.ge.s32.totalorder %s382, %s308
                  %s384 = scalar_select %p383, 0, %s382
                  %s385 = smul.u32 %s384, 32
                  %s386 = smul.u32 %s384, 32
                  %s387 = scalar_lea.vmem %s142, %s385
                  %s388 = scalar_lea.vmem %s134, %s386 [#allocation2]
                $region77: #{lenet5_variant2_forward.3} parent=57 // loop_footer
                  %s312 = sadd.s32 %s310, 1
                $region78: #{lenet5_variant2_forward.3} parent=57 // loop_footer_branch
                  %309 = sbr.rel target = $region74
                $region79: #{lenet5_variant2_forward.3} parent=57 // loop_exit
                  _
                %s389 = sshrl.u32 %s138, 3
                %s390 = sand.u32 %s138, 7
                %s391 = smul.u32 %s389, 8
                %s392 = smul.u32 4, %s391
                %s393 = scalar_lea.vmem %s142, %s392
                %s394 = smul.u32 4, %s391
                %s395 = scalar_lea.vmem %s134, %s394 [#allocation2]
                // While loop
                $region80: #{lenet5_variant2_forward.3} parent=57 // loop_pre_header
                  _
                $region81: #{lenet5_variant2_forward.3} parent=57 // loop_header
                  %s397 = sphi 0, %s399
                  %p398 = scmp.ge.s32.totalorder %s397, %s390
                  %s402 = sphi 0, %s415
                  %s403 = sphi %s393, %s418
                  %s404 = sphi %s395, %s419
                $region82: #{lenet5_variant2_forward.3} parent=57 // loop_header_branch
                  %401 = sbr.rel (%p398) target = $region86
                $region83: #{lenet5_variant2_forward.3} parent=57 // loop_body
                  %v405 = vld [vmem:[%s403] sm:%s307]
                  %406 = vst [vmem:[%s404] sm:%s307] %v405
                  %v407 = vld [vmem:[%s403 + $0xc4] sm:%s307]
                  %408 = vst [vmem:[%s404 + $0x64] sm:%s307] %v407
                  %v409 = vld [vmem:[%s403 + $0x188] sm:%s307]
                  %410 = vst [vmem:[%s404 + $0xc8] sm:%s307] %v409
                  %v411 = vld [vmem:[%s403 + $0x24c] sm:%s307]
                  %412 = vst [vmem:[%s404 + $0x12c] sm:%s307] %v411
                  %s413 = sadd.s32 1, %s402
                  %p414 = scmp.ge.s32.totalorder %s413, %s390
                  %s415 = scalar_select %p414, 0, %s413
                  %s416 = smul.u32 %s415, 4
                  %s417 = smul.u32 %s415, 4
                  %s418 = scalar_lea.vmem %s393, %s416
                  %s419 = scalar_lea.vmem %s395, %s417 [#allocation2]
                $region84: #{lenet5_variant2_forward.3} parent=57 // loop_footer
                  %s399 = sadd.s32 %s397, 1
                $region85: #{lenet5_variant2_forward.3} parent=57 // loop_footer_branch
                  %396 = sbr.rel target = $region81
                $region86: #{lenet5_variant2_forward.3} parent=57 // loop_exit
                  _
              $region58: #{lenet5_variant2_forward.3} parent=35 // pred_fallthru
                _
            $region36: #{lenet5_variant2_forward.3} parent=31 // pred_fallthru
              _
            // Predicated region
            $region37: #{lenet5_variant2_forward.3} parent=31 // pred_check
              _
            $region38: #{lenet5_variant2_forward.3} parent=31 // pred_check_branch
              %149 = sbr.rel (0) target = $region40
            $region39: #{lenet5_variant2_forward.3} parent=31 // pred_region
              %s151 = ssub.s32 16, 1
              %s152 = sshrl.u32 %s138, 3
              // While loop
              $region41: #{lenet5_variant2_forward.3} parent=39 // loop_pre_header
                _
              $region42: #{lenet5_variant2_forward.3} parent=39 // loop_header
                %s154 = sphi 0, %s156
                %p155 = scmp.ge.s32.totalorder %s154, %s152
                %s159 = sphi 0, %s228
                %s160 = sphi %s142, %s231
                %s161 = sphi %s134, %s232
              $region43: #{lenet5_variant2_forward.3} parent=39 // loop_header_branch
                %158 = sbr.rel (%p155) target = $region47
              $region44: #{lenet5_variant2_forward.3} parent=39 // loop_body
                %v162 = vld [vmem:[%s160] sm:%s151]
                %163 = vst [vmem:[%s161] sm:%s151] %v162
                %v164 = vld [vmem:[%s160 + $0x4] sm:%s151]
                %165 = vst [vmem:[%s161 + $0x4] sm:%s151] %v164
                %v166 = vld [vmem:[%s160 + $0x8] sm:%s151]
                %167 = vst [vmem:[%s161 + $0x8] sm:%s151] %v166
                %v168 = vld [vmem:[%s160 + $0xc] sm:%s151]
                %169 = vst [vmem:[%s161 + $0xc] sm:%s151] %v168
                %v170 = vld [vmem:[%s160 + $0x10] sm:%s151]
                %171 = vst [vmem:[%s161 + $0x10] sm:%s151] %v170
                %v172 = vld [vmem:[%s160 + $0x14] sm:%s151]
                %173 = vst [vmem:[%s161 + $0x14] sm:%s151] %v172
                %v174 = vld [vmem:[%s160 + $0x18] sm:%s151]
                %175 = vst [vmem:[%s161 + $0x18] sm:%s151] %v174
                %v176 = vld [vmem:[%s160 + $0x1c] sm:%s151]
                %177 = vst [vmem:[%s161 + $0x1c] sm:%s151] %v176
                %v178 = vld [vmem:[%s160 + $0xc4] sm:%s151]
                %179 = vst [vmem:[%s161 + $0x64] sm:%s151] %v178
                %v180 = vld [vmem:[%s160 + $0xc8] sm:%s151]
                %181 = vst [vmem:[%s161 + $0x68] sm:%s151] %v180
                %v182 = vld [vmem:[%s160 + $0xcc] sm:%s151]
                %183 = vst [vmem:[%s161 + $0x6c] sm:%s151] %v182
                %v184 = vld [vmem:[%s160 + $0xd0] sm:%s151]
                %185 = vst [vmem:[%s161 + $0x70] sm:%s151] %v184
                %v186 = vld [vmem:[%s160 + $0xd4] sm:%s151]
                %187 = vst [vmem:[%s161 + $0x74] sm:%s151] %v186
                %v188 = vld [vmem:[%s160 + $0xd8] sm:%s151]
                %189 = vst [vmem:[%s161 + $0x78] sm:%s151] %v188
                %v190 = vld [vmem:[%s160 + $0xdc] sm:%s151]
                %191 = vst [vmem:[%s161 + $0x7c] sm:%s151] %v190
                %v192 = vld [vmem:[%s160 + $0xe0] sm:%s151]
                %193 = vst [vmem:[%s161 + $0x80] sm:%s151] %v192
                %v194 = vld [vmem:[%s160 + $0x188] sm:%s151]
                %195 = vst [vmem:[%s161 + $0xc8] sm:%s151] %v194
                %v196 = vld [vmem:[%s160 + $0x18c] sm:%s151]
                %197 = vst [vmem:[%s161 + $0xcc] sm:%s151] %v196
                %v198 = vld [vmem:[%s160 + $0x190] sm:%s151]
                %199 = vst [vmem:[%s161 + $0xd0] sm:%s151] %v198
                %v200 = vld [vmem:[%s160 + $0x194] sm:%s151]
                %201 = vst [vmem:[%s161 + $0xd4] sm:%s151] %v200
                %v202 = vld [vmem:[%s160 + $0x198] sm:%s151]
                %203 = vst [vmem:[%s161 + $0xd8] sm:%s151] %v202
                %v204 = vld [vmem:[%s160 + $0x19c] sm:%s151]
                %205 = vst [vmem:[%s161 + $0xdc] sm:%s151] %v204
                %v206 = vld [vmem:[%s160 + $0x1a0] sm:%s151]
                %207 = vst [vmem:[%s161 + $0xe0] sm:%s151] %v206
                %v208 = vld [vmem:[%s160 + $0x1a4] sm:%s151]
                %209 = vst [vmem:[%s161 + $0xe4] sm:%s151] %v208
                %v210 = vld [vmem:[%s160 + $0x24c] sm:%s151]
                %211 = vst [vmem:[%s161 + $0x12c] sm:%s151] %v210
                %v212 = vld [vmem:[%s160 + $0x250] sm:%s151]
                %213 = vst [vmem:[%s161 + $0x130] sm:%s151] %v212
                %v214 = vld [vmem:[%s160 + $0x254] sm:%s151]
                %215 = vst [vmem:[%s161 + $0x134] sm:%s151] %v214
                %v216 = vld [vmem:[%s160 + $0x258] sm:%s151]
                %217 = vst [vmem:[%s161 + $0x138] sm:%s151] %v216
                %v218 = vld [vmem:[%s160 + $0x25c] sm:%s151]
                %219 = vst [vmem:[%s161 + $0x13c] sm:%s151] %v218
                %v220 = vld [vmem:[%s160 + $0x260] sm:%s151]
                %221 = vst [vmem:[%s161 + $0x140] sm:%s151] %v220
                %v222 = vld [vmem:[%s160 + $0x264] sm:%s151]
                %223 = vst [vmem:[%s161 + $0x144] sm:%s151] %v222
                %v224 = vld [vmem:[%s160 + $0x268] sm:%s151]
                %225 = vst [vmem:[%s161 + $0x148] sm:%s151] %v224
                %s226 = sadd.s32 1, %s159
                %p227 = scmp.ge.s32.totalorder %s226, %s152
                %s228 = scalar_select %p227, 0, %s226
                %s229 = smul.u32 %s228, 32
                %s230 = smul.u32 %s228, 32
                %s231 = scalar_lea.vmem %s142, %s229
                %s232 = scalar_lea.vmem %s134, %s230 [#allocation2]
              $region45: #{lenet5_variant2_forward.3} parent=39 // loop_footer
                %s156 = sadd.s32 %s154, 1
              $region46: #{lenet5_variant2_forward.3} parent=39 // loop_footer_branch
                %153 = sbr.rel target = $region42
              $region47: #{lenet5_variant2_forward.3} parent=39 // loop_exit
                _
              %s233 = sshrl.u32 %s138, 3
              %s234 = sand.u32 %s138, 7
              %s235 = smul.u32 %s233, 8
              %s236 = smul.u32 4, %s235
              %s237 = scalar_lea.vmem %s142, %s236
              %s238 = smul.u32 4, %s235
              %s239 = scalar_lea.vmem %s134, %s238 [#allocation2]
              // While loop
              $region48: #{lenet5_variant2_forward.3} parent=39 // loop_pre_header
                _
              $region49: #{lenet5_variant2_forward.3} parent=39 // loop_header
                %s241 = sphi 0, %s243
                %p242 = scmp.ge.s32.totalorder %s241, %s234
                %s246 = sphi 0, %s259
                %s247 = sphi %s237, %s262
                %s248 = sphi %s239, %s263
              $region50: #{lenet5_variant2_forward.3} parent=39 // loop_header_branch
                %245 = sbr.rel (%p242) target = $region54
              $region51: #{lenet5_variant2_forward.3} parent=39 // loop_body
                %v249 = vld [vmem:[%s247] sm:%s151]
                %250 = vst [vmem:[%s248] sm:%s151] %v249
                %v251 = vld [vmem:[%s247 + $0xc4] sm:%s151]
                %252 = vst [vmem:[%s248 + $0x64] sm:%s151] %v251
                %v253 = vld [vmem:[%s247 + $0x188] sm:%s151]
                %254 = vst [vmem:[%s248 + $0xc8] sm:%s151] %v253
                %v255 = vld [vmem:[%s247 + $0x24c] sm:%s151]
                %256 = vst [vmem:[%s248 + $0x12c] sm:%s151] %v255
                %s257 = sadd.s32 1, %s246
                %p258 = scmp.ge.s32.totalorder %s257, %s234
                %s259 = scalar_select %p258, 0, %s257
                %s260 = smul.u32 %s259, 4
                %s261 = smul.u32 %s259, 4
                %s262 = scalar_lea.vmem %s237, %s260
                %s263 = scalar_lea.vmem %s239, %s261 [#allocation2]
              $region52: #{lenet5_variant2_forward.3} parent=39 // loop_footer
                %s243 = sadd.s32 %s241, 1
              $region53: #{lenet5_variant2_forward.3} parent=39 // loop_footer_branch
                %240 = sbr.rel target = $region49
              $region54: #{lenet5_variant2_forward.3} parent=39 // loop_exit
                _
            $region40: #{lenet5_variant2_forward.3} parent=31 // pred_fallthru
              _
          $region32: #{lenet5_variant2_forward.3} parent=27 // pred_fallthru
            _
          %420 = vnop
        $region28: #{lenet5_variant2_forward.3} parent=23 // pred_fallthru
          _
      $region24: #{lenet5_variant2_forward.3} parent=5 // pred_fallthru
        _
      %p421 = scmp.le.s32.totalorder 1, %s9
      %p422 = scmp.lt.s32.totalorder %s9, 3
      %p423 = pnand %p421, %p422
      %p424 = pneg %p423
      // Predicated region
      $region87: #{lenet5_variant2_forward.3} parent=5 // pred_check
        _
      $region88: #{lenet5_variant2_forward.3} parent=5 // pred_check_branch
        %426 = sbr.rel (%p423) target = $region90
      $region89: #{lenet5_variant2_forward.3} parent=5 // pred_region
        %s427 = ssub.s32 %s9, 1
        %s428 = sand.u32 %s22, 1
        %s429 = sand.u32 %s22, 1
        %s430 = smul.addr %s429, 400
        %s431 = scalar_lea.vmem [#allocation2], %s430
        // Predicated region
        $region91: #{lenet5_variant2_forward.3} parent=89 // pred_check
          %p432 = pneg %p35
        $region92: #{lenet5_variant2_forward.3} parent=89 // pred_check_branch
          %434 = sbr.rel (%p432) target = $region94
        $region93: #{lenet5_variant2_forward.3} parent=89 // pred_region
          _
        $region94: #{lenet5_variant2_forward.3} parent=89 // pred_fallthru
          _
        %s435 = sand.u32 %s22, 1
        %s436 = sand.u32 %s22, 1
        %s437 = smul.addr %s436, 400
        %s438 = scalar_lea.vmem [#allocation2], %s437
        %p439 = pneg %p35
        %p440 = pneg %p32
        %p441 = pneg %p56
        %p442 = pneg %p53
        %p443 = pneg %p77
        %p444 = pneg %p74
        %p445 = pneg %p103
        %p446 = pneg %p100
        %s447 = sand.u32 %s90, 1
        %s448 = sand.u32 %s90, 1
        %s449 = smul.addr %s448, 100
        %s450 = scalar_lea.vmem [#allocation3], %s449
        %s451 = smul.u32 25, %s14
        %s452 = ssub.s32 49, %s451
        %p453 = scmp.lt.s32.totalorder %s452, 25
        %s454 = scalar_select %p453, %s452, 25
        %s455 = smul.u32 16, %s454
        %s456 = smul.u32 25, %s14
        %s457 = ssub.s32 49, %s456
        %p458 = scmp.lt.s32.totalorder %s457, 25
        %s459 = scalar_select %p458, %s457, 25
        %s460 = smul.u32 4, %s459
        %v461 = vld [vmem:[%s1] sm:$0xf]
        %v462 = vld [vmem:[%s1 + $0x4] sm:$0xf]
        %v463 = vld [vmem:[%s1 + $0x8] sm:$0xf]
        %v464 = vld [vmem:[%s1 + $0xc] sm:$0xf]
        %v465 = vld [vmem:[%s1 + $0x10] sm:$0xf]
        %v466 = vld [vmem:[%s1 + $0x14] sm:$0xf]
        %v467 = vld [vmem:[%s1 + $0x18] sm:$0xf]
        %v468 = vld [vmem:[%s1 + $0x1c] sm:$0xf]
        %v469 = vld [vmem:[%s1 + $0x20] sm:$0xf]
        %v470 = vld [vmem:[%s1 + $0x24] sm:$0xf]
        %v471 = vld [vmem:[%s1 + $0x28] sm:$0xf]
        %v472 = vld [vmem:[%s1 + $0x2c] sm:$0xf]
        %v473 = vld [vmem:[%s1 + $0x30] sm:$0xf]
        %v474 = vld [vmem:[%s1 + $0x34] sm:$0xf]
        %v475 = vld [vmem:[%s1 + $0x38] sm:$0xf]
        %v476 = vld [vmem:[%s1 + $0x3c] sm:$0xf]
        %v477 = vld [vmem:[%s431] sm:$0xf]
        %v478 = vld [vmem:[%s431 + $0x4] sm:$0xf]
        %v479 = vld [vmem:[%s431 + $0x8] sm:$0xf]
        %v480 = vld [vmem:[%s431 + $0xc] sm:$0xf]
        %v481 = vld [vmem:[%s431 + $0x10] sm:$0xf]
        %v482 = vld [vmem:[%s431 + $0x14] sm:$0xf]
        %v483 = vld [vmem:[%s431 + $0x18] sm:$0xf]
        %v484 = vld [vmem:[%s431 + $0x1c] sm:$0xf]
        %v485 = vld [vmem:[%s431 + $0x20] sm:$0xf]
        %v486 = vld [vmem:[%s431 + $0x24] sm:$0xf]
        %v487 = vld [vmem:[%s431 + $0x28] sm:$0xf]
        %v488 = vld [vmem:[%s431 + $0x2c] sm:$0xf]
        %v489 = vld [vmem:[%s431 + $0x30] sm:$0xf]
        %v490 = vld [vmem:[%s431 + $0x34] sm:$0xf]
        %v491 = vld [vmem:[%s431 + $0x38] sm:$0xf]
        %v492 = vld [vmem:[%s431 + $0x3c] sm:$0xf]
        %v493 = vld [vmem:[%s431 + $0x40] sm:$0xf]
        %v494 = vld [vmem:[%s431 + $0x44] sm:$0xf]
        %v495 = vld [vmem:[%s431 + $0x48] sm:$0xf]
        %v496 = vld [vmem:[%s431 + $0x4c] sm:$0xf]
        %v497 = vld [vmem:[%s431 + $0x50] sm:$0xf]
        %v498 = vld [vmem:[%s431 + $0x54] sm:$0xf]
        %v499 = vld [vmem:[%s431 + $0x58] sm:$0xf]
        %v500 = vld [vmem:[%s431 + $0x5c] sm:$0xf]
        %v501 = vld [vmem:[%s431 + $0x60] sm:$0xf]
        %v527 = vunpack.c.l.b16 %v477
        %v528 = vunpack.c.l.b16 %v478
        %v529 = vunpack.c.l.b16 %v479
        %v530 = vunpack.c.l.b16 %v480
        %v531 = vunpack.c.l.b16 %v481
        %v532 = vunpack.c.l.b16 %v482
        %v533 = vunpack.c.l.b16 %v483
        %v534 = vunpack.c.l.b16 %v484
        %v535 = vunpack.c.l.b16 %v485
        %v536 = vunpack.c.l.b16 %v486
        %v537 = vunpack.c.l.b16 %v487
        %v538 = vunpack.c.l.b16 %v488
        %v539 = vunpack.c.l.b16 %v489
        %v540 = vunpack.c.l.b16 %v490
        %v541 = vunpack.c.l.b16 %v491
        %v542 = vunpack.c.l.b16 %v492
        %v543 = vunpack.c.l.b16 %v493
        %v544 = vunpack.c.l.b16 %v494
        %v545 = vunpack.c.l.b16 %v495
        %v546 = vunpack.c.l.b16 %v496
        %v547 = vunpack.c.l.b16 %v497
        %v548 = vunpack.c.l.b16 %v498
        %v549 = vunpack.c.l.b16 %v499
        %v550 = vunpack.c.l.b16 %v500
        %v551 = vunpack.c.l.b16 %v501
        %v552 = vpack.c.b16 %v528, %v527
        %v553 = vpack.c.b16 %v530, %v529
        %v554 = vpack.c.b16 %v532, %v531
        %v555 = vpack.c.b16 %v534, %v533
        %v556 = vpack.c.b16 %v536, %v535
        %v557 = vpack.c.b16 %v538, %v537
        %v558 = vpack.c.b16 %v540, %v539
        %v559 = vpack.c.b16 %v542, %v541
        %v560 = vpack.c.b16 %v544, %v543
        %v561 = vpack.c.b16 %v546, %v545
        %v562 = vpack.c.b16 %v548, %v547
        %v563 = vpack.c.b16 %v550, %v549
        %v564 = vpack.c.b16 %v551, %v551
        %v594 = vunpack.c.l.b16 %v461
        %v595 = vunpack.c.l.b16 %v462
        %v596 = vunpack.c.l.b16 %v463
        %v597 = vunpack.c.l.b16 %v464
        %v598 = vunpack.c.l.b16 %v465
        %v599 = vunpack.c.l.b16 %v466
        %v600 = vunpack.c.l.b16 %v467
        %v601 = vunpack.c.l.b16 %v468
        %v602 = vunpack.c.l.b16 %v469
        %v603 = vunpack.c.l.b16 %v470
        %v604 = vunpack.c.l.b16 %v471
        %v605 = vunpack.c.l.b16 %v472
        %v606 = vunpack.c.l.b16 %v473
        %v607 = vunpack.c.l.b16 %v474
        %v608 = vunpack.c.l.b16 %v475
        %v609 = vunpack.c.l.b16 %v476
        %v610 = vpack.c.b16 %v595, %v594
        %v611 = vpack.c.b16 %v597, %v596
        %v612 = vpack.c.b16 %v599, %v598
        %v613 = vpack.c.b16 %v601, %v600
        %v614 = vpack.c.b16 %v603, %v602
        %v615 = vpack.c.b16 %v605, %v604
        %v616 = vpack.c.b16 %v607, %v606
        %v617 = vpack.c.b16 %v609, %v608
        %626 = vmatpush.bf16.msra.mxu0 %v617
        %627 = vmatpush.bf16.msra.mxu0 %v616
        %628 = vmatpush.bf16.msra.mxu0 %v615
        %629 = vmatpush.bf16.msra.mxu0 %v614
        %630 = vmatpush.bf16.msra.mxu0 %v613
        %631 = vmatpush.bf16.msra.mxu0 %v612
        %632 = vmatpush.bf16.msra.mxu0 %v611
        %633 = vmatpush.bf16.msra.mxu0 %v610
        %634 = vmatmul.bf16.gmra.mxu0 %v552
        %v635 = vpop.f32.mrf.mxu0
        %v636 = vadd.f32 0.0, %v635
        %v637 = vpop.f32.mrf.mxu0
        %v638 = vadd.f32 0.0, %v637
        %639 = vmatmul.bf16.gmra.mxu0 %v553
        %v640 = vpop.f32.mrf.mxu0
        %v641 = vadd.f32 0.0, %v640
        %v642 = vpop.f32.mrf.mxu0
        %v643 = vadd.f32 0.0, %v642
        %644 = vmatmul.bf16.gmra.mxu0 %v554
        %v645 = vpop.f32.mrf.mxu0
        %v646 = vadd.f32 0.0, %v645
        %v647 = vpop.f32.mrf.mxu0
        %v648 = vadd.f32 0.0, %v647
        %649 = vmatmul.bf16.gmra.mxu0 %v555
        %v650 = vpop.f32.mrf.mxu0
        %v651 = vadd.f32 0.0, %v650
        %v652 = vpop.f32.mrf.mxu0
        %v653 = vadd.f32 0.0, %v652
        %654 = vmatmul.bf16.gmra.mxu0 %v556
        %v655 = vpop.f32.mrf.mxu0
        %v656 = vadd.f32 0.0, %v655
        %v657 = vpop.f32.mrf.mxu0
        %v658 = vadd.f32 0.0, %v657
        %659 = vmatmul.bf16.gmra.mxu0 %v557
        %v660 = vpop.f32.mrf.mxu0
        %v661 = vadd.f32 0.0, %v660
        %v662 = vpop.f32.mrf.mxu0
        %v663 = vadd.f32 0.0, %v662
        %664 = vmatmul.bf16.gmra.mxu0 %v558
        %v665 = vpop.f32.mrf.mxu0
        %v666 = vadd.f32 0.0, %v665
        %v667 = vpop.f32.mrf.mxu0
        %v668 = vadd.f32 0.0, %v667
        %669 = vmatmul.bf16.gmra.mxu0 %v559
        %v670 = vpop.f32.mrf.mxu0
        %v671 = vadd.f32 0.0, %v670
        %v672 = vpop.f32.mrf.mxu0
        %v673 = vadd.f32 0.0, %v672
        %674 = vmatmul.bf16.gmra.mxu0 %v560
        %v675 = vpop.f32.mrf.mxu0
        %v676 = vadd.f32 0.0, %v675
        %v677 = vpop.f32.mrf.mxu0
        %v678 = vadd.f32 0.0, %v677
        %679 = vmatmul.bf16.gmra.mxu0 %v561
        %v680 = vpop.f32.mrf.mxu0
        %v681 = vadd.f32 0.0, %v680
        %v682 = vpop.f32.mrf.mxu0
        %v683 = vadd.f32 0.0, %v682
        %684 = vmatmul.bf16.gmra.mxu0 %v562
        %v685 = vpop.f32.mrf.mxu0
        %v686 = vadd.f32 0.0, %v685
        %v687 = vpop.f32.mrf.mxu0
        %v688 = vadd.f32 0.0, %v687
        %689 = vmatmul.bf16.gmra.mxu0 %v563
        %v690 = vpop.f32.mrf.mxu0
        %v691 = vadd.f32 0.0, %v690
        %v692 = vpop.f32.mrf.mxu0
        %v693 = vadd.f32 0.0, %v692
        %694 = vmatmul.bf16.gmra.mxu0 %v564
        %v695 = vpop.f32.mrf.mxu0
        %v696 = vadd.f32 0.0, %v695
        %v697 = vpop.f32.mrf.mxu0
        %698 = vdwg.mxu0
        %s699 = scalar_lea.vmem %s431, 100 [#allocation2]
        %v700 = vld [vmem:[%s699] sm:$0xf]
        %v701 = vld [vmem:[%s699 + $0x4] sm:$0xf]
        %v702 = vld [vmem:[%s699 + $0x8] sm:$0xf]
        %v703 = vld [vmem:[%s699 + $0xc] sm:$0xf]
        %v704 = vld [vmem:[%s699 + $0x10] sm:$0xf]
        %v705 = vld [vmem:[%s699 + $0x14] sm:$0xf]
        %v706 = vld [vmem:[%s699 + $0x18] sm:$0xf]
        %v707 = vld [vmem:[%s699 + $0x1c] sm:$0xf]
        %v708 = vld [vmem:[%s699 + $0x20] sm:$0xf]
        %v709 = vld [vmem:[%s699 + $0x24] sm:$0xf]
        %v710 = vld [vmem:[%s699 + $0x28] sm:$0xf]
        %v711 = vld [vmem:[%s699 + $0x2c] sm:$0xf]
        %v712 = vld [vmem:[%s699 + $0x30] sm:$0xf]
        %v713 = vld [vmem:[%s699 + $0x34] sm:$0xf]
        %v714 = vld [vmem:[%s699 + $0x38] sm:$0xf]
        %v715 = vld [vmem:[%s699 + $0x3c] sm:$0xf]
        %v716 = vld [vmem:[%s699 + $0x40] sm:$0xf]
        %v717 = vld [vmem:[%s699 + $0x44] sm:$0xf]
        %v718 = vld [vmem:[%s699 + $0x48] sm:$0xf]
        %v719 = vld [vmem:[%s699 + $0x4c] sm:$0xf]
        %v720 = vld [vmem:[%s699 + $0x50] sm:$0xf]
        %v721 = vld [vmem:[%s699 + $0x54] sm:$0xf]
        %v722 = vld [vmem:[%s699 + $0x58] sm:$0xf]
        %v723 = vld [vmem:[%s699 + $0x5c] sm:$0xf]
        %v724 = vld [vmem:[%s699 + $0x60] sm:$0xf]
        %v750 = vunpack.c.l.b16 %v700
        %v751 = vunpack.c.l.b16 %v701
        %v752 = vunpack.c.l.b16 %v702
        %v753 = vunpack.c.l.b16 %v703
        %v754 = vunpack.c.l.b16 %v704
        %v755 = vunpack.c.l.b16 %v705
        %v756 = vunpack.c.l.b16 %v706
        %v757 = vunpack.c.l.b16 %v707
        %v758 = vunpack.c.l.b16 %v708
        %v759 = vunpack.c.l.b16 %v709
        %v760 = vunpack.c.l.b16 %v710
        %v761 = vunpack.c.l.b16 %v711
        %v762 = vunpack.c.l.b16 %v712
        %v763 = vunpack.c.l.b16 %v713
        %v764 = vunpack.c.l.b16 %v714
        %v765 = vunpack.c.l.b16 %v715
        %v766 = vunpack.c.l.b16 %v716
        %v767 = vunpack.c.l.b16 %v717
        %v768 = vunpack.c.l.b16 %v718
        %v769 = vunpack.c.l.b16 %v719
        %v770 = vunpack.c.l.b16 %v720
        %v771 = vunpack.c.l.b16 %v721
        %v772 = vunpack.c.l.b16 %v722
        %v773 = vunpack.c.l.b16 %v723
        %v774 = vunpack.c.l.b16 %v724
        %v775 = vpack.c.b16 %v751, %v750
        %v776 = vpack.c.b16 %v753, %v752
        %v777 = vpack.c.b16 %v755, %v754
        %v778 = vpack.c.b16 %v757, %v756
        %v779 = vpack.c.b16 %v759, %v758
        %v780 = vpack.c.b16 %v761, %v760
        %v781 = vpack.c.b16 %v763, %v762
        %v782 = vpack.c.b16 %v765, %v764
        %v783 = vpack.c.b16 %v767, %v766
        %v784 = vpack.c.b16 %v769, %v768
        %v785 = vpack.c.b16 %v771, %v770
        %v786 = vpack.c.b16 %v773, %v772
        %v787 = vpack.c.b16 %v774, %v774
        %801 = vmatpush.bf16.msra.mxu0 %v617
        %802 = vmatpush.bf16.msra.mxu0 %v616
        %803 = vmatpush.bf16.msra.mxu0 %v615
        %804 = vmatpush.bf16.msra.mxu0 %v614
        %805 = vmatpush.bf16.msra.mxu0 %v613
        %806 = vmatpush.bf16.msra.mxu0 %v612
        %807 = vmatpush.bf16.msra.mxu0 %v611
        %808 = vmatpush.bf16.msra.mxu0 %v610
        %809 = vmatmul.bf16.gmra.mxu0 %v775
        %v810 = vpop.f32.mrf.mxu0
        %v811 = vadd.f32 0.0, %v810
        %v812 = vpop.f32.mrf.mxu0
        %v813 = vadd.f32 0.0, %v812
        %814 = vmatmul.bf16.gmra.mxu0 %v776
        %v815 = vpop.f32.mrf.mxu0
        %v816 = vadd.f32 0.0, %v815
        %v817 = vpop.f32.mrf.mxu0
        %v818 = vadd.f32 0.0, %v817
        %819 = vmatmul.bf16.gmra.mxu0 %v777
        %v820 = vpop.f32.mrf.mxu0
        %v821 = vadd.f32 0.0, %v820
        %v822 = vpop.f32.mrf.mxu0
        %v823 = vadd.f32 0.0, %v822
        %824 = vmatmul.bf16.gmra.mxu0 %v778
        %v825 = vpop.f32.mrf.mxu0
        %v826 = vadd.f32 0.0, %v825
        %v827 = vpop.f32.mrf.mxu0
        %v828 = vadd.f32 0.0, %v827
        %829 = vmatmul.bf16.gmra.mxu0 %v779
        %v830 = vpop.f32.mrf.mxu0
        %v831 = vadd.f32 0.0, %v830
        %v832 = vpop.f32.mrf.mxu0
        %v833 = vadd.f32 0.0, %v832
        %834 = vmatmul.bf16.gmra.mxu0 %v780
        %v835 = vpop.f32.mrf.mxu0
        %v836 = vadd.f32 0.0, %v835
        %v837 = vpop.f32.mrf.mxu0
        %v838 = vadd.f32 0.0, %v837
        %839 = vmatmul.bf16.gmra.mxu0 %v781
        %v840 = vpop.f32.mrf.mxu0
        %v841 = vadd.f32 0.0, %v840
        %v842 = vpop.f32.mrf.mxu0
        %v843 = vadd.f32 0.0, %v842
        %844 = vmatmul.bf16.gmra.mxu0 %v782
        %v845 = vpop.f32.mrf.mxu0
        %v846 = vadd.f32 0.0, %v845
        %v847 = vpop.f32.mrf.mxu0
        %v848 = vadd.f32 0.0, %v847
        %849 = vmatmul.bf16.gmra.mxu0 %v783
        %v850 = vpop.f32.mrf.mxu0
        %v851 = vadd.f32 0.0, %v850
        %v852 = vpop.f32.mrf.mxu0
        %v853 = vadd.f32 0.0, %v852
        %854 = vmatmul.bf16.gmra.mxu0 %v784
        %v855 = vpop.f32.mrf.mxu0
        %v856 = vadd.f32 0.0, %v855
        %v857 = vpop.f32.mrf.mxu0
        %v858 = vadd.f32 0.0, %v857
        %859 = vmatmul.bf16.gmra.mxu0 %v785
        %v860 = vpop.f32.mrf.mxu0
        %v861 = vadd.f32 0.0, %v860
        %v862 = vpop.f32.mrf.mxu0
        %v863 = vadd.f32 0.0, %v862
        %864 = vmatmul.bf16.gmra.mxu0 %v786
        %v865 = vpop.f32.mrf.mxu0
        %v866 = vadd.f32 0.0, %v865
        %v867 = vpop.f32.mrf.mxu0
        %v868 = vadd.f32 0.0, %v867
        %869 = vmatmul.bf16.gmra.mxu0 %v787
        %v870 = vpop.f32.mrf.mxu0
        %v871 = vadd.f32 0.0, %v870
        %v872 = vpop.f32.mrf.mxu0
        %873 = vdwg.mxu0
        %s874 = scalar_lea.vmem %s431, 200 [#allocation2]
        %v875 = vld [vmem:[%s874] sm:$0xf]
        %v876 = vld [vmem:[%s874 + $0x4] sm:$0xf]
        %v877 = vld [vmem:[%s874 + $0x8] sm:$0xf]
        %v878 = vld [vmem:[%s874 + $0xc] sm:$0xf]
        %v879 = vld [vmem:[%s874 + $0x10] sm:$0xf]
        %v880 = vld [vmem:[%s874 + $0x14] sm:$0xf]
        %v881 = vld [vmem:[%s874 + $0x18] sm:$0xf]
        %v882 = vld [vmem:[%s874 + $0x1c] sm:$0xf]
        %v883 = vld [vmem:[%s874 + $0x20] sm:$0xf]
        %v884 = vld [vmem:[%s874 + $0x24] sm:$0xf]
        %v885 = vld [vmem:[%s874 + $0x28] sm:$0xf]
        %v886 = vld [vmem:[%s874 + $0x2c] sm:$0xf]
        %v887 = vld [vmem:[%s874 + $0x30] sm:$0xf]
        %v888 = vld [vmem:[%s874 + $0x34] sm:$0xf]
        %v889 = vld [vmem:[%s874 + $0x38] sm:$0xf]
        %v890 = vld [vmem:[%s874 + $0x3c] sm:$0xf]
        %v891 = vld [vmem:[%s874 + $0x40] sm:$0xf]
        %v892 = vld [vmem:[%s874 + $0x44] sm:$0xf]
        %v893 = vld [vmem:[%s874 + $0x48] sm:$0xf]
        %v894 = vld [vmem:[%s874 + $0x4c] sm:$0xf]
        %v895 = vld [vmem:[%s874 + $0x50] sm:$0xf]
        %v896 = vld [vmem:[%s874 + $0x54] sm:$0xf]
        %v897 = vld [vmem:[%s874 + $0x58] sm:$0xf]
        %v898 = vld [vmem:[%s874 + $0x5c] sm:$0xf]
        %v899 = vld [vmem:[%s874 + $0x60] sm:$0xf]
        %v925 = vunpack.c.l.b16 %v875
        %v926 = vunpack.c.l.b16 %v876
        %v927 = vunpack.c.l.b16 %v877
        %v928 = vunpack.c.l.b16 %v878
        %v929 = vunpack.c.l.b16 %v879
        %v930 = vunpack.c.l.b16 %v880
        %v931 = vunpack.c.l.b16 %v881
        %v932 = vunpack.c.l.b16 %v882
        %v933 = vunpack.c.l.b16 %v883
        %v934 = vunpack.c.l.b16 %v884
        %v935 = vunpack.c.l.b16 %v885
        %v936 = vunpack.c.l.b16 %v886
        %v937 = vunpack.c.l.b16 %v887
        %v938 = vunpack.c.l.b16 %v888
        %v939 = vunpack.c.l.b16 %v889
        %v940 = vunpack.c.l.b16 %v890
        %v941 = vunpack.c.l.b16 %v891
        %v942 = vunpack.c.l.b16 %v892
        %v943 = vunpack.c.l.b16 %v893
        %v944 = vunpack.c.l.b16 %v894
        %v945 = vunpack.c.l.b16 %v895
        %v946 = vunpack.c.l.b16 %v896
        %v947 = vunpack.c.l.b16 %v897
        %v948 = vunpack.c.l.b16 %v898
        %v949 = vunpack.c.l.b16 %v899
        %v950 = vpack.c.b16 %v926, %v925
        %v951 = vpack.c.b16 %v928, %v927
        %v952 = vpack.c.b16 %v930, %v929
        %v953 = vpack.c.b16 %v932, %v931
        %v954 = vpack.c.b16 %v934, %v933
        %v955 = vpack.c.b16 %v936, %v935
        %v956 = vpack.c.b16 %v938, %v937
        %v957 = vpack.c.b16 %v940, %v939
        %v958 = vpack.c.b16 %v942, %v941
        %v959 = vpack.c.b16 %v944, %v943
        %v960 = vpack.c.b16 %v946, %v945
        %v961 = vpack.c.b16 %v948, %v947
        %v962 = vpack.c.b16 %v949, %v949
        %976 = vmatpush.bf16.msra.mxu0 %v617
        %977 = vmatpush.bf16.msra.mxu0 %v616
        %978 = vmatpush.bf16.msra.mxu0 %v615
        %979 = vmatpush.bf16.msra.mxu0 %v614
        %980 = vmatpush.bf16.msra.mxu0 %v613
        %981 = vmatpush.bf16.msra.mxu0 %v612
        %982 = vmatpush.bf16.msra.mxu0 %v611
        %983 = vmatpush.bf16.msra.mxu0 %v610
        %984 = vmatmul.bf16.gmra.mxu0 %v950
        %v985 = vpop.f32.mrf.mxu0
        %v986 = vadd.f32 0.0, %v985
        %v987 = vpop.f32.mrf.mxu0
        %v988 = vadd.f32 0.0, %v987
        %989 = vmatmul.bf16.gmra.mxu0 %v951
        %v990 = vpop.f32.mrf.mxu0
        %v991 = vadd.f32 0.0, %v990
        %v992 = vpop.f32.mrf.mxu0
        %v993 = vadd.f32 0.0, %v992
        %994 = vmatmul.bf16.gmra.mxu0 %v952
        %v995 = vpop.f32.mrf.mxu0
        %v996 = vadd.f32 0.0, %v995
        %v997 = vpop.f32.mrf.mxu0
        %v998 = vadd.f32 0.0, %v997
        %999 = vmatmul.bf16.gmra.mxu0 %v953
        %v1000 = vpop.f32.mrf.mxu0
        %v1001 = vadd.f32 0.0, %v1000
        %v1002 = vpop.f32.mrf.mxu0
        %v1003 = vadd.f32 0.0, %v1002
        %1004 = vmatmul.bf16.gmra.mxu0 %v954
        %v1005 = vpop.f32.mrf.mxu0
        %v1006 = vadd.f32 0.0, %v1005
        %v1007 = vpop.f32.mrf.mxu0
        %v1008 = vadd.f32 0.0, %v1007
        %1009 = vmatmul.bf16.gmra.mxu0 %v955
        %v1010 = vpop.f32.mrf.mxu0
        %v1011 = vadd.f32 0.0, %v1010
        %v1012 = vpop.f32.mrf.mxu0
        %v1013 = vadd.f32 0.0, %v1012
        %1014 = vmatmul.bf16.gmra.mxu0 %v956
        %v1015 = vpop.f32.mrf.mxu0
        %v1016 = vadd.f32 0.0, %v1015
        %v1017 = vpop.f32.mrf.mxu0
        %v1018 = vadd.f32 0.0, %v1017
        %1019 = vmatmul.bf16.gmra.mxu0 %v957
        %v1020 = vpop.f32.mrf.mxu0
        %v1021 = vadd.f32 0.0, %v1020
        %v1022 = vpop.f32.mrf.mxu0
        %v1023 = vadd.f32 0.0, %v1022
        %1024 = vmatmul.bf16.gmra.mxu0 %v958
        %v1025 = vpop.f32.mrf.mxu0
        %v1026 = vadd.f32 0.0, %v1025
        %v1027 = vpop.f32.mrf.mxu0
        %v1028 = vadd.f32 0.0, %v1027
        %1029 = vmatmul.bf16.gmra.mxu0 %v959
        %v1030 = vpop.f32.mrf.mxu0
        %v1031 = vadd.f32 0.0, %v1030
        %v1032 = vpop.f32.mrf.mxu0
        %v1033 = vadd.f32 0.0, %v1032
        %1034 = vmatmul.bf16.gmra.mxu0 %v960
        %v1035 = vpop.f32.mrf.mxu0
        %v1036 = vadd.f32 0.0, %v1035
        %v1037 = vpop.f32.mrf.mxu0
        %v1038 = vadd.f32 0.0, %v1037
        %1039 = vmatmul.bf16.gmra.mxu0 %v961
        %v1040 = vpop.f32.mrf.mxu0
        %v1041 = vadd.f32 0.0, %v1040
        %v1042 = vpop.f32.mrf.mxu0
        %v1043 = vadd.f32 0.0, %v1042
        %1044 = vmatmul.bf16.gmra.mxu0 %v962
        %v1045 = vpop.f32.mrf.mxu0
        %v1046 = vadd.f32 0.0, %v1045
        %v1047 = vpop.f32.mrf.mxu0
        %1048 = vdwg.mxu0
        %s1049 = scalar_lea.vmem %s431, 300 [#allocation2]
        %v1050 = vld [vmem:[%s1049] sm:$0xf]
        %v1051 = vld [vmem:[%s1049 + $0x4] sm:$0xf]
        %v1052 = vld [vmem:[%s1049 + $0x8] sm:$0xf]
        %v1053 = vld [vmem:[%s1049 + $0xc] sm:$0xf]
        %v1054 = vld [vmem:[%s1049 + $0x10] sm:$0xf]
        %v1055 = vld [vmem:[%s1049 + $0x14] sm:$0xf]
        %v1056 = vld [vmem:[%s1049 + $0x18] sm:$0xf]
        %v1057 = vld [vmem:[%s1049 + $0x1c] sm:$0xf]
        %v1058 = vld [vmem:[%s1049 + $0x20] sm:$0xf]
        %v1059 = vld [vmem:[%s1049 + $0x24] sm:$0xf]
        %v1060 = vld [vmem:[%s1049 + $0x28] sm:$0xf]
        %v1061 = vld [vmem:[%s1049 + $0x2c] sm:$0xf]
        %v1062 = vld [vmem:[%s1049 + $0x30] sm:$0xf]
        %v1063 = vld [vmem:[%s1049 + $0x34] sm:$0xf]
        %v1064 = vld [vmem:[%s1049 + $0x38] sm:$0xf]
        %v1065 = vld [vmem:[%s1049 + $0x3c] sm:$0xf]
        %v1066 = vld [vmem:[%s1049 + $0x40] sm:$0xf]
        %v1067 = vld [vmem:[%s1049 + $0x44] sm:$0xf]
        %v1068 = vld [vmem:[%s1049 + $0x48] sm:$0xf]
        %v1069 = vld [vmem:[%s1049 + $0x4c] sm:$0xf]
        %v1070 = vld [vmem:[%s1049 + $0x50] sm:$0xf]
        %v1071 = vld [vmem:[%s1049 + $0x54] sm:$0xf]
        %v1072 = vld [vmem:[%s1049 + $0x58] sm:$0xf]
        %v1073 = vld [vmem:[%s1049 + $0x5c] sm:$0xf]
        %v1074 = vld [vmem:[%s1049 + $0x60] sm:$0xf]
        %v1100 = vunpack.c.l.b16 %v1050
        %v1101 = vunpack.c.l.b16 %v1051
        %v1102 = vunpack.c.l.b16 %v1052
        %v1103 = vunpack.c.l.b16 %v1053
        %v1104 = vunpack.c.l.b16 %v1054
        %v1105 = vunpack.c.l.b16 %v1055
        %v1106 = vunpack.c.l.b16 %v1056
        %v1107 = vunpack.c.l.b16 %v1057
        %v1108 = vunpack.c.l.b16 %v1058
        %v1109 = vunpack.c.l.b16 %v1059
        %v1110 = vunpack.c.l.b16 %v1060
        %v1111 = vunpack.c.l.b16 %v1061
        %v1112 = vunpack.c.l.b16 %v1062
        %v1113 = vunpack.c.l.b16 %v1063
        %v1114 = vunpack.c.l.b16 %v1064
        %v1115 = vunpack.c.l.b16 %v1065
        %v1116 = vunpack.c.l.b16 %v1066
        %v1117 = vunpack.c.l.b16 %v1067
        %v1118 = vunpack.c.l.b16 %v1068
        %v1119 = vunpack.c.l.b16 %v1069
        %v1120 = vunpack.c.l.b16 %v1070
        %v1121 = vunpack.c.l.b16 %v1071
        %v1122 = vunpack.c.l.b16 %v1072
        %v1123 = vunpack.c.l.b16 %v1073
        %v1124 = vunpack.c.l.b16 %v1074
        %v1125 = vpack.c.b16 %v1101, %v1100
        %v1126 = vpack.c.b16 %v1103, %v1102
        %v1127 = vpack.c.b16 %v1105, %v1104
        %v1128 = vpack.c.b16 %v1107, %v1106
        %v1129 = vpack.c.b16 %v1109, %v1108
        %v1130 = vpack.c.b16 %v1111, %v1110
        %v1131 = vpack.c.b16 %v1113, %v1112
        %v1132 = vpack.c.b16 %v1115, %v1114
        %v1133 = vpack.c.b16 %v1117, %v1116
        %v1134 = vpack.c.b16 %v1119, %v1118
        %v1135 = vpack.c.b16 %v1121, %v1120
        %v1136 = vpack.c.b16 %v1123, %v1122
        %v1137 = vpack.c.b16 %v1124, %v1124
        %1151 = vmatpush.bf16.msra.mxu0 %v617
        %1152 = vmatpush.bf16.msra.mxu0 %v616
        %1153 = vmatpush.bf16.msra.mxu0 %v615
        %1154 = vmatpush.bf16.msra.mxu0 %v614
        %1155 = vmatpush.bf16.msra.mxu0 %v613
        %1156 = vmatpush.bf16.msra.mxu0 %v612
        %1157 = vmatpush.bf16.msra.mxu0 %v611
        %1158 = vmatpush.bf16.msra.mxu0 %v610
        %1159 = vmatmul.bf16.gmra.mxu0 %v1125
        %v1160 = vpop.f32.mrf.mxu0
        %v1161 = vadd.f32 0.0, %v1160
        %v1162 = vpop.f32.mrf.mxu0
        %v1163 = vadd.f32 0.0, %v1162
        %1164 = vmatmul.bf16.gmra.mxu0 %v1126
        %v1165 = vpop.f32.mrf.mxu0
        %v1166 = vadd.f32 0.0, %v1165
        %v1167 = vpop.f32.mrf.mxu0
        %v1168 = vadd.f32 0.0, %v1167
        %1169 = vmatmul.bf16.gmra.mxu0 %v1127
        %v1170 = vpop.f32.mrf.mxu0
        %v1171 = vadd.f32 0.0, %v1170
        %v1172 = vpop.f32.mrf.mxu0
        %v1173 = vadd.f32 0.0, %v1172
        %1174 = vmatmul.bf16.gmra.mxu0 %v1128
        %v1175 = vpop.f32.mrf.mxu0
        %v1176 = vadd.f32 0.0, %v1175
        %v1177 = vpop.f32.mrf.mxu0
        %v1178 = vadd.f32 0.0, %v1177
        %1179 = vmatmul.bf16.gmra.mxu0 %v1129
        %v1180 = vpop.f32.mrf.mxu0
        %v1181 = vadd.f32 0.0, %v1180
        %v1182 = vpop.f32.mrf.mxu0
        %v1183 = vadd.f32 0.0, %v1182
        %1184 = vmatmul.bf16.gmra.mxu0 %v1130
        %v1185 = vpop.f32.mrf.mxu0
        %v1186 = vadd.f32 0.0, %v1185
        %v1187 = vpop.f32.mrf.mxu0
        %v1188 = vadd.f32 0.0, %v1187
        %1189 = vmatmul.bf16.gmra.mxu0 %v1131
        %v1190 = vpop.f32.mrf.mxu0
        %v1191 = vadd.f32 0.0, %v1190
        %v1192 = vpop.f32.mrf.mxu0
        %v1193 = vadd.f32 0.0, %v1192
        %1194 = vmatmul.bf16.gmra.mxu0 %v1132
        %v1195 = vpop.f32.mrf.mxu0
        %v1196 = vadd.f32 0.0, %v1195
        %v1197 = vpop.f32.mrf.mxu0
        %v1198 = vadd.f32 0.0, %v1197
        %1199 = vmatmul.bf16.gmra.mxu0 %v1133
        %v1200 = vpop.f32.mrf.mxu0
        %v1201 = vadd.f32 0.0, %v1200
        %v1202 = vpop.f32.mrf.mxu0
        %v1203 = vadd.f32 0.0, %v1202
        %1204 = vmatmul.bf16.gmra.mxu0 %v1134
        %v1205 = vpop.f32.mrf.mxu0
        %v1206 = vadd.f32 0.0, %v1205
        %v1207 = vpop.f32.mrf.mxu0
        %v1208 = vadd.f32 0.0, %v1207
        %1209 = vmatmul.bf16.gmra.mxu0 %v1135
        %v1210 = vpop.f32.mrf.mxu0
        %v1211 = vadd.f32 0.0, %v1210
        %v1212 = vpop.f32.mrf.mxu0
        %v1213 = vadd.f32 0.0, %v1212
        %1214 = vmatmul.bf16.gmra.mxu0 %v1136
        %v1215 = vpop.f32.mrf.mxu0
        %v1216 = vadd.f32 0.0, %v1215
        %v1217 = vpop.f32.mrf.mxu0
        %v1218 = vadd.f32 0.0, %v1217
        %1219 = vmatmul.bf16.gmra.mxu0 %v1137
        %v1220 = vpop.f32.mrf.mxu0
        %v1221 = vadd.f32 0.0, %v1220
        %v1222 = vpop.f32.mrf.mxu0
        %1223 = vdwg.mxu0
        %v1224 = vmax.f32 %v636, %v811
        %v1225 = vmax.f32 %v638, %v813
        %v1226 = vmax.f32 %v641, %v816
        %v1227 = vmax.f32 %v643, %v818
        %v1228 = vmax.f32 %v646, %v821
        %v1229 = vmax.f32 %v648, %v823
        %v1230 = vmax.f32 %v651, %v826
        %v1231 = vmax.f32 %v653, %v828
        %v1232 = vmax.f32 %v656, %v831
        %v1233 = vmax.f32 %v658, %v833
        %v1234 = vmax.f32 %v661, %v836
        %v1235 = vmax.f32 %v663, %v838
        %v1236 = vmax.f32 %v666, %v841
        %v1237 = vmax.f32 %v668, %v843
        %v1238 = vmax.f32 %v671, %v846
        %v1239 = vmax.f32 %v673, %v848
        %v1240 = vmax.f32 %v676, %v851
        %v1241 = vmax.f32 %v678, %v853
        %v1242 = vmax.f32 %v681, %v856
        %v1243 = vmax.f32 %v683, %v858
        %v1244 = vmax.f32 %v686, %v861
        %v1245 = vmax.f32 %v688, %v863
        %v1246 = vmax.f32 %v691, %v866
        %v1247 = vmax.f32 %v693, %v868
        %v1248 = vmax.f32 %v696, %v871
        %v1249 = vmax.f32 %v986, %v1161
        %v1250 = vmax.f32 %v988, %v1163
        %v1251 = vmax.f32 %v991, %v1166
        %v1252 = vmax.f32 %v993, %v1168
        %v1253 = vmax.f32 %v996, %v1171
        %v1254 = vmax.f32 %v998, %v1173
        %v1255 = vmax.f32 %v1001, %v1176
        %v1256 = vmax.f32 %v1003, %v1178
        %v1257 = vmax.f32 %v1006, %v1181
        %v1258 = vmax.f32 %v1008, %v1183
        %v1259 = vmax.f32 %v1011, %v1186
        %v1260 = vmax.f32 %v1013, %v1188
        %v1261 = vmax.f32 %v1016, %v1191
        %v1262 = vmax.f32 %v1018, %v1193
        %v1263 = vmax.f32 %v1021, %v1196
        %v1264 = vmax.f32 %v1023, %v1198
        %v1265 = vmax.f32 %v1026, %v1201
        %v1266 = vmax.f32 %v1028, %v1203
        %v1267 = vmax.f32 %v1031, %v1206
        %v1268 = vmax.f32 %v1033, %v1208
        %v1269 = vmax.f32 %v1036, %v1211
        %v1270 = vmax.f32 %v1038, %v1213
        %v1271 = vmax.f32 %v1041, %v1216
        %v1272 = vmax.f32 %v1043, %v1218
        %v1273 = vmax.f32 %v1046, %v1221
        %v1274 = vmax.f32 %v1224, %v1249
        %v1275 = vmax.f32 %v1225, %v1250
        %v1276 = vmax.f32 %v1226, %v1251
        %v1277 = vmax.f32 %v1227, %v1252
        %v1278 = vmax.f32 %v1228, %v1253
        %v1279 = vmax.f32 %v1229, %v1254
        %v1280 = vmax.f32 %v1230, %v1255
        %v1281 = vmax.f32 %v1231, %v1256
        %v1282 = vmax.f32 %v1232, %v1257
        %v1283 = vmax.f32 %v1233, %v1258
        %v1284 = vmax.f32 %v1234, %v1259
        %v1285 = vmax.f32 %v1235, %v1260
        %v1286 = vmax.f32 %v1236, %v1261
        %v1287 = vmax.f32 %v1237, %v1262
        %v1288 = vmax.f32 %v1238, %v1263
        %v1289 = vmax.f32 %v1239, %v1264
        %v1290 = vmax.f32 %v1240, %v1265
        %v1291 = vmax.f32 %v1241, %v1266
        %v1292 = vmax.f32 %v1242, %v1267
        %v1293 = vmax.f32 %v1243, %v1268
        %v1294 = vmax.f32 %v1244, %v1269
        %v1295 = vmax.f32 %v1245, %v1270
        %v1296 = vmax.f32 %v1246, %v1271
        %v1297 = vmax.f32 %v1247, %v1272
        %v1298 = vmax.f32 %v1248, %v1273
        %v1299 = vld [vmem:[%s2] sm:$0x1]
        %v1301 = vperm.slane %v1299, 0
        %v1303 = vadd.f32 %v1274, %v1301
        %v1304 = vadd.f32 %v1275, %v1301
        %v1305 = vadd.f32 %v1276, %v1301
        %v1306 = vadd.f32 %v1277, %v1301
        %v1307 = vadd.f32 %v1278, %v1301
        %v1308 = vadd.f32 %v1279, %v1301
        %v1309 = vadd.f32 %v1280, %v1301
        %v1310 = vadd.f32 %v1281, %v1301
        %v1311 = vadd.f32 %v1282, %v1301
        %v1312 = vadd.f32 %v1283, %v1301
        %v1313 = vadd.f32 %v1284, %v1301
        %v1314 = vadd.f32 %v1285, %v1301
        %v1315 = vadd.f32 %v1286, %v1301
        %v1316 = vadd.f32 %v1287, %v1301
        %v1317 = vadd.f32 %v1288, %v1301
        %v1318 = vadd.f32 %v1289, %v1301
        %v1319 = vadd.f32 %v1290, %v1301
        %v1320 = vadd.f32 %v1291, %v1301
        %v1321 = vadd.f32 %v1292, %v1301
        %v1322 = vadd.f32 %v1293, %v1301
        %v1323 = vadd.f32 %v1294, %v1301
        %v1324 = vadd.f32 %v1295, %v1301
        %v1325 = vadd.f32 %v1296, %v1301
        %v1326 = vadd.f32 %v1297, %v1301
        %v1327 = vadd.f32 %v1298, %v1301
        %v1328 = vmax.f32 %v1303, 0.0
        %v1329 = vmax.f32 %v1304, 0.0
        %v1330 = vmax.f32 %v1305, 0.0
        %v1331 = vmax.f32 %v1306, 0.0
        %v1332 = vmax.f32 %v1307, 0.0
        %v1333 = vmax.f32 %v1308, 0.0
        %v1334 = vmax.f32 %v1309, 0.0
        %v1335 = vmax.f32 %v1310, 0.0
        %v1336 = vmax.f32 %v1311, 0.0
        %v1337 = vmax.f32 %v1312, 0.0
        %v1338 = vmax.f32 %v1313, 0.0
        %v1339 = vmax.f32 %v1314, 0.0
        %v1340 = vmax.f32 %v1315, 0.0
        %v1341 = vmax.f32 %v1316, 0.0
        %v1342 = vmax.f32 %v1317, 0.0
        %v1343 = vmax.f32 %v1318, 0.0
        %v1344 = vmax.f32 %v1319, 0.0
        %v1345 = vmax.f32 %v1320, 0.0
        %v1346 = vmax.f32 %v1321, 0.0
        %v1347 = vmax.f32 %v1322, 0.0
        %v1348 = vmax.f32 %v1323, 0.0
        %v1349 = vmax.f32 %v1324, 0.0
        %v1350 = vmax.f32 %v1325, 0.0
        %v1351 = vmax.f32 %v1326, 0.0
        %v1352 = vmax.f32 %v1327, 0.0
        %v1353 = vpack.c.bf16 %v1328, %v1328
        %v1354 = vpack.c.bf16 %v1329, %v1329
        %v1355 = vpack.c.bf16 %v1330, %v1330
        %v1356 = vpack.c.bf16 %v1331, %v1331
        %v1357 = vpack.c.bf16 %v1332, %v1332
        %v1358 = vpack.c.bf16 %v1333, %v1333
        %v1359 = vpack.c.bf16 %v1334, %v1334
        %v1360 = vpack.c.bf16 %v1335, %v1335
        %v1361 = vpack.c.bf16 %v1336, %v1336
        %v1362 = vpack.c.bf16 %v1337, %v1337
        %v1363 = vpack.c.bf16 %v1338, %v1338
        %v1364 = vpack.c.bf16 %v1339, %v1339
        %v1365 = vpack.c.bf16 %v1340, %v1340
        %v1366 = vpack.c.bf16 %v1341, %v1341
        %v1367 = vpack.c.bf16 %v1342, %v1342
        %v1368 = vpack.c.bf16 %v1343, %v1343
        %v1369 = vpack.c.bf16 %v1344, %v1344
        %v1370 = vpack.c.bf16 %v1345, %v1345
        %v1371 = vpack.c.bf16 %v1346, %v1346
        %v1372 = vpack.c.bf16 %v1347, %v1347
        %v1373 = vpack.c.bf16 %v1348, %v1348
        %v1374 = vpack.c.bf16 %v1349, %v1349
        %v1375 = vpack.c.bf16 %v1350, %v1350
        %v1376 = vpack.c.bf16 %v1351, %v1351
        %v1377 = vpack.c.bf16 %v1352, %v1352
        %vm1378 = vcmask 44032
        %1379 = vst.msk [vmem:[%s450] sm:$0xf] %vm1378, %v1353
        %1380 = vst.msk [vmem:[%s450 + $0x4] sm:$0xf] %vm1378, %v1354
        %1381 = vst.msk [vmem:[%s450 + $0x8] sm:$0xf] %vm1378, %v1355
        %1382 = vst.msk [vmem:[%s450 + $0xc] sm:$0xf] %vm1378, %v1356
        %1383 = vst.msk [vmem:[%s450 + $0x10] sm:$0xf] %vm1378, %v1357
        %1384 = vst.msk [vmem:[%s450 + $0x14] sm:$0xf] %vm1378, %v1358
        %1385 = vst.msk [vmem:[%s450 + $0x18] sm:$0xf] %vm1378, %v1359
        %1386 = vst.msk [vmem:[%s450 + $0x1c] sm:$0xf] %vm1378, %v1360
        %1387 = vst.msk [vmem:[%s450 + $0x20] sm:$0xf] %vm1378, %v1361
        %1388 = vst.msk [vmem:[%s450 + $0x24] sm:$0xf] %vm1378, %v1362
        %1389 = vst.msk [vmem:[%s450 + $0x28] sm:$0xf] %vm1378, %v1363
        %1390 = vst.msk [vmem:[%s450 + $0x2c] sm:$0xf] %vm1378, %v1364
        %1391 = vst.msk [vmem:[%s450 + $0x30] sm:$0xf] %vm1378, %v1365
        %1392 = vst.msk [vmem:[%s450 + $0x34] sm:$0xf] %vm1378, %v1366
        %1393 = vst.msk [vmem:[%s450 + $0x38] sm:$0xf] %vm1378, %v1367
        %1394 = vst.msk [vmem:[%s450 + $0x3c] sm:$0xf] %vm1378, %v1368
        %1395 = vst.msk [vmem:[%s450 + $0x40] sm:$0xf] %vm1378, %v1369
        %1396 = vst.msk [vmem:[%s450 + $0x44] sm:$0xf] %vm1378, %v1370
        %1397 = vst.msk [vmem:[%s450 + $0x48] sm:$0xf] %vm1378, %v1371
        %1398 = vst.msk [vmem:[%s450 + $0x4c] sm:$0xf] %vm1378, %v1372
        %1399 = vst.msk [vmem:[%s450 + $0x50] sm:$0xf] %vm1378, %v1373
        %1400 = vst.msk [vmem:[%s450 + $0x54] sm:$0xf] %vm1378, %v1374
        %1401 = vst.msk [vmem:[%s450 + $0x58] sm:$0xf] %vm1378, %v1375
        %1402 = vst.msk [vmem:[%s450 + $0x5c] sm:$0xf] %vm1378, %v1376
        %1403 = vst.msk [vmem:[%s450 + $0x60] sm:$0xf] %vm1378, %v1377
        %s1404 = sand.u32 %s90, 1
        %s1405 = sand.u32 %s90, 1
        %s1406 = smul.addr %s1405, 100
        %s1407 = scalar_lea.vmem [#allocation3], %s1406
        // Predicated region
        $region95: #{lenet5_variant2_forward.3} parent=89 // pred_check
          %p1408 = pneg %p100
        $region96: #{lenet5_variant2_forward.3} parent=89 // pred_check_branch
          %1410 = sbr.rel (%p1408) target = $region98
        $region97: #{lenet5_variant2_forward.3} parent=89 // pred_region
          %s1411 = smul.u32 25, %s14
          %s1412 = ssub.s32 49, %s1411
          %p1413 = scmp.lt.s32.totalorder %s1412, 25
          %s1414 = scalar_select %p1413, %s1412, 25
          %s1415 = smul.u32 4, %s1414
          %p1416 = scmp.ne.s32.totalorder 0, %s1415
          %s1417 = smul.addr %s1411, 4
          %s1418 = scalar_lea.vmem %s3, %s1417
          // Predicated region
          $region99: #{lenet5_variant2_forward.3} parent=97 // pred_check
            %p1419 = pneg %p1416
          $region100: #{lenet5_variant2_forward.3} parent=97 // pred_check_branch
            %1421 = sbr.rel (%p1419) target = $region102
          $region101: #{lenet5_variant2_forward.3} parent=97 // pred_region
            // Predicated region
            $region103: #{lenet5_variant2_forward.3} parent=101 // pred_check
              _
            $region104: #{lenet5_variant2_forward.3} parent=101 // pred_check_branch
              %1423 = sbr.rel target = $region106
            $region105: #{lenet5_variant2_forward.3} parent=101 // pred_region
              // Predicated region
              $region125: #{lenet5_variant2_forward.3} parent=105 // pred_check
                _
              $region126: #{lenet5_variant2_forward.3} parent=105 // pred_check_branch
                %1522 = sbr.rel (0) target = $region128
              $region127: #{lenet5_variant2_forward.3} parent=105 // pred_region
                %s1524 = ssub.s32 16, 1
                %s1525 = sdiv.u32.pop %s1414, 25
                %s1526 = srem.u32.pop %s1414, 25
                // While loop
                $region129: #{lenet5_variant2_forward.3} parent=127 // loop_pre_header
                  _
                $region130: #{lenet5_variant2_forward.3} parent=127 // loop_header
                  %s1528 = sphi 0, %s1530
                  %p1529 = scmp.ge.s32.totalorder %s1528, %s1525
                  %s1533 = sphi 0, %s1588
                  %s1534 = sphi %s1407, %s1591
                  %s1535 = sphi %s1418, %s1592
                $region131: #{lenet5_variant2_forward.3} parent=127 // loop_header_branch
                  %1532 = sbr.rel (%p1529) target = $region135
                $region132: #{lenet5_variant2_forward.3} parent=127 // loop_body
                  %v1536 = vld [vmem:[%s1534] sm:%s1524]
                  %1537 = vst [vmem:[%s1535] sm:%s1524] %v1536
                  %v1538 = vld [vmem:[%s1534 + $0x4] sm:%s1524]
                  %1539 = vst [vmem:[%s1535 + $0x4] sm:%s1524] %v1538
                  %v1540 = vld [vmem:[%s1534 + $0x8] sm:%s1524]
                  %1541 = vst [vmem:[%s1535 + $0x8] sm:%s1524] %v1540
                  %v1542 = vld [vmem:[%s1534 + $0xc] sm:%s1524]
                  %1543 = vst [vmem:[%s1535 + $0xc] sm:%s1524] %v1542
                  %v1544 = vld [vmem:[%s1534 + $0x10] sm:%s1524]
                  %1545 = vst [vmem:[%s1535 + $0x10] sm:%s1524] %v1544
                  %v1546 = vld [vmem:[%s1534 + $0x14] sm:%s1524]
                  %1547 = vst [vmem:[%s1535 + $0x14] sm:%s1524] %v1546
                  %v1548 = vld [vmem:[%s1534 + $0x18] sm:%s1524]
                  %1549 = vst [vmem:[%s1535 + $0x18] sm:%s1524] %v1548
                  %v1550 = vld [vmem:[%s1534 + $0x1c] sm:%s1524]
                  %1551 = vst [vmem:[%s1535 + $0x1c] sm:%s1524] %v1550
                  %v1552 = vld [vmem:[%s1534 + $0x20] sm:%s1524]
                  %1553 = vst [vmem:[%s1535 + $0x20] sm:%s1524] %v1552
                  %v1554 = vld [vmem:[%s1534 + $0x24] sm:%s1524]
                  %1555 = vst [vmem:[%s1535 + $0x24] sm:%s1524] %v1554
                  %v1556 = vld [vmem:[%s1534 + $0x28] sm:%s1524]
                  %1557 = vst [vmem:[%s1535 + $0x28] sm:%s1524] %v1556
                  %v1558 = vld [vmem:[%s1534 + $0x2c] sm:%s1524]
                  %1559 = vst [vmem:[%s1535 + $0x2c] sm:%s1524] %v1558
                  %v1560 = vld [vmem:[%s1534 + $0x30] sm:%s1524]
                  %1561 = vst [vmem:[%s1535 + $0x30] sm:%s1524] %v1560
                  %v1562 = vld [vmem:[%s1534 + $0x34] sm:%s1524]
                  %1563 = vst [vmem:[%s1535 + $0x34] sm:%s1524] %v1562
                  %v1564 = vld [vmem:[%s1534 + $0x38] sm:%s1524]
                  %1565 = vst [vmem:[%s1535 + $0x38] sm:%s1524] %v1564
                  %v1566 = vld [vmem:[%s1534 + $0x3c] sm:%s1524]
                  %1567 = vst [vmem:[%s1535 + $0x3c] sm:%s1524] %v1566
                  %v1568 = vld [vmem:[%s1534 + $0x40] sm:%s1524]
                  %1569 = vst [vmem:[%s1535 + $0x40] sm:%s1524] %v1568
                  %v1570 = vld [vmem:[%s1534 + $0x44] sm:%s1524]
                  %1571 = vst [vmem:[%s1535 + $0x44] sm:%s1524] %v1570
                  %v1572 = vld [vmem:[%s1534 + $0x48] sm:%s1524]
                  %1573 = vst [vmem:[%s1535 + $0x48] sm:%s1524] %v1572
                  %v1574 = vld [vmem:[%s1534 + $0x4c] sm:%s1524]
                  %1575 = vst [vmem:[%s1535 + $0x4c] sm:%s1524] %v1574
                  %v1576 = vld [vmem:[%s1534 + $0x50] sm:%s1524]
                  %1577 = vst [vmem:[%s1535 + $0x50] sm:%s1524] %v1576
                  %v1578 = vld [vmem:[%s1534 + $0x54] sm:%s1524]
                  %1579 = vst [vmem:[%s1535 + $0x54] sm:%s1524] %v1578
                  %v1580 = vld [vmem:[%s1534 + $0x58] sm:%s1524]
                  %1581 = vst [vmem:[%s1535 + $0x58] sm:%s1524] %v1580
                  %v1582 = vld [vmem:[%s1534 + $0x5c] sm:%s1524]
                  %1583 = vst [vmem:[%s1535 + $0x5c] sm:%s1524] %v1582
                  %v1584 = vld [vmem:[%s1534 + $0x60] sm:%s1524]
                  %1585 = vst [vmem:[%s1535 + $0x60] sm:%s1524] %v1584
                  %s1586 = sadd.s32 1, %s1533
                  %p1587 = scmp.ge.s32.totalorder %s1586, %s1525
                  %s1588 = scalar_select %p1587, 0, %s1586
                  %s1589 = smul.u32 %s1588, 100
                  %s1590 = smul.u32 %s1588, 100
                  %s1591 = scalar_lea.vmem %s1407, %s1589 [#allocation3]
                  %s1592 = scalar_lea.vmem %s1418, %s1590
                $region133: #{lenet5_variant2_forward.3} parent=127 // loop_footer
                  %s1530 = sadd.s32 %s1528, 1
                $region134: #{lenet5_variant2_forward.3} parent=127 // loop_footer_branch
                  %1527 = sbr.rel target = $region130
                $region135: #{lenet5_variant2_forward.3} parent=127 // loop_exit
                  _
                %s1593 = sdiv.u32.pop %s1414, 25
                %s1594 = srem.u32.pop %s1414, 25
                %s1595 = smul.u32 %s1593, 25
                %s1596 = smul.u32 4, %s1595
                %s1597 = scalar_lea.vmem %s1407, %s1596 [#allocation3]
                %s1598 = smul.u32 4, %s1595
                %s1599 = scalar_lea.vmem %s1418, %s1598
                // While loop
                $region136: #{lenet5_variant2_forward.3} parent=127 // loop_pre_header
                  _
                $region137: #{lenet5_variant2_forward.3} parent=127 // loop_header
                  %s1601 = sphi 0, %s1603
                  %p1602 = scmp.ge.s32.totalorder %s1601, %s1594
                  %s1606 = sphi 0, %s1613
                  %s1607 = sphi %s1597, %s1616
                  %s1608 = sphi %s1599, %s1617
                $region138: #{lenet5_variant2_forward.3} parent=127 // loop_header_branch
                  %1605 = sbr.rel (%p1602) target = $region142
                $region139: #{lenet5_variant2_forward.3} parent=127 // loop_body
                  %v1609 = vld [vmem:[%s1607] sm:%s1524]
                  %1610 = vst [vmem:[%s1608] sm:%s1524] %v1609
                  %s1611 = sadd.s32 1, %s1606
                  %p1612 = scmp.ge.s32.totalorder %s1611, %s1594
                  %s1613 = scalar_select %p1612, 0, %s1611
                  %s1614 = smul.u32 %s1613, 4
                  %s1615 = smul.u32 %s1613, 4
                  %s1616 = scalar_lea.vmem %s1597, %s1614 [#allocation3]
                  %s1617 = scalar_lea.vmem %s1599, %s1615
                $region140: #{lenet5_variant2_forward.3} parent=127 // loop_footer
                  %s1603 = sadd.s32 %s1601, 1
                $region141: #{lenet5_variant2_forward.3} parent=127 // loop_footer_branch
                  %1600 = sbr.rel target = $region137
                $region142: #{lenet5_variant2_forward.3} parent=127 // loop_exit
                  _
              $region128: #{lenet5_variant2_forward.3} parent=105 // pred_fallthru
                _
            $region106: #{lenet5_variant2_forward.3} parent=101 // pred_fallthru
              _
            // Predicated region
            $region107: #{lenet5_variant2_forward.3} parent=101 // pred_check
              _
            $region108: #{lenet5_variant2_forward.3} parent=101 // pred_check_branch
              %1425 = sbr.rel (0) target = $region110
            $region109: #{lenet5_variant2_forward.3} parent=101 // pred_region
              %s1427 = ssub.s32 16, 1
              %s1428 = sdiv.u32.pop %s1414, 25
              %s1429 = srem.u32.pop %s1414, 25
              // While loop
              $region111: #{lenet5_variant2_forward.3} parent=109 // loop_pre_header
                _
              $region112: #{lenet5_variant2_forward.3} parent=109 // loop_header
                %s1431 = sphi 0, %s1433
                %p1432 = scmp.ge.s32.totalorder %s1431, %s1428
                %s1436 = sphi 0, %s1491
                %s1437 = sphi %s1407, %s1494
                %s1438 = sphi %s1418, %s1495
              $region113: #{lenet5_variant2_forward.3} parent=109 // loop_header_branch
                %1435 = sbr.rel (%p1432) target = $region117
              $region114: #{lenet5_variant2_forward.3} parent=109 // loop_body
                %v1439 = vld [vmem:[%s1437] sm:%s1427]
                %1440 = vst [vmem:[%s1438] sm:%s1427] %v1439
                %v1441 = vld [vmem:[%s1437 + $0x4] sm:%s1427]
                %1442 = vst [vmem:[%s1438 + $0x4] sm:%s1427] %v1441
                %v1443 = vld [vmem:[%s1437 + $0x8] sm:%s1427]
                %1444 = vst [vmem:[%s1438 + $0x8] sm:%s1427] %v1443
                %v1445 = vld [vmem:[%s1437 + $0xc] sm:%s1427]
                %1446 = vst [vmem:[%s1438 + $0xc] sm:%s1427] %v1445
                %v1447 = vld [vmem:[%s1437 + $0x10] sm:%s1427]
                %1448 = vst [vmem:[%s1438 + $0x10] sm:%s1427] %v1447
                %v1449 = vld [vmem:[%s1437 + $0x14] sm:%s1427]
                %1450 = vst [vmem:[%s1438 + $0x14] sm:%s1427] %v1449
                %v1451 = vld [vmem:[%s1437 + $0x18] sm:%s1427]
                %1452 = vst [vmem:[%s1438 + $0x18] sm:%s1427] %v1451
                %v1453 = vld [vmem:[%s1437 + $0x1c] sm:%s1427]
                %1454 = vst [vmem:[%s1438 + $0x1c] sm:%s1427] %v1453
                %v1455 = vld [vmem:[%s1437 + $0x20] sm:%s1427]
                %1456 = vst [vmem:[%s1438 + $0x20] sm:%s1427] %v1455
                %v1457 = vld [vmem:[%s1437 + $0x24] sm:%s1427]
                %1458 = vst [vmem:[%s1438 + $0x24] sm:%s1427] %v1457
                %v1459 = vld [vmem:[%s1437 + $0x28] sm:%s1427]
                %1460 = vst [vmem:[%s1438 + $0x28] sm:%s1427] %v1459
                %v1461 = vld [vmem:[%s1437 + $0x2c] sm:%s1427]
                %1462 = vst [vmem:[%s1438 + $0x2c] sm:%s1427] %v1461
                %v1463 = vld [vmem:[%s1437 + $0x30] sm:%s1427]
                %1464 = vst [vmem:[%s1438 + $0x30] sm:%s1427] %v1463
                %v1465 = vld [vmem:[%s1437 + $0x34] sm:%s1427]
                %1466 = vst [vmem:[%s1438 + $0x34] sm:%s1427] %v1465
                %v1467 = vld [vmem:[%s1437 + $0x38] sm:%s1427]
                %1468 = vst [vmem:[%s1438 + $0x38] sm:%s1427] %v1467
                %v1469 = vld [vmem:[%s1437 + $0x3c] sm:%s1427]
                %1470 = vst [vmem:[%s1438 + $0x3c] sm:%s1427] %v1469
                %v1471 = vld [vmem:[%s1437 + $0x40] sm:%s1427]
                %1472 = vst [vmem:[%s1438 + $0x40] sm:%s1427] %v1471
                %v1473 = vld [vmem:[%s1437 + $0x44] sm:%s1427]
                %1474 = vst [vmem:[%s1438 + $0x44] sm:%s1427] %v1473
                %v1475 = vld [vmem:[%s1437 + $0x48] sm:%s1427]
                %1476 = vst [vmem:[%s1438 + $0x48] sm:%s1427] %v1475
                %v1477 = vld [vmem:[%s1437 + $0x4c] sm:%s1427]
                %1478 = vst [vmem:[%s1438 + $0x4c] sm:%s1427] %v1477
                %v1479 = vld [vmem:[%s1437 + $0x50] sm:%s1427]
                %1480 = vst [vmem:[%s1438 + $0x50] sm:%s1427] %v1479
                %v1481 = vld [vmem:[%s1437 + $0x54] sm:%s1427]
                %1482 = vst [vmem:[%s1438 + $0x54] sm:%s1427] %v1481
                %v1483 = vld [vmem:[%s1437 + $0x58] sm:%s1427]
                %1484 = vst [vmem:[%s1438 + $0x58] sm:%s1427] %v1483
                %v1485 = vld [vmem:[%s1437 + $0x5c] sm:%s1427]
                %1486 = vst [vmem:[%s1438 + $0x5c] sm:%s1427] %v1485
                %v1487 = vld [vmem:[%s1437 + $0x60] sm:%s1427]
                %1488 = vst [vmem:[%s1438 + $0x60] sm:%s1427] %v1487
                %s1489 = sadd.s32 1, %s1436
                %p1490 = scmp.ge.s32.totalorder %s1489, %s1428
                %s1491 = scalar_select %p1490, 0, %s1489
                %s1492 = smul.u32 %s1491, 100
                %s1493 = smul.u32 %s1491, 100
                %s1494 = scalar_lea.vmem %s1407, %s1492 [#allocation3]
                %s1495 = scalar_lea.vmem %s1418, %s1493
              $region115: #{lenet5_variant2_forward.3} parent=109 // loop_footer
                %s1433 = sadd.s32 %s1431, 1
              $region116: #{lenet5_variant2_forward.3} parent=109 // loop_footer_branch
                %1430 = sbr.rel target = $region112
              $region117: #{lenet5_variant2_forward.3} parent=109 // loop_exit
                _
              %s1496 = sdiv.u32.pop %s1414, 25
              %s1497 = srem.u32.pop %s1414, 25
              %s1498 = smul.u32 %s1496, 25
              %s1499 = smul.u32 4, %s1498
              %s1500 = scalar_lea.vmem %s1407, %s1499 [#allocation3]
              %s1501 = smul.u32 4, %s1498
              %s1502 = scalar_lea.vmem %s1418, %s1501
              // While loop
              $region118: #{lenet5_variant2_forward.3} parent=109 // loop_pre_header
                _
              $region119: #{lenet5_variant2_forward.3} parent=109 // loop_header
                %s1504 = sphi 0, %s1506
                %p1505 = scmp.ge.s32.totalorder %s1504, %s1497
                %s1509 = sphi 0, %s1516
                %s1510 = sphi %s1500, %s1519
                %s1511 = sphi %s1502, %s1520
              $region120: #{lenet5_variant2_forward.3} parent=109 // loop_header_branch
                %1508 = sbr.rel (%p1505) target = $region124
              $region121: #{lenet5_variant2_forward.3} parent=109 // loop_body
                %v1512 = vld [vmem:[%s1510] sm:%s1427]
                %1513 = vst [vmem:[%s1511] sm:%s1427] %v1512
                %s1514 = sadd.s32 1, %s1509
                %p1515 = scmp.ge.s32.totalorder %s1514, %s1497
                %s1516 = scalar_select %p1515, 0, %s1514
                %s1517 = smul.u32 %s1516, 4
                %s1518 = smul.u32 %s1516, 4
                %s1519 = scalar_lea.vmem %s1500, %s1517 [#allocation3]
                %s1520 = scalar_lea.vmem %s1502, %s1518
              $region122: #{lenet5_variant2_forward.3} parent=109 // loop_footer
                %s1506 = sadd.s32 %s1504, 1
              $region123: #{lenet5_variant2_forward.3} parent=109 // loop_footer_branch
                %1503 = sbr.rel target = $region119
              $region124: #{lenet5_variant2_forward.3} parent=109 // loop_exit
                _
            $region110: #{lenet5_variant2_forward.3} parent=101 // pred_fallthru
              _
          $region102: #{lenet5_variant2_forward.3} parent=97 // pred_fallthru
            _
          %1618 = vnop
        $region98: #{lenet5_variant2_forward.3} parent=89 // pred_fallthru
          _
      $region90: #{lenet5_variant2_forward.3} parent=5 // pred_fallthru
        _
      %p1619 = scmp.le.s32.totalorder 2, %s9
      // Predicated region
      $region143: #{lenet5_variant2_forward.3} parent=5 // pred_check
        %p1620 = pneg %p1619
      $region144: #{lenet5_variant2_forward.3} parent=5 // pred_check_branch
        %1622 = sbr.rel (%p1620) target = $region146
      $region145: #{lenet5_variant2_forward.3} parent=5 // pred_region
        %s1623 = ssub.s32 %s9, 2
        // Predicated region
        $region147: #{lenet5_variant2_forward.3} parent=145 // pred_check
          %p1624 = pneg %p106
        $region148: #{lenet5_variant2_forward.3} parent=145 // pred_check_branch
          %1626 = sbr.rel (%p1624) target = $region150
        $region149: #{lenet5_variant2_forward.3} parent=145 // pred_region
          %s1627 = sand.u32 %s91, 1
          %s1628 = sand.u32 %s91, 1
          %s1629 = smul.addr %s1628, 100
          %s1630 = scalar_lea.vmem [#allocation3], %s1629
        $region150: #{lenet5_variant2_forward.3} parent=145 // pred_fallthru
          _
      $region146: #{lenet5_variant2_forward.3} parent=5 // pred_fallthru
        _
    $region6: #{lenet5_variant2_forward.3} parent=1 // loop_footer
      %s13 = sadd.s32 1, %s9
    $region7: #{lenet5_variant2_forward.3} parent=1 // loop_footer_branch
      %8 = sbr.rel target = $region3
    $region8: #{lenet5_variant2_forward.3} parent=1 // loop_exit
      _

// kernel: lenet5_variant2_forward.4
$region0: #{lenet5_variant2_forward.4}
  #allocation0 [shape = 'u32[]', space=smem, size = 0x4, offset = 0x4, fixed_abs, tag = 'smem constant byte address 0x4 - core index']
  #allocation1 [shape = 'u32[72,128]{1,0:T(1,128)}', space=vmem, size = 0x9000, scoped, tag = 'internal scratch']
  %s0 = inlined_call_operand.vmem [shape: bf16[4,50,256], index: 0, kind: input, shape index: {}]
  %s1 = inlined_call_operand.vmem [shape: bf16[256,16], index: 1, kind: input, shape index: {}]
  %s2 = inlined_call_operand.vmem [shape: f32[1,16], index: 2, kind: input, shape index: {}]
  %s3 = inlined_call_operand.vmem [shape: bf16[50,16], index: 3, kind: output, shape index: {}]
  %s4 = sld [smem:[#allocation0]]
  $region141: #{lenet5_variant2_forward.4} parent=0
    _
  %s6 = ssub.s32 1, %s4
  %s7 = scalar_select 0, %s6, %s4
  $region1: #{lenet5_variant2_forward.4} parent=0
    #allocation2 [shape = 'u8[131072]{0}', space=vmem, size = 0x20000, scoped, tag = 'input window, operand 0']
    #allocation3 [shape = 'u8[16384]{0}', space=vmem, size = 0x4000, scoped, tag = 'output window, operand 0']
    loop: start=0, step=1, limit=4
    $region2: #{lenet5_variant2_forward.4} parent=1 // loop_pre_header
      _
    $region3: #{lenet5_variant2_forward.4} parent=1 // loop_header
      %s9 = sphi 0, %s13
      %p10 = scmp.ge.s32.totalorder %s9, 4
      %s19 = sphi 0, %s21
      %s22 = sphi 0, %s19
      %s23 = sphi 0, %s22
      %s39 = sphi 0, %s23
      %s43 = sphi 0, %s43
      %s45 = sphi 0, %s43
      %s46 = sphi 0, %s45
      %s60 = sphi 0, %s46
      %s64 = sphi 0, %s64
      %s66 = sphi 0, %s64
      %s67 = sphi 0, %s66
      %s81 = sphi 0, %s67
      %s87 = sphi 0, %s89
      %s90 = sphi 0, %s87
      %s91 = sphi 0, %s90
      %s107 = sphi 0, %s91
    $region4: #{lenet5_variant2_forward.4} parent=1 // loop_header_branch
      %12 = sbr.rel (%p10) target = $region8
    $region5: #{lenet5_variant2_forward.4} parent=1 // loop_body
      %s14 = ssub.s32 %s9, 1
      %s15 = ssub.s32 %s9, 2
      %s16 = sadd.s32 %s9, 1
      %s17 = ssub.s32 %s9, %s16
      %p18 = scmp.eq.s32.totalorder %s17, 0
      %s20 = sadd.s32 %s19, 1
      %s21 = scalar_select %p18, %s19, %s20
      %p24 = pneg %p18
      %p25 = scmp.eq.s32.totalorder %s9, 1
      %p26 = por %p24, %p25
      %p27 = scmp.ne.s32.totalorder %s19, %s22
      %p28 = scmp.eq.s32.totalorder %s9, 0
      %p29 = por %p27, %p28
      %p30 = scmp.ne.s32.totalorder %s19, %s22
      %p31 = scmp.eq.s32.totalorder %s14, 1
      %p32 = por %p30, %p31
      %p33 = scmp.ne.s32.totalorder %s22, %s23
      %p34 = scmp.eq.s32.totalorder %s14, 0
      %p35 = por %p33, %p34
      %p36 = scmp.ne.s32.totalorder %s22, %s23
      %p37 = scmp.eq.s32.totalorder %s15, 1
      %p38 = por %p36, %p37
      %p40 = scmp.ne.s32.totalorder %s23, %s39
      %p41 = scmp.eq.s32.totalorder %s15, 0
      %p42 = por %p40, %p41
      %s44 = sadd.s32 %s43, 1
      %p47 = scmp.eq.s32.totalorder %s9, 1
      %p48 = scmp.ne.s32.totalorder %s43, %s45
      %p49 = scmp.eq.s32.totalorder %s9, 0
      %p50 = por %p48, %p49
      %p51 = scmp.ne.s32.totalorder %s43, %s45
      %p52 = scmp.eq.s32.totalorder %s14, 1
      %p53 = por %p51, %p52
      %p54 = scmp.ne.s32.totalorder %s45, %s46
      %p55 = scmp.eq.s32.totalorder %s14, 0
      %p56 = por %p54, %p55
      %p57 = scmp.ne.s32.totalorder %s45, %s46
      %p58 = scmp.eq.s32.totalorder %s15, 1
      %p59 = por %p57, %p58
      %p61 = scmp.ne.s32.totalorder %s46, %s60
      %p62 = scmp.eq.s32.totalorder %s15, 0
      %p63 = por %p61, %p62
      %s65 = sadd.s32 %s64, 1
      %p68 = scmp.eq.s32.totalorder %s9, 1
      %p69 = scmp.ne.s32.totalorder %s64, %s66
      %p70 = scmp.eq.s32.totalorder %s9, 0
      %p71 = por %p69, %p70
      %p72 = scmp.ne.s32.totalorder %s64, %s66
      %p73 = scmp.eq.s32.totalorder %s14, 1
      %p74 = por %p72, %p73
      %p75 = scmp.ne.s32.totalorder %s66, %s67
      %p76 = scmp.eq.s32.totalorder %s14, 0
      %p77 = por %p75, %p76
      %p78 = scmp.ne.s32.totalorder %s66, %s67
      %p79 = scmp.eq.s32.totalorder %s15, 1
      %p80 = por %p78, %p79
      %p82 = scmp.ne.s32.totalorder %s67, %s81
      %p83 = scmp.eq.s32.totalorder %s15, 0
      %p84 = por %p82, %p83
      %s85 = ssub.s32 %s9, %s16
      %p86 = scmp.eq.s32.totalorder %s85, 0
      %s88 = sadd.s32 %s87, 1
      %s89 = scalar_select %p86, %s87, %s88
      %p92 = pneg %p86
      %p93 = scmp.eq.s32.totalorder %s9, 1
      %p94 = por %p92, %p93
      %p95 = scmp.ne.s32.totalorder %s87, %s90
      %p96 = scmp.eq.s32.totalorder %s9, 0
      %p97 = por %p95, %p96
      %p98 = scmp.ne.s32.totalorder %s87, %s90
      %p99 = scmp.eq.s32.totalorder %s14, 1
      %p100 = por %p98, %p99
      %p101 = scmp.ne.s32.totalorder %s90, %s91
      %p102 = scmp.eq.s32.totalorder %s14, 0
      %p103 = por %p101, %p102
      %p104 = scmp.ne.s32.totalorder %s90, %s91
      %p105 = scmp.eq.s32.totalorder %s15, 1
      %p106 = por %p104, %p105
      %p108 = scmp.ne.s32.totalorder %s91, %s107
      %p109 = scmp.eq.s32.totalorder %s15, 0
      %p110 = por %p108, %p109
      %p111 = scmp.le.s32.totalorder 1, %s9
      %p112 = scmp.lt.s32.totalorder %s9, 3
      %p113 = pnand %p111, %p112
      %p114 = pneg %p113
      // Predicated region
      $region9: #{lenet5_variant2_forward.4} parent=5 // pred_check
        _
      $region10: #{lenet5_variant2_forward.4} parent=5 // pred_check_branch
        %116 = sbr.rel (%p113) target = $region12
      $region11: #{lenet5_variant2_forward.4} parent=5 // pred_region
        %s117 = ssub.s32 %s9, 1
        // Predicated region
        $region13: #{lenet5_variant2_forward.4} parent=11 // pred_check
          %p118 = pneg %p56
        $region14: #{lenet5_variant2_forward.4} parent=11 // pred_check_branch
          %120 = sbr.rel (%p118) target = $region16
        $region15: #{lenet5_variant2_forward.4} parent=11 // pred_region
          _
        $region16: #{lenet5_variant2_forward.4} parent=11 // pred_fallthru
          _
        // Predicated region
        $region17: #{lenet5_variant2_forward.4} parent=11 // pred_check
          %p121 = pneg %p77
        $region18: #{lenet5_variant2_forward.4} parent=11 // pred_check_branch
          %123 = sbr.rel (%p121) target = $region20
        $region19: #{lenet5_variant2_forward.4} parent=11 // pred_region
          _
        $region20: #{lenet5_variant2_forward.4} parent=11 // pred_fallthru
          _
      $region12: #{lenet5_variant2_forward.4} parent=5 // pred_fallthru
        _
      %p124 = scmp.lt.s32.totalorder %s9, 2
      // Predicated region
      $region21: #{lenet5_variant2_forward.4} parent=5 // pred_check
        %p125 = pneg %p124
      $region22: #{lenet5_variant2_forward.4} parent=5 // pred_check_branch
        %127 = sbr.rel (%p125) target = $region24
      $region23: #{lenet5_variant2_forward.4} parent=5 // pred_region
        // Predicated region
        $region25: #{lenet5_variant2_forward.4} parent=23 // pred_check
          %p128 = pneg %p29
        $region26: #{lenet5_variant2_forward.4} parent=23 // pred_check_branch
          %130 = sbr.rel (%p128) target = $region28
        $region27: #{lenet5_variant2_forward.4} parent=23 // pred_region
          %s131 = sand.u32 %s19, 1
          %s132 = sand.u32 %s19, 1
          %s133 = smul.addr %s132, 128
          %s134 = scalar_lea.vmem [#allocation2], %s133
          %s135 = smul.u32 4, %s9
          %s136 = ssub.s32 7, %s135
          %p137 = scmp.lt.s32.totalorder %s136, 4
          %s138 = scalar_select %p137, %s136, 4
          %s139 = smul.u32 16, %s138
          %s140 = smul.u32 %s139, 2
          %p141 = scmp.ne.s32.totalorder 0, %s140
          %s142 = smul.addr %s135, 2
          %s143 = smul.addr %s142, 4
          %s144 = scalar_lea.vmem %s0, %s143
          // Predicated region
          $region29: #{lenet5_variant2_forward.4} parent=27 // pred_check
            %p145 = pneg %p141
          $region30: #{lenet5_variant2_forward.4} parent=27 // pred_check_branch
            %147 = sbr.rel (%p145) target = $region32
          $region31: #{lenet5_variant2_forward.4} parent=27 // pred_region
            // Predicated region
            $region33: #{lenet5_variant2_forward.4} parent=31 // pred_check
              _
            $region34: #{lenet5_variant2_forward.4} parent=31 // pred_check_branch
              %149 = sbr.rel (0) target = $region36
            $region35: #{lenet5_variant2_forward.4} parent=31 // pred_region
              // Predicated region
              $region55: #{lenet5_variant2_forward.4} parent=35 // pred_check
                _
              $region56: #{lenet5_variant2_forward.4} parent=35 // pred_check_branch
                %235 = sbr.rel (0) target = $region58
              $region57: #{lenet5_variant2_forward.4} parent=35 // pred_region
                %s236 = sshrl.u32 %s138, 2
                // While loop
                $region59: #{lenet5_variant2_forward.4} parent=57 // loop_pre_header
                  _
                $region60: #{lenet5_variant2_forward.4} parent=57 // loop_header
                  %s238 = sphi 0, %s240
                  %p239 = scmp.ge.s32.totalorder %s238, %s236
                  %s243 = sphi 0, %s280
                  %s244 = sphi %s144, %s283
                  %s245 = sphi %s134, %s284
                $region61: #{lenet5_variant2_forward.4} parent=57 // loop_header_branch
                  %242 = sbr.rel (%p239) target = $region65
                $region62: #{lenet5_variant2_forward.4} parent=57 // loop_body
                  %v246 = vld [vmem:[%s244] sm:$0xff]
                  %247 = vst [vmem:[%s245] sm:$0xff] %v246
                  %v248 = vld [vmem:[%s244 + $0x8] sm:$0xff]
                  %249 = vst [vmem:[%s245 + $0x8] sm:$0xff] %v248
                  %v250 = vld [vmem:[%s244 + $0x10] sm:$0xff]
                  %251 = vst [vmem:[%s245 + $0x10] sm:$0xff] %v250
                  %v252 = vld [vmem:[%s244 + $0x18] sm:$0xff]
                  %253 = vst [vmem:[%s245 + $0x18] sm:$0xff] %v252
                  %v254 = vld [vmem:[%s244 + $0x38] sm:$0xff]
                  %255 = vst [vmem:[%s245 + $0x20] sm:$0xff] %v254
                  %v256 = vld [vmem:[%s244 + $0x40] sm:$0xff]
                  %257 = vst [vmem:[%s245 + $0x28] sm:$0xff] %v256
                  %v258 = vld [vmem:[%s244 + $0x48] sm:$0xff]
                  %259 = vst [vmem:[%s245 + $0x30] sm:$0xff] %v258
                  %v260 = vld [vmem:[%s244 + $0x50] sm:$0xff]
                  %261 = vst [vmem:[%s245 + $0x38] sm:$0xff] %v260
                  %v262 = vld [vmem:[%s244 + $0x70] sm:$0xff]
                  %263 = vst [vmem:[%s245 + $0x40] sm:$0xff] %v262
                  %v264 = vld [vmem:[%s244 + $0x78] sm:$0xff]
                  %265 = vst [vmem:[%s245 + $0x48] sm:$0xff] %v264
                  %v266 = vld [vmem:[%s244 + $0x80] sm:$0xff]
                  %267 = vst [vmem:[%s245 + $0x50] sm:$0xff] %v266
                  %v268 = vld [vmem:[%s244 + $0x88] sm:$0xff]
                  %269 = vst [vmem:[%s245 + $0x58] sm:$0xff] %v268
                  %v270 = vld [vmem:[%s244 + $0xa8] sm:$0xff]
                  %271 = vst [vmem:[%s245 + $0x60] sm:$0xff] %v270
                  %v272 = vld [vmem:[%s244 + $0xb0] sm:$0xff]
                  %273 = vst [vmem:[%s245 + $0x68] sm:$0xff] %v272
                  %v274 = vld [vmem:[%s244 + $0xb8] sm:$0xff]
                  %275 = vst [vmem:[%s245 + $0x70] sm:$0xff] %v274
                  %v276 = vld [vmem:[%s244 + $0xc0] sm:$0xff]
                  %277 = vst [vmem:[%s245 + $0x78] sm:$0xff] %v276
                  %s278 = sadd.s32 1, %s243
                  %p279 = scmp.ge.s32.totalorder %s278, %s236
                  %s280 = scalar_select %p279, 0, %s278
                  %s281 = smul.u32 %s280, 32
                  %s282 = smul.u32 %s280, 32
                  %s283 = scalar_lea.vmem %s144, %s281
                  %s284 = scalar_lea.vmem %s134, %s282 [#allocation2]
                $region63: #{lenet5_variant2_forward.4} parent=57 // loop_footer
                  %s240 = sadd.s32 %s238, 1
                $region64: #{lenet5_variant2_forward.4} parent=57 // loop_footer_branch
                  %237 = sbr.rel target = $region60
                $region65: #{lenet5_variant2_forward.4} parent=57 // loop_exit
                  _
                %s285 = sshrl.u32 %s138, 2
                %s286 = sand.u32 %s138, 3
                %s287 = smul.u32 %s285, 4
                %s288 = smul.u32 8, %s287
                %s289 = scalar_lea.vmem %s144, %s288
                %s290 = smul.u32 8, %s287
                %s291 = scalar_lea.vmem %s134, %s290 [#allocation2]
                // While loop
                $region66: #{lenet5_variant2_forward.4} parent=57 // loop_pre_header
                  _
                $region67: #{lenet5_variant2_forward.4} parent=57 // loop_header
                  %s293 = sphi 0, %s295
                  %p294 = scmp.ge.s32.totalorder %s293, %s286
                  %s298 = sphi 0, %s311
                  %s299 = sphi %s289, %s314
                  %s300 = sphi %s291, %s315
                $region68: #{lenet5_variant2_forward.4} parent=57 // loop_header_branch
                  %297 = sbr.rel (%p294) target = $region72
                $region69: #{lenet5_variant2_forward.4} parent=57 // loop_body
                  %v301 = vld [vmem:[%s299] sm:$0xff]
                  %302 = vst [vmem:[%s300] sm:$0xff] %v301
                  %v303 = vld [vmem:[%s299 + $0x38] sm:$0xff]
                  %304 = vst [vmem:[%s300 + $0x20] sm:$0xff] %v303
                  %v305 = vld [vmem:[%s299 + $0x70] sm:$0xff]
                  %306 = vst [vmem:[%s300 + $0x40] sm:$0xff] %v305
                  %v307 = vld [vmem:[%s299 + $0xa8] sm:$0xff]
                  %308 = vst [vmem:[%s300 + $0x60] sm:$0xff] %v307
                  %s309 = sadd.s32 1, %s298
                  %p310 = scmp.ge.s32.totalorder %s309, %s286
                  %s311 = scalar_select %p310, 0, %s309
                  %s312 = smul.u32 %s311, 8
                  %s313 = smul.u32 %s311, 8
                  %s314 = scalar_lea.vmem %s289, %s312
                  %s315 = scalar_lea.vmem %s291, %s313 [#allocation2]
                $region70: #{lenet5_variant2_forward.4} parent=57 // loop_footer
                  %s295 = sadd.s32 %s293, 1
                $region71: #{lenet5_variant2_forward.4} parent=57 // loop_footer_branch
                  %292 = sbr.rel target = $region67
                $region72: #{lenet5_variant2_forward.4} parent=57 // loop_exit
                  _
              $region58: #{lenet5_variant2_forward.4} parent=35 // pred_fallthru
                _
              // Predicated region
              $region73: #{lenet5_variant2_forward.4} parent=35 // pred_check
                _
              $region74: #{lenet5_variant2_forward.4} parent=35 // pred_check_branch
                %317 = sbr.rel target = $region76
              $region75: #{lenet5_variant2_forward.4} parent=35 // pred_region
                _
              $region76: #{lenet5_variant2_forward.4} parent=35 // pred_fallthru
                _
            $region36: #{lenet5_variant2_forward.4} parent=31 // pred_fallthru
              _
            // Predicated region
            $region37: #{lenet5_variant2_forward.4} parent=31 // pred_check
              _
            $region38: #{lenet5_variant2_forward.4} parent=31 // pred_check_branch
              %151 = sbr.rel target = $region40
            $region39: #{lenet5_variant2_forward.4} parent=31 // pred_region
              %s153 = ssub.s32 256, 1
              %s154 = sshrl.u32 %s138, 2
              // While loop
              $region41: #{lenet5_variant2_forward.4} parent=39 // loop_pre_header
                _
              $region42: #{lenet5_variant2_forward.4} parent=39 // loop_header
                %s156 = sphi 0, %s158
                %p157 = scmp.ge.s32.totalorder %s156, %s154
                %s161 = sphi 0, %s198
                %s162 = sphi %s144, %s201
                %s163 = sphi %s134, %s202
              $region43: #{lenet5_variant2_forward.4} parent=39 // loop_header_branch
                %160 = sbr.rel (%p157) target = $region47
              $region44: #{lenet5_variant2_forward.4} parent=39 // loop_body
                %v164 = vld [vmem:[%s162] sm:%s153]
                %165 = vst [vmem:[%s163] sm:%s153] %v164
                %v166 = vld [vmem:[%s162 + $0x8] sm:%s153]
                %167 = vst [vmem:[%s163 + $0x8] sm:%s153] %v166
                %v168 = vld [vmem:[%s162 + $0x10] sm:%s153]
                %169 = vst [vmem:[%s163 + $0x10] sm:%s153] %v168
                %v170 = vld [vmem:[%s162 + $0x18] sm:%s153]
                %171 = vst [vmem:[%s163 + $0x18] sm:%s153] %v170
                %v172 = vld [vmem:[%s162 + $0x38] sm:%s153]
                %173 = vst [vmem:[%s163 + $0x20] sm:%s153] %v172
                %v174 = vld [vmem:[%s162 + $0x40] sm:%s153]
                %175 = vst [vmem:[%s163 + $0x28] sm:%s153] %v174
                %v176 = vld [vmem:[%s162 + $0x48] sm:%s153]
                %177 = vst [vmem:[%s163 + $0x30] sm:%s153] %v176
                %v178 = vld [vmem:[%s162 + $0x50] sm:%s153]
                %179 = vst [vmem:[%s163 + $0x38] sm:%s153] %v178
                %v180 = vld [vmem:[%s162 + $0x70] sm:%s153]
                %181 = vst [vmem:[%s163 + $0x40] sm:%s153] %v180
                %v182 = vld [vmem:[%s162 + $0x78] sm:%s153]
                %183 = vst [vmem:[%s163 + $0x48] sm:%s153] %v182
                %v184 = vld [vmem:[%s162 + $0x80] sm:%s153]
                %185 = vst [vmem:[%s163 + $0x50] sm:%s153] %v184
                %v186 = vld [vmem:[%s162 + $0x88] sm:%s153]
                %187 = vst [vmem:[%s163 + $0x58] sm:%s153] %v186
                %v188 = vld [vmem:[%s162 + $0xa8] sm:%s153]
                %189 = vst [vmem:[%s163 + $0x60] sm:%s153] %v188
                %v190 = vld [vmem:[%s162 + $0xb0] sm:%s153]
                %191 = vst [vmem:[%s163 + $0x68] sm:%s153] %v190
                %v192 = vld [vmem:[%s162 + $0xb8] sm:%s153]
                %193 = vst [vmem:[%s163 + $0x70] sm:%s153] %v192
                %v194 = vld [vmem:[%s162 + $0xc0] sm:%s153]
                %195 = vst [vmem:[%s163 + $0x78] sm:%s153] %v194
                %s196 = sadd.s32 1, %s161
                %p197 = scmp.ge.s32.totalorder %s196, %s154
                %s198 = scalar_select %p197, 0, %s196
                %s199 = smul.u32 %s198, 32
                %s200 = smul.u32 %s198, 32
                %s201 = scalar_lea.vmem %s144, %s199
                %s202 = scalar_lea.vmem %s134, %s200 [#allocation2]
              $region45: #{lenet5_variant2_forward.4} parent=39 // loop_footer
                %s158 = sadd.s32 %s156, 1
              $region46: #{lenet5_variant2_forward.4} parent=39 // loop_footer_branch
                %155 = sbr.rel target = $region42
              $region47: #{lenet5_variant2_forward.4} parent=39 // loop_exit
                _
              %s203 = sshrl.u32 %s138, 2
              %s204 = sand.u32 %s138, 3
              %s205 = smul.u32 %s203, 4
              %s206 = smul.u32 8, %s205
              %s207 = scalar_lea.vmem %s144, %s206
              %s208 = smul.u32 8, %s205
              %s209 = scalar_lea.vmem %s134, %s208 [#allocation2]
              // While loop
              $region48: #{lenet5_variant2_forward.4} parent=39 // loop_pre_header
                _
              $region49: #{lenet5_variant2_forward.4} parent=39 // loop_header
                %s211 = sphi 0, %s213
                %p212 = scmp.ge.s32.totalorder %s211, %s204
                %s216 = sphi 0, %s229
                %s217 = sphi %s207, %s232
                %s218 = sphi %s209, %s233
              $region50: #{lenet5_variant2_forward.4} parent=39 // loop_header_branch
                %215 = sbr.rel (%p212) target = $region54
              $region51: #{lenet5_variant2_forward.4} parent=39 // loop_body
                %v219 = vld [vmem:[%s217] sm:%s153]
                %220 = vst [vmem:[%s218] sm:%s153] %v219
                %v221 = vld [vmem:[%s217 + $0x38] sm:%s153]
                %222 = vst [vmem:[%s218 + $0x20] sm:%s153] %v221
                %v223 = vld [vmem:[%s217 + $0x70] sm:%s153]
                %224 = vst [vmem:[%s218 + $0x40] sm:%s153] %v223
                %v225 = vld [vmem:[%s217 + $0xa8] sm:%s153]
                %226 = vst [vmem:[%s218 + $0x60] sm:%s153] %v225
                %s227 = sadd.s32 1, %s216
                %p228 = scmp.ge.s32.totalorder %s227, %s204
                %s229 = scalar_select %p228, 0, %s227
                %s230 = smul.u32 %s229, 8
                %s231 = smul.u32 %s229, 8
                %s232 = scalar_lea.vmem %s207, %s230
                %s233 = scalar_lea.vmem %s209, %s231 [#allocation2]
              $region52: #{lenet5_variant2_forward.4} parent=39 // loop_footer
                %s213 = sadd.s32 %s211, 1
              $region53: #{lenet5_variant2_forward.4} parent=39 // loop_footer_branch
                %210 = sbr.rel target = $region49
              $region54: #{lenet5_variant2_forward.4} parent=39 // loop_exit
                _
            $region40: #{lenet5_variant2_forward.4} parent=31 // pred_fallthru
              _
          $region32: #{lenet5_variant2_forward.4} parent=27 // pred_fallthru
            _
          %318 = vnop
        $region28: #{lenet5_variant2_forward.4} parent=23 // pred_fallthru
          _
      $region24: #{lenet5_variant2_forward.4} parent=5 // pred_fallthru
        _
      %p319 = scmp.le.s32.totalorder 1, %s9
      %p320 = scmp.lt.s32.totalorder %s9, 3
      %p321 = pnand %p319, %p320
      %p322 = pneg %p321
      // Predicated region
      $region77: #{lenet5_variant2_forward.4} parent=5 // pred_check
        _
      $region78: #{lenet5_variant2_forward.4} parent=5 // pred_check_branch
        %324 = sbr.rel (%p321) target = $region80
      $region79: #{lenet5_variant2_forward.4} parent=5 // pred_region
        %s325 = ssub.s32 %s9, 1
        %s326 = sand.u32 %s22, 1
        %s327 = sand.u32 %s22, 1
        %s328 = smul.addr %s327, 128
        %s329 = scalar_lea.vmem [#allocation2], %s328
        // Predicated region
        $region81: #{lenet5_variant2_forward.4} parent=79 // pred_check
          %p330 = pneg %p35
        $region82: #{lenet5_variant2_forward.4} parent=79 // pred_check_branch
          %332 = sbr.rel (%p330) target = $region84
        $region83: #{lenet5_variant2_forward.4} parent=79 // pred_region
          _
        $region84: #{lenet5_variant2_forward.4} parent=79 // pred_fallthru
          _
        %s333 = sand.u32 %s22, 1
        %s334 = sand.u32 %s22, 1
        %s335 = smul.addr %s334, 128
        %s336 = scalar_lea.vmem [#allocation2], %s335
        %p337 = pneg %p35
        %p338 = pneg %p32
        %p339 = pneg %p56
        %p340 = pneg %p53
        %p341 = pneg %p77
        %p342 = pneg %p74
        %p343 = pneg %p103
        %p344 = pneg %p100
        %s345 = sand.u32 %s90, 1
        %s346 = sand.u32 %s90, 1
        %s347 = smul.addr %s346, 16
        %s348 = scalar_lea.vmem [#allocation3], %s347
        %s349 = smul.u32 4, %s14
        %s350 = ssub.s32 7, %s349
        %p351 = scmp.lt.s32.totalorder %s350, 4
        %s352 = scalar_select %p351, %s350, 4
        %s353 = smul.u32 16, %s352
        %s354 = smul.u32 %s353, 2
        %s355 = smul.u32 4, %s14
        %s356 = ssub.s32 7, %s355
        %p357 = scmp.lt.s32.totalorder %s356, 4
        %s358 = scalar_select %p357, %s356, 4
        %s359 = smul.u32 4, %s358
        %v360 = vld [vmem:[%s1] sm:$0xf]
        %v361 = vld [vmem:[%s1 + $0x4] sm:$0xf]
        %v362 = vld [vmem:[%s1 + $0x8] sm:$0xf]
        %v363 = vld [vmem:[%s1 + $0xc] sm:$0xf]
        %v364 = vld [vmem:[%s1 + $0x10] sm:$0xf]
        %v365 = vld [vmem:[%s1 + $0x14] sm:$0xf]
        %v366 = vld [vmem:[%s1 + $0x18] sm:$0xf]
        %v367 = vld [vmem:[%s1 + $0x1c] sm:$0xf]
        %v368 = vld [vmem:[%s1 + $0x20] sm:$0xf]
        %v369 = vld [vmem:[%s1 + $0x24] sm:$0xf]
        %v370 = vld [vmem:[%s1 + $0x28] sm:$0xf]
        %v371 = vld [vmem:[%s1 + $0x2c] sm:$0xf]
        %v372 = vld [vmem:[%s1 + $0x30] sm:$0xf]
        %v373 = vld [vmem:[%s1 + $0x34] sm:$0xf]
        %v374 = vld [vmem:[%s1 + $0x38] sm:$0xf]
        %v375 = vld [vmem:[%s1 + $0x3c] sm:$0xf]
        %v376 = vld [vmem:[%s1 + $0x40] sm:$0xf]
        %v377 = vld [vmem:[%s1 + $0x44] sm:$0xf]
        %v378 = vld [vmem:[%s1 + $0x48] sm:$0xf]
        %v379 = vld [vmem:[%s1 + $0x4c] sm:$0xf]
        %v380 = vld [vmem:[%s1 + $0x50] sm:$0xf]
        %v381 = vld [vmem:[%s1 + $0x54] sm:$0xf]
        %v382 = vld [vmem:[%s1 + $0x58] sm:$0xf]
        %v383 = vld [vmem:[%s1 + $0x5c] sm:$0xf]
        %v384 = vld [vmem:[%s1 + $0x60] sm:$0xf]
        %v385 = vld [vmem:[%s1 + $0x64] sm:$0xf]
        %v386 = vld [vmem:[%s1 + $0x68] sm:$0xf]
        %v387 = vld [vmem:[%s1 + $0x6c] sm:$0xf]
        %v388 = vld [vmem:[%s1 + $0x70] sm:$0xf]
        %v389 = vld [vmem:[%s1 + $0x74] sm:$0xf]
        %v390 = vld [vmem:[%s1 + $0x78] sm:$0xf]
        %v391 = vld [vmem:[%s1 + $0x7c] sm:$0xf]
        %v392 = vld [vmem:[%s329] sm:$0xff]
        %v393 = vld [vmem:[%s329 + $0x8] sm:$0xff]
        %v394 = vld [vmem:[%s329 + $0x10] sm:$0xff]
        %v395 = vld [vmem:[%s329 + $0x18] sm:$0xff]
        %v400 = vunpack.c.l.b16 %v392
        %v401 = vunpack.c.h.b16 %v392
        %v402 = vunpack.c.l.b16 %v393
        %v403 = vunpack.c.h.b16 %v393
        %v404 = vunpack.c.l.b16 %v394
        %v405 = vunpack.c.h.b16 %v394
        %v406 = vunpack.c.l.b16 %v395
        %v407 = vunpack.c.h.b16 %v395
        %v408 = vpack.c.b16 %v402, %v400
        %v409 = vpack.c.b16 %v403, %v401
        %v410 = vpack.c.b16 %v406, %v404
        %v411 = vpack.c.b16 %v407, %v405
        %v448 = vunpack.c.l.b16 %v360
        %v449 = vunpack.c.l.b16 %v361
        %v450 = vunpack.c.l.b16 %v362
        %v451 = vunpack.c.l.b16 %v363
        %v452 = vunpack.c.l.b16 %v364
        %v453 = vunpack.c.l.b16 %v365
        %v454 = vunpack.c.l.b16 %v366
        %v455 = vunpack.c.l.b16 %v367
        %v456 = vunpack.c.l.b16 %v368
        %v457 = vunpack.c.l.b16 %v369
        %v458 = vunpack.c.l.b16 %v370
        %v459 = vunpack.c.l.b16 %v371
        %v460 = vunpack.c.l.b16 %v372
        %v461 = vunpack.c.l.b16 %v373
        %v462 = vunpack.c.l.b16 %v374
        %v463 = vunpack.c.l.b16 %v375
        %v464 = vunpack.c.l.b16 %v376
        %v465 = vunpack.c.l.b16 %v377
        %v466 = vunpack.c.l.b16 %v378
        %v467 = vunpack.c.l.b16 %v379
        %v468 = vunpack.c.l.b16 %v380
        %v469 = vunpack.c.l.b16 %v381
        %v470 = vunpack.c.l.b16 %v382
        %v471 = vunpack.c.l.b16 %v383
        %v472 = vunpack.c.l.b16 %v384
        %v473 = vunpack.c.l.b16 %v385
        %v474 = vunpack.c.l.b16 %v386
        %v475 = vunpack.c.l.b16 %v387
        %v476 = vunpack.c.l.b16 %v388
        %v477 = vunpack.c.l.b16 %v389
        %v478 = vunpack.c.l.b16 %v390
        %v479 = vunpack.c.l.b16 %v391
        %v480 = vpack.c.b16 %v449, %v448
        %v481 = vpack.c.b16 %v451, %v450
        %v482 = vpack.c.b16 %v453, %v452
        %v483 = vpack.c.b16 %v455, %v454
        %v484 = vpack.c.b16 %v457, %v456
        %v485 = vpack.c.b16 %v459, %v458
        %v486 = vpack.c.b16 %v461, %v460
        %v487 = vpack.c.b16 %v463, %v462
        %v488 = vpack.c.b16 %v465, %v464
        %v489 = vpack.c.b16 %v467, %v466
        %v490 = vpack.c.b16 %v469, %v468
        %v491 = vpack.c.b16 %v471, %v470
        %v492 = vpack.c.b16 %v473, %v472
        %v493 = vpack.c.b16 %v475, %v474
        %v494 = vpack.c.b16 %v477, %v476
        %v495 = vpack.c.b16 %v479, %v478
        %512 = vmatpush.bf16.msra.mxu0 %v487
        %513 = vmatpush.bf16.msra.mxu0 %v486
        %514 = vmatpush.bf16.msra.mxu0 %v485
        %515 = vmatpush.bf16.msra.mxu0 %v484
        %516 = vmatpush.bf16.msra.mxu0 %v483
        %517 = vmatpush.bf16.msra.mxu0 %v482
        %518 = vmatpush.bf16.msra.mxu0 %v481
        %519 = vmatpush.bf16.msra.mxu0 %v480
        %520 = vmatmul.bf16.gmra.mxu0 %v408
        %v521 = vpop.f32.mrf.mxu0
        %v522 = vadd.f32 0.0, %v521
        %v523 = vpop.f32.mrf.mxu0
        %v524 = vadd.f32 0.0, %v523
        %525 = vmatmul.bf16.gmra.mxu0 %v410
        %v526 = vpop.f32.mrf.mxu0
        %v527 = vadd.f32 0.0, %v526
        %v528 = vpop.f32.mrf.mxu0
        %v529 = vadd.f32 0.0, %v528
        %530 = vdwg.mxu0
        %531 = vmatpush.bf16.msra.mxu0 %v495
        %532 = vmatpush.bf16.msra.mxu0 %v494
        %533 = vmatpush.bf16.msra.mxu0 %v493
        %534 = vmatpush.bf16.msra.mxu0 %v492
        %535 = vmatpush.bf16.msra.mxu0 %v491
        %536 = vmatpush.bf16.msra.mxu0 %v490
        %537 = vmatpush.bf16.msra.mxu0 %v489
        %538 = vmatpush.bf16.msra.mxu0 %v488
        %539 = vmatmul.bf16.gmra.mxu0 %v409
        %v540 = vpop.f32.mrf.mxu0
        %v541 = vadd.f32 %v522, %v540
        %v542 = vpop.f32.mrf.mxu0
        %v543 = vadd.f32 %v524, %v542
        %544 = vmatmul.bf16.gmra.mxu0 %v411
        %v545 = vpop.f32.mrf.mxu0
        %v546 = vadd.f32 %v527, %v545
        %v547 = vpop.f32.mrf.mxu0
        %v548 = vadd.f32 %v529, %v547
        %549 = vdwg.mxu0
        %s550 = scalar_lea.vmem %s329, 32 [#allocation2]
        %v551 = vld [vmem:[%s550] sm:$0xff]
        %v552 = vld [vmem:[%s550 + $0x8] sm:$0xff]
        %v553 = vld [vmem:[%s550 + $0x10] sm:$0xff]
        %v554 = vld [vmem:[%s550 + $0x18] sm:$0xff]
        %v559 = vunpack.c.l.b16 %v551
        %v560 = vunpack.c.h.b16 %v551
        %v561 = vunpack.c.l.b16 %v552
        %v562 = vunpack.c.h.b16 %v552
        %v563 = vunpack.c.l.b16 %v553
        %v564 = vunpack.c.h.b16 %v553
        %v565 = vunpack.c.l.b16 %v554
        %v566 = vunpack.c.h.b16 %v554
        %v567 = vpack.c.b16 %v561, %v559
        %v568 = vpack.c.b16 %v562, %v560
        %v569 = vpack.c.b16 %v565, %v563
        %v570 = vpack.c.b16 %v566, %v564
        %575 = vmatpush.bf16.msra.mxu0 %v487
        %576 = vmatpush.bf16.msra.mxu0 %v486
        %577 = vmatpush.bf16.msra.mxu0 %v485
        %578 = vmatpush.bf16.msra.mxu0 %v484
        %579 = vmatpush.bf16.msra.mxu0 %v483
        %580 = vmatpush.bf16.msra.mxu0 %v482
        %581 = vmatpush.bf16.msra.mxu0 %v481
        %582 = vmatpush.bf16.msra.mxu0 %v480
        %583 = vmatmul.bf16.gmra.mxu0 %v567
        %v584 = vpop.f32.mrf.mxu0
        %v585 = vadd.f32 0.0, %v584
        %v586 = vpop.f32.mrf.mxu0
        %v587 = vadd.f32 0.0, %v586
        %588 = vmatmul.bf16.gmra.mxu0 %v569
        %v589 = vpop.f32.mrf.mxu0
        %v590 = vadd.f32 0.0, %v589
        %v591 = vpop.f32.mrf.mxu0
        %v592 = vadd.f32 0.0, %v591
        %593 = vdwg.mxu0
        %594 = vmatpush.bf16.msra.mxu0 %v495
        %595 = vmatpush.bf16.msra.mxu0 %v494
        %596 = vmatpush.bf16.msra.mxu0 %v493
        %597 = vmatpush.bf16.msra.mxu0 %v492
        %598 = vmatpush.bf16.msra.mxu0 %v491
        %599 = vmatpush.bf16.msra.mxu0 %v490
        %600 = vmatpush.bf16.msra.mxu0 %v489
        %601 = vmatpush.bf16.msra.mxu0 %v488
        %602 = vmatmul.bf16.gmra.mxu0 %v568
        %v603 = vpop.f32.mrf.mxu0
        %v604 = vadd.f32 %v585, %v603
        %v605 = vpop.f32.mrf.mxu0
        %v606 = vadd.f32 %v587, %v605
        %607 = vmatmul.bf16.gmra.mxu0 %v570
        %v608 = vpop.f32.mrf.mxu0
        %v609 = vadd.f32 %v590, %v608
        %v610 = vpop.f32.mrf.mxu0
        %v611 = vadd.f32 %v592, %v610
        %612 = vdwg.mxu0
        %s613 = scalar_lea.vmem %s329, 64 [#allocation2]
        %v614 = vld [vmem:[%s613] sm:$0xff]
        %v615 = vld [vmem:[%s613 + $0x8] sm:$0xff]
        %v616 = vld [vmem:[%s613 + $0x10] sm:$0xff]
        %v617 = vld [vmem:[%s613 + $0x18] sm:$0xff]
        %v622 = vunpack.c.l.b16 %v614
        %v623 = vunpack.c.h.b16 %v614
        %v624 = vunpack.c.l.b16 %v615
        %v625 = vunpack.c.h.b16 %v615
        %v626 = vunpack.c.l.b16 %v616
        %v627 = vunpack.c.h.b16 %v616
        %v628 = vunpack.c.l.b16 %v617
        %v629 = vunpack.c.h.b16 %v617
        %v630 = vpack.c.b16 %v624, %v622
        %v631 = vpack.c.b16 %v625, %v623
        %v632 = vpack.c.b16 %v628, %v626
        %v633 = vpack.c.b16 %v629, %v627
        %638 = vmatpush.bf16.msra.mxu0 %v487
        %639 = vmatpush.bf16.msra.mxu0 %v486
        %640 = vmatpush.bf16.msra.mxu0 %v485
        %641 = vmatpush.bf16.msra.mxu0 %v484
        %642 = vmatpush.bf16.msra.mxu0 %v483
        %643 = vmatpush.bf16.msra.mxu0 %v482
        %644 = vmatpush.bf16.msra.mxu0 %v481
        %645 = vmatpush.bf16.msra.mxu0 %v480
        %646 = vmatmul.bf16.gmra.mxu0 %v630
        %v647 = vpop.f32.mrf.mxu0
        %v648 = vadd.f32 0.0, %v647
        %v649 = vpop.f32.mrf.mxu0
        %v650 = vadd.f32 0.0, %v649
        %651 = vmatmul.bf16.gmra.mxu0 %v632
        %v652 = vpop.f32.mrf.mxu0
        %v653 = vadd.f32 0.0, %v652
        %v654 = vpop.f32.mrf.mxu0
        %v655 = vadd.f32 0.0, %v654
        %656 = vdwg.mxu0
        %657 = vmatpush.bf16.msra.mxu0 %v495
        %658 = vmatpush.bf16.msra.mxu0 %v494
        %659 = vmatpush.bf16.msra.mxu0 %v493
        %660 = vmatpush.bf16.msra.mxu0 %v492
        %661 = vmatpush.bf16.msra.mxu0 %v491
        %662 = vmatpush.bf16.msra.mxu0 %v490
        %663 = vmatpush.bf16.msra.mxu0 %v489
        %664 = vmatpush.bf16.msra.mxu0 %v488
        %665 = vmatmul.bf16.gmra.mxu0 %v631
        %v666 = vpop.f32.mrf.mxu0
        %v667 = vadd.f32 %v648, %v666
        %v668 = vpop.f32.mrf.mxu0
        %v669 = vadd.f32 %v650, %v668
        %670 = vmatmul.bf16.gmra.mxu0 %v633
        %v671 = vpop.f32.mrf.mxu0
        %v672 = vadd.f32 %v653, %v671
        %v673 = vpop.f32.mrf.mxu0
        %v674 = vadd.f32 %v655, %v673
        %675 = vdwg.mxu0
        %s676 = scalar_lea.vmem %s329, 96 [#allocation2]
        %v677 = vld [vmem:[%s676] sm:$0xff]
        %v678 = vld [vmem:[%s676 + $0x8] sm:$0xff]
        %v679 = vld [vmem:[%s676 + $0x10] sm:$0xff]
        %v680 = vld [vmem:[%s676 + $0x18] sm:$0xff]
        %v685 = vunpack.c.l.b16 %v677
        %v686 = vunpack.c.h.b16 %v677
        %v687 = vunpack.c.l.b16 %v678
        %v688 = vunpack.c.h.b16 %v678
        %v689 = vunpack.c.l.b16 %v679
        %v690 = vunpack.c.h.b16 %v679
        %v691 = vunpack.c.l.b16 %v680
        %v692 = vunpack.c.h.b16 %v680
        %v693 = vpack.c.b16 %v687, %v685
        %v694 = vpack.c.b16 %v688, %v686
        %v695 = vpack.c.b16 %v691, %v689
        %v696 = vpack.c.b16 %v692, %v690
        %701 = vmatpush.bf16.msra.mxu0 %v487
        %702 = vmatpush.bf16.msra.mxu0 %v486
        %703 = vmatpush.bf16.msra.mxu0 %v485
        %704 = vmatpush.bf16.msra.mxu0 %v484
        %705 = vmatpush.bf16.msra.mxu0 %v483
        %706 = vmatpush.bf16.msra.mxu0 %v482
        %707 = vmatpush.bf16.msra.mxu0 %v481
        %708 = vmatpush.bf16.msra.mxu0 %v480
        %709 = vmatmul.bf16.gmra.mxu0 %v693
        %v710 = vpop.f32.mrf.mxu0
        %v711 = vadd.f32 0.0, %v710
        %v712 = vpop.f32.mrf.mxu0
        %v713 = vadd.f32 0.0, %v712
        %714 = vmatmul.bf16.gmra.mxu0 %v695
        %v715 = vpop.f32.mrf.mxu0
        %v716 = vadd.f32 0.0, %v715
        %v717 = vpop.f32.mrf.mxu0
        %v718 = vadd.f32 0.0, %v717
        %719 = vdwg.mxu0
        %720 = vmatpush.bf16.msra.mxu0 %v495
        %721 = vmatpush.bf16.msra.mxu0 %v494
        %722 = vmatpush.bf16.msra.mxu0 %v493
        %723 = vmatpush.bf16.msra.mxu0 %v492
        %724 = vmatpush.bf16.msra.mxu0 %v491
        %725 = vmatpush.bf16.msra.mxu0 %v490
        %726 = vmatpush.bf16.msra.mxu0 %v489
        %727 = vmatpush.bf16.msra.mxu0 %v488
        %728 = vmatmul.bf16.gmra.mxu0 %v694
        %v729 = vpop.f32.mrf.mxu0
        %v730 = vadd.f32 %v711, %v729
        %v731 = vpop.f32.mrf.mxu0
        %v732 = vadd.f32 %v713, %v731
        %733 = vmatmul.bf16.gmra.mxu0 %v696
        %v734 = vpop.f32.mrf.mxu0
        %v735 = vadd.f32 %v716, %v734
        %v736 = vpop.f32.mrf.mxu0
        %v737 = vadd.f32 %v718, %v736
        %738 = vdwg.mxu0
        %v739 = vmax.f32 %v541, %v604
        %v740 = vmax.f32 %v543, %v606
        %v741 = vmax.f32 %v546, %v609
        %v742 = vmax.f32 %v548, %v611
        %v743 = vmax.f32 %v667, %v730
        %v744 = vmax.f32 %v669, %v732
        %v745 = vmax.f32 %v672, %v735
        %v746 = vmax.f32 %v674, %v737
        %v747 = vmax.f32 %v739, %v743
        %v748 = vmax.f32 %v740, %v744
        %v749 = vmax.f32 %v741, %v745
        %v750 = vmax.f32 %v742, %v746
        %v751 = vld [vmem:[%s2] sm:$0x1]
        %v753 = vperm.slane %v751, 0
        %v755 = vadd.f32 %v747, %v753
        %v756 = vadd.f32 %v748, %v753
        %v757 = vadd.f32 %v749, %v753
        %v758 = vadd.f32 %v750, %v753
        %v759 = vmax.f32 %v755, 0.0
        %v760 = vmax.f32 %v756, 0.0
        %v761 = vmax.f32 %v757, 0.0
        %v762 = vmax.f32 %v758, 0.0
        %v763 = vpack.c.bf16 %v759, %v759
        %v764 = vpack.c.bf16 %v760, %v760
        %v765 = vpack.c.bf16 %v761, %v761
        %v766 = vpack.c.bf16 %v762, %v762
        %vm767 = vcmask 125952
        %768 = vst.msk [vmem:[%s348] sm:$0xf] %vm767, %v763
        %769 = vst.msk [vmem:[%s348 + $0x4] sm:$0xf] %vm767, %v764
        %770 = vst.msk [vmem:[%s348 + $0x8] sm:$0xf] %vm767, %v765
        %771 = vst.msk [vmem:[%s348 + $0xc] sm:$0xf] %vm767, %v766
        %s772 = sand.u32 %s90, 1
        %s773 = sand.u32 %s90, 1
        %s774 = smul.addr %s773, 16
        %s775 = scalar_lea.vmem [#allocation3], %s774
        // Predicated region
        $region85: #{lenet5_variant2_forward.4} parent=79 // pred_check
          %p776 = pneg %p100
        $region86: #{lenet5_variant2_forward.4} parent=79 // pred_check_branch
          %778 = sbr.rel (%p776) target = $region88
        $region87: #{lenet5_variant2_forward.4} parent=79 // pred_region
          %s779 = smul.u32 4, %s14
          %s780 = ssub.s32 7, %s779
          %p781 = scmp.lt.s32.totalorder %s780, 4
          %s782 = scalar_select %p781, %s780, 4
          %s783 = smul.u32 4, %s782
          %p784 = scmp.ne.s32.totalorder 0, %s783
          %s785 = smul.addr %s779, 4
          %s786 = scalar_lea.vmem %s3, %s785
          // Predicated region
          $region89: #{lenet5_variant2_forward.4} parent=87 // pred_check
            %p787 = pneg %p784
          $region90: #{lenet5_variant2_forward.4} parent=87 // pred_check_branch
            %789 = sbr.rel (%p787) target = $region92
          $region91: #{lenet5_variant2_forward.4} parent=87 // pred_region
            // Predicated region
            $region93: #{lenet5_variant2_forward.4} parent=91 // pred_check
              _
            $region94: #{lenet5_variant2_forward.4} parent=91 // pred_check_branch
              %791 = sbr.rel target = $region96
            $region95: #{lenet5_variant2_forward.4} parent=91 // pred_region
              // Predicated region
              $region115: #{lenet5_variant2_forward.4} parent=95 // pred_check
                _
              $region116: #{lenet5_variant2_forward.4} parent=95 // pred_check_branch
                %847 = sbr.rel (0) target = $region118
              $region117: #{lenet5_variant2_forward.4} parent=95 // pred_region
                %s849 = ssub.s32 16, 1
                %s850 = sshrl.u32 %s782, 2
                // While loop
                $region119: #{lenet5_variant2_forward.4} parent=117 // loop_pre_header
                  _
                $region120: #{lenet5_variant2_forward.4} parent=117 // loop_header
                  %s852 = sphi 0, %s854
                  %p853 = scmp.ge.s32.totalorder %s852, %s850
                  %s857 = sphi 0, %s870
                  %s858 = sphi %s775, %s873
                  %s859 = sphi %s786, %s874
                $region121: #{lenet5_variant2_forward.4} parent=117 // loop_header_branch
                  %856 = sbr.rel (%p853) target = $region125
                $region122: #{lenet5_variant2_forward.4} parent=117 // loop_body
                  %v860 = vld [vmem:[%s858] sm:%s849]
                  %861 = vst [vmem:[%s859] sm:%s849] %v860
                  %v862 = vld [vmem:[%s858 + $0x4] sm:%s849]
                  %863 = vst [vmem:[%s859 + $0x4] sm:%s849] %v862
                  %v864 = vld [vmem:[%s858 + $0x8] sm:%s849]
                  %865 = vst [vmem:[%s859 + $0x8] sm:%s849] %v864
                  %v866 = vld [vmem:[%s858 + $0xc] sm:%s849]
                  %867 = vst [vmem:[%s859 + $0xc] sm:%s849] %v866
                  %s868 = sadd.s32 1, %s857
                  %p869 = scmp.ge.s32.totalorder %s868, %s850
                  %s870 = scalar_select %p869, 0, %s868
                  %s871 = smul.u32 %s870, 16
                  %s872 = smul.u32 %s870, 16
                  %s873 = scalar_lea.vmem %s775, %s871 [#allocation3]
                  %s874 = scalar_lea.vmem %s786, %s872
                $region123: #{lenet5_variant2_forward.4} parent=117 // loop_footer
                  %s854 = sadd.s32 %s852, 1
                $region124: #{lenet5_variant2_forward.4} parent=117 // loop_footer_branch
                  %851 = sbr.rel target = $region120
                $region125: #{lenet5_variant2_forward.4} parent=117 // loop_exit
                  _
                %s875 = sshrl.u32 %s782, 2
                %s876 = sand.u32 %s782, 3
                %s877 = smul.u32 %s875, 4
                %s878 = smul.u32 4, %s877
                %s879 = scalar_lea.vmem %s775, %s878 [#allocation3]
                %s880 = smul.u32 4, %s877
                %s881 = scalar_lea.vmem %s786, %s880
                // While loop
                $region126: #{lenet5_variant2_forward.4} parent=117 // loop_pre_header
                  _
                $region127: #{lenet5_variant2_forward.4} parent=117 // loop_header
                  %s883 = sphi 0, %s885
                  %p884 = scmp.ge.s32.totalorder %s883, %s876
                  %s888 = sphi 0, %s895
                  %s889 = sphi %s879, %s898
                  %s890 = sphi %s881, %s899
                $region128: #{lenet5_variant2_forward.4} parent=117 // loop_header_branch
                  %887 = sbr.rel (%p884) target = $region132
                $region129: #{lenet5_variant2_forward.4} parent=117 // loop_body
                  %v891 = vld [vmem:[%s889] sm:%s849]
                  %892 = vst [vmem:[%s890] sm:%s849] %v891
                  %s893 = sadd.s32 1, %s888
                  %p894 = scmp.ge.s32.totalorder %s893, %s876
                  %s895 = scalar_select %p894, 0, %s893
                  %s896 = smul.u32 %s895, 4
                  %s897 = smul.u32 %s895, 4
                  %s898 = scalar_lea.vmem %s879, %s896 [#allocation3]
                  %s899 = scalar_lea.vmem %s881, %s897
                $region130: #{lenet5_variant2_forward.4} parent=117 // loop_footer
                  %s885 = sadd.s32 %s883, 1
                $region131: #{lenet5_variant2_forward.4} parent=117 // loop_footer_branch
                  %882 = sbr.rel target = $region127
                $region132: #{lenet5_variant2_forward.4} parent=117 // loop_exit
                  _
              $region118: #{lenet5_variant2_forward.4} parent=95 // pred_fallthru
                _
            $region96: #{lenet5_variant2_forward.4} parent=91 // pred_fallthru
              _
            // Predicated region
            $region97: #{lenet5_variant2_forward.4} parent=91 // pred_check
              _
            $region98: #{lenet5_variant2_forward.4} parent=91 // pred_check_branch
              %793 = sbr.rel (0) target = $region100
            $region99: #{lenet5_variant2_forward.4} parent=91 // pred_region
              %s795 = ssub.s32 16, 1
              %s796 = sshrl.u32 %s782, 2
              // While loop
              $region101: #{lenet5_variant2_forward.4} parent=99 // loop_pre_header
                _
              $region102: #{lenet5_variant2_forward.4} parent=99 // loop_header
                %s798 = sphi 0, %s800
                %p799 = scmp.ge.s32.totalorder %s798, %s796
                %s803 = sphi 0, %s816
                %s804 = sphi %s775, %s819
                %s805 = sphi %s786, %s820
              $region103: #{lenet5_variant2_forward.4} parent=99 // loop_header_branch
                %802 = sbr.rel (%p799) target = $region107
              $region104: #{lenet5_variant2_forward.4} parent=99 // loop_body
                %v806 = vld [vmem:[%s804] sm:%s795]
                %807 = vst [vmem:[%s805] sm:%s795] %v806
                %v808 = vld [vmem:[%s804 + $0x4] sm:%s795]
                %809 = vst [vmem:[%s805 + $0x4] sm:%s795] %v808
                %v810 = vld [vmem:[%s804 + $0x8] sm:%s795]
                %811 = vst [vmem:[%s805 + $0x8] sm:%s795] %v810
                %v812 = vld [vmem:[%s804 + $0xc] sm:%s795]
                %813 = vst [vmem:[%s805 + $0xc] sm:%s795] %v812
                %s814 = sadd.s32 1, %s803
                %p815 = scmp.ge.s32.totalorder %s814, %s796
                %s816 = scalar_select %p815, 0, %s814
                %s817 = smul.u32 %s816, 16
                %s818 = smul.u32 %s816, 16
                %s819 = scalar_lea.vmem %s775, %s817 [#allocation3]
                %s820 = scalar_lea.vmem %s786, %s818
              $region105: #{lenet5_variant2_forward.4} parent=99 // loop_footer
                %s800 = sadd.s32 %s798, 1
              $region106: #{lenet5_variant2_forward.4} parent=99 // loop_footer_branch
                %797 = sbr.rel target = $region102
              $region107: #{lenet5_variant2_forward.4} parent=99 // loop_exit
                _
              %s821 = sshrl.u32 %s782, 2
              %s822 = sand.u32 %s782, 3
              %s823 = smul.u32 %s821, 4
              %s824 = smul.u32 4, %s823
              %s825 = scalar_lea.vmem %s775, %s824 [#allocation3]
              %s826 = smul.u32 4, %s823
              %s827 = scalar_lea.vmem %s786, %s826
              // While loop
              $region108: #{lenet5_variant2_forward.4} parent=99 // loop_pre_header
                _
              $region109: #{lenet5_variant2_forward.4} parent=99 // loop_header
                %s829 = sphi 0, %s831
                %p830 = scmp.ge.s32.totalorder %s829, %s822
                %s834 = sphi 0, %s841
                %s835 = sphi %s825, %s844
                %s836 = sphi %s827, %s845
              $region110: #{lenet5_variant2_forward.4} parent=99 // loop_header_branch
                %833 = sbr.rel (%p830) target = $region114
              $region111: #{lenet5_variant2_forward.4} parent=99 // loop_body
                %v837 = vld [vmem:[%s835] sm:%s795]
                %838 = vst [vmem:[%s836] sm:%s795] %v837
                %s839 = sadd.s32 1, %s834
                %p840 = scmp.ge.s32.totalorder %s839, %s822
                %s841 = scalar_select %p840, 0, %s839
                %s842 = smul.u32 %s841, 4
                %s843 = smul.u32 %s841, 4
                %s844 = scalar_lea.vmem %s825, %s842 [#allocation3]
                %s845 = scalar_lea.vmem %s827, %s843
              $region112: #{lenet5_variant2_forward.4} parent=99 // loop_footer
                %s831 = sadd.s32 %s829, 1
              $region113: #{lenet5_variant2_forward.4} parent=99 // loop_footer_branch
                %828 = sbr.rel target = $region109
              $region114: #{lenet5_variant2_forward.4} parent=99 // loop_exit
                _
            $region100: #{lenet5_variant2_forward.4} parent=91 // pred_fallthru
              _
          $region92: #{lenet5_variant2_forward.4} parent=87 // pred_fallthru
            _
          %900 = vnop
        $region88: #{lenet5_variant2_forward.4} parent=79 // pred_fallthru
          _
      $region80: #{lenet5_variant2_forward.4} parent=5 // pred_fallthru
        _
      %p901 = scmp.le.s32.totalorder 2, %s9
      // Predicated region
      $region133: #{lenet5_variant2_forward.4} parent=5 // pred_check
        %p902 = pneg %p901
      $region134: #{lenet5_variant2_forward.4} parent=5 // pred_check_branch
        %904 = sbr.rel (%p902) target = $region136
      $region135: #{lenet5_variant2_forward.4} parent=5 // pred_region
        %s905 = ssub.s32 %s9, 2
        // Predicated region
        $region137: #{lenet5_variant2_forward.4} parent=135 // pred_check
          %p906 = pneg %p106
        $region138: #{lenet5_variant2_forward.4} parent=135 // pred_check_branch
          %908 = sbr.rel (%p906) target = $region140
        $region139: #{lenet5_variant2_forward.4} parent=135 // pred_region
          %s909 = sand.u32 %s91, 1
          %s910 = sand.u32 %s91, 1
          %s911 = smul.addr %s910, 16
          %s912 = scalar_lea.vmem [#allocation3], %s911
        $region140: #{lenet5_variant2_forward.4} parent=135 // pred_fallthru
          _
      $region136: #{lenet5_variant2_forward.4} parent=5 // pred_fallthru
        _
    $region6: #{lenet5_variant2_forward.4} parent=1 // loop_footer
      %s13 = sadd.s32 1, %s9
    $region7: #{lenet5_variant2_forward.4} parent=1 // loop_footer_branch
      %8 = sbr.rel target = $region3
    $region8: #{lenet5_variant2_forward.4} parent=1 // loop_exit
      _

// kernel: lenet5_variant2_forward.5
$region0: #{lenet5_variant2_forward.5}
  #allocation0 [shape = 'u32[]', space=smem, size = 0x4, offset = 0x4, fixed_abs, tag = 'smem constant byte address 0x4 - core index']
  #allocation1 [shape = 'u32[72,128]{1,0:T(1,128)}', space=vmem, size = 0x9000, scoped, tag = 'internal scratch']
  %s0 = inlined_call_operand.vmem [shape: bf16[2,512], index: 0, kind: input, shape index: {}]
  %s1 = inlined_call_operand.vmem [shape: bf16[512,128], index: 1, kind: input, shape index: {}]
  %s2 = inlined_call_operand.vmem [shape: f32[1,128], index: 2, kind: input, shape index: {}]
  %s3 = inlined_call_operand.vmem [shape: bf16[128,128], index: 3, kind: input, shape index: {}]
  %s4 = inlined_call_operand.vmem [shape: f32[1,128], index: 4, kind: input, shape index: {}]
  %s5 = inlined_call_operand.vmem [shape: bf16[128,128], index: 5, kind: input, shape index: {}]
  %s6 = inlined_call_operand.vmem [shape: f32[1,128], index: 6, kind: input, shape index: {}]
  %s7 = inlined_call_operand.hbm [shape: f32[2,128], index: 7, kind: output, shape index: {}]
  %s8 = sld [smem:[#allocation0]]
  $region38: #{lenet5_variant2_forward.5} parent=0
    _
  %s10 = ssub.s32 1, %s8
  %s11 = scalar_select 0, %s10, %s8
  $region1: #{lenet5_variant2_forward.5} parent=0
    #allocation2 [shape = 'u8[1024]{0}', space=vmem, size = 0x400, scoped, tag = 'output window, operand 0, single buffered']
    #allocation3 [shape = 's32[1]{0}', space=sflag, size = 0x4, scoped, tag = 'scoped memory for lenet5_variant2_forward.5']
    %12 = vsyncpa [#allocation3], 0
    // Predicated region
    $region2: #{lenet5_variant2_forward.5} parent=1 // pred_check
      _
    $region3: #{lenet5_variant2_forward.5} parent=1 // pred_check_branch
      %14 = sbr.rel (0) target = $region5
    $region4: #{lenet5_variant2_forward.5} parent=1 // pred_region
      _
    $region5: #{lenet5_variant2_forward.5} parent=1 // pred_fallthru
      _
    // Predicated region
    $region6: #{lenet5_variant2_forward.5} parent=1 // pred_check
      _
    $region7: #{lenet5_variant2_forward.5} parent=1 // pred_check_branch
      %16 = sbr.rel (0) target = $region9
    $region8: #{lenet5_variant2_forward.5} parent=1 // pred_region
      _
    $region9: #{lenet5_variant2_forward.5} parent=1 // pred_fallthru
      _
    // Predicated region
    $region10: #{lenet5_variant2_forward.5} parent=1 // pred_check
      _
    $region11: #{lenet5_variant2_forward.5} parent=1 // pred_check_branch
      %18 = sbr.rel (0) target = $region13
    $region12: #{lenet5_variant2_forward.5} parent=1 // pred_region
      _
    $region13: #{lenet5_variant2_forward.5} parent=1 // pred_fallthru
      _
    // Predicated region
    $region14: #{lenet5_variant2_forward.5} parent=1 // pred_check
      _
    $region15: #{lenet5_variant2_forward.5} parent=1 // pred_check_branch
      %20 = sbr.rel (0) target = $region17
    $region16: #{lenet5_variant2_forward.5} parent=1 // pred_region
      _
    $region17: #{lenet5_variant2_forward.5} parent=1 // pred_fallthru
      _
    // Predicated region
    $region18: #{lenet5_variant2_forward.5} parent=1 // pred_check
      _
    $region19: #{lenet5_variant2_forward.5} parent=1 // pred_check_branch
      %22 = sbr.rel (0) target = $region21
    $region20: #{lenet5_variant2_forward.5} parent=1 // pred_region
      _
    $region21: #{lenet5_variant2_forward.5} parent=1 // pred_fallthru
      _
    // Predicated region
    $region22: #{lenet5_variant2_forward.5} parent=1 // pred_check
      _
    $region23: #{lenet5_variant2_forward.5} parent=1 // pred_check_branch
      %24 = sbr.rel (0) target = $region25
    $region24: #{lenet5_variant2_forward.5} parent=1 // pred_region
      _
    $region25: #{lenet5_variant2_forward.5} parent=1 // pred_fallthru
      _
    // Predicated region
    $region26: #{lenet5_variant2_forward.5} parent=1 // pred_check
      _
    $region27: #{lenet5_variant2_forward.5} parent=1 // pred_check_branch
      %26 = sbr.rel (0) target = $region29
    $region28: #{lenet5_variant2_forward.5} parent=1 // pred_region
      _
    $region29: #{lenet5_variant2_forward.5} parent=1 // pred_fallthru
      _
    %v27 = vld [vmem:[%s0] sm:$0xf]
    %v28 = vld [vmem:[%s1] sm:$0xf]
    %v29 = vld [vmem:[%s1 + $0x4] sm:$0xf]
    %v30 = vld [vmem:[%s1 + $0x8] sm:$0xf]
    %v31 = vld [vmem:[%s1 + $0xc] sm:$0xf]
    %v32 = vld [vmem:[%s1 + $0x10] sm:$0xf]
    %v33 = vld [vmem:[%s1 + $0x14] sm:$0xf]
    %v34 = vld [vmem:[%s1 + $0x18] sm:$0xf]
    %v35 = vld [vmem:[%s1 + $0x1c] sm:$0xf]
    %v36 = vld [vmem:[%s1 + $0x20] sm:$0xf]
    %v37 = vld [vmem:[%s1 + $0x24] sm:$0xf]
    %v38 = vld [vmem:[%s1 + $0x28] sm:$0xf]
    %v39 = vld [vmem:[%s1 + $0x2c] sm:$0xf]
    %v40 = vld [vmem:[%s1 + $0x30] sm:$0xf]
    %v41 = vld [vmem:[%s1 + $0x34] sm:$0xf]
    %v42 = vld [vmem:[%s1 + $0x38] sm:$0xf]
    %v43 = vld [vmem:[%s1 + $0x3c] sm:$0xf]
    %v44 = vld [vmem:[%s1 + $0x40] sm:$0xf]
    %v45 = vld [vmem:[%s1 + $0x44] sm:$0xf]
    %v46 = vld [vmem:[%s1 + $0x48] sm:$0xf]
    %v47 = vld [vmem:[%s1 + $0x4c] sm:$0xf]
    %v48 = vld [vmem:[%s1 + $0x50] sm:$0xf]
    %v49 = vld [vmem:[%s1 + $0x54] sm:$0xf]
    %v50 = vld [vmem:[%s1 + $0x58] sm:$0xf]
    %v51 = vld [vmem:[%s1 + $0x5c] sm:$0xf]
    %v52 = vld [vmem:[%s1 + $0x60] sm:$0xf]
    %v53 = vld [vmem:[%s1 + $0x64] sm:$0xf]
    %v54 = vld [vmem:[%s1 + $0x68] sm:$0xf]
    %v55 = vld [vmem:[%s1 + $0x6c] sm:$0xf]
    %v56 = vld [vmem:[%s1 + $0x70] sm:$0xf]
    %v57 = vld [vmem:[%s1 + $0x74] sm:$0xf]
    %v58 = vld [vmem:[%s1 + $0x78] sm:$0xf]
    %v59 = vld [vmem:[%s1 + $0x7c] sm:$0xf]
    %v60 = vld [vmem:[%s1 + $0x80] sm:$0xf]
    %v61 = vld [vmem:[%s1 + $0x84] sm:$0xf]
    %v62 = vld [vmem:[%s1 + $0x88] sm:$0xf]
    %v63 = vld [vmem:[%s1 + $0x8c] sm:$0xf]
    %v64 = vld [vmem:[%s1 + $0x90] sm:$0xf]
    %v65 = vld [vmem:[%s1 + $0x94] sm:$0xf]
    %v66 = vld [vmem:[%s1 + $0x98] sm:$0xf]
    %v67 = vld [vmem:[%s1 + $0x9c] sm:$0xf]
    %v68 = vld [vmem:[%s1 + $0xa0] sm:$0xf]
    %v69 = vld [vmem:[%s1 + $0xa4] sm:$0xf]
    %v70 = vld [vmem:[%s1 + $0xa8] sm:$0xf]
    %v71 = vld [vmem:[%s1 + $0xac] sm:$0xf]
    %v72 = vld [vmem:[%s1 + $0xb0] sm:$0xf]
    %v73 = vld [vmem:[%s1 + $0xb4] sm:$0xf]
    %v74 = vld [vmem:[%s1 + $0xb8] sm:$0xf]
    %v75 = vld [vmem:[%s1 + $0xbc] sm:$0xf]
    %v76 = vld [vmem:[%s1 + $0xc0] sm:$0xf]
    %v77 = vld [vmem:[%s1 + $0xc4] sm:$0xf]
    %v78 = vld [vmem:[%s1 + $0xc8] sm:$0xf]
    %v79 = vld [vmem:[%s1 + $0xcc] sm:$0xf]
    %v80 = vld [vmem:[%s1 + $0xd0] sm:$0xf]
    %v81 = vld [vmem:[%s1 + $0xd4] sm:$0xf]
    %v82 = vld [vmem:[%s1 + $0xd8] sm:$0xf]
    %v83 = vld [vmem:[%s1 + $0xdc] sm:$0xf]
    %v84 = vld [vmem:[%s1 + $0xe0] sm:$0xf]
    %v85 = vld [vmem:[%s1 + $0xe4] sm:$0xf]
    %v86 = vld [vmem:[%s1 + $0xe8] sm:$0xf]
    %v87 = vld [vmem:[%s1 + $0xec] sm:$0xf]
    %v88 = vld [vmem:[%s1 + $0xf0] sm:$0xf]
    %v89 = vld [vmem:[%s1 + $0xf4] sm:$0xf]
    %v90 = vld [vmem:[%s1 + $0xf8] sm:$0xf]
    %v91 = vld [vmem:[%s1 + $0xfc] sm:$0xf]
    %v92 = vld [vmem:[%s2] sm:$0x1]
    %v94 = vperm.slane %v92, 0
    %97 = vst [vmem:[#allocation1] ss:$9 sm:$0xff] %v27
    %v98 = vld [vmem:[#allocation1] sm:$0xff]
    %v99 = vld [vmem:[#allocation1 + $0x9] sm:$0xff]
    %v100 = vld [vmem:[#allocation1 + $0x12] sm:$0xff]
    %v101 = vld [vmem:[#allocation1 + $0x1b] sm:$0xff]
    %v170 = vunpack.c.l.b16 %v28
    %v171 = vunpack.c.l.b16 %v29
    %v172 = vunpack.c.l.b16 %v30
    %v173 = vunpack.c.l.b16 %v31
    %v174 = vunpack.c.l.b16 %v32
    %v175 = vunpack.c.l.b16 %v33
    %v176 = vunpack.c.l.b16 %v34
    %v177 = vunpack.c.l.b16 %v35
    %v178 = vunpack.c.l.b16 %v36
    %v179 = vunpack.c.l.b16 %v37
    %v180 = vunpack.c.l.b16 %v38
    %v181 = vunpack.c.l.b16 %v39
    %v182 = vunpack.c.l.b16 %v40
    %v183 = vunpack.c.l.b16 %v41
    %v184 = vunpack.c.l.b16 %v42
    %v185 = vunpack.c.l.b16 %v43
    %v186 = vunpack.c.l.b16 %v44
    %v187 = vunpack.c.l.b16 %v45
    %v188 = vunpack.c.l.b16 %v46
    %v189 = vunpack.c.l.b16 %v47
    %v190 = vunpack.c.l.b16 %v48
    %v191 = vunpack.c.l.b16 %v49
    %v192 = vunpack.c.l.b16 %v50
    %v193 = vunpack.c.l.b16 %v51
    %v194 = vunpack.c.l.b16 %v52
    %v195 = vunpack.c.l.b16 %v53
    %v196 = vunpack.c.l.b16 %v54
    %v197 = vunpack.c.l.b16 %v55
    %v198 = vunpack.c.l.b16 %v56
    %v199 = vunpack.c.l.b16 %v57
    %v200 = vunpack.c.l.b16 %v58
    %v201 = vunpack.c.l.b16 %v59
    %v202 = vunpack.c.l.b16 %v60
    %v203 = vunpack.c.l.b16 %v61
    %v204 = vunpack.c.l.b16 %v62
    %v205 = vunpack.c.l.b16 %v63
    %v206 = vunpack.c.l.b16 %v64
    %v207 = vunpack.c.l.b16 %v65
    %v208 = vunpack.c.l.b16 %v66
    %v209 = vunpack.c.l.b16 %v67
    %v210 = vunpack.c.l.b16 %v68
    %v211 = vunpack.c.l.b16 %v69
    %v212 = vunpack.c.l.b16 %v70
    %v213 = vunpack.c.l.b16 %v71
    %v214 = vunpack.c.l.b16 %v72
    %v215 = vunpack.c.l.b16 %v73
    %v216 = vunpack.c.l.b16 %v74
    %v217 = vunpack.c.l.b16 %v75
    %v218 = vunpack.c.l.b16 %v76
    %v219 = vunpack.c.l.b16 %v77
    %v220 = vunpack.c.l.b16 %v78
    %v221 = vunpack.c.l.b16 %v79
    %v222 = vunpack.c.l.b16 %v80
    %v223 = vunpack.c.l.b16 %v81
    %v224 = vunpack.c.l.b16 %v82
    %v225 = vunpack.c.l.b16 %v83
    %v226 = vunpack.c.l.b16 %v84
    %v227 = vunpack.c.l.b16 %v85
    %v228 = vunpack.c.l.b16 %v86
    %v229 = vunpack.c.l.b16 %v87
    %v230 = vunpack.c.l.b16 %v88
    %v231 = vunpack.c.l.b16 %v89
    %v232 = vunpack.c.l.b16 %v90
    %v233 = vunpack.c.l.b16 %v91
    %v234 = vpack.c.b16 %v171, %v170
    %v235 = vpack.c.b16 %v173, %v172
    %v236 = vpack.c.b16 %v175, %v174
    %v237 = vpack.c.b16 %v177, %v176
    %v238 = vpack.c.b16 %v179, %v178
    %v239 = vpack.c.b16 %v181, %v180
    %v240 = vpack.c.b16 %v183, %v182
    %v241 = vpack.c.b16 %v185, %v184
    %v242 = vpack.c.b16 %v187, %v186
    %v243 = vpack.c.b16 %v189, %v188
    %v244 = vpack.c.b16 %v191, %v190
    %v245 = vpack.c.b16 %v193, %v192
    %v246 = vpack.c.b16 %v195, %v194
    %v247 = vpack.c.b16 %v197, %v196
    %v248 = vpack.c.b16 %v199, %v198
    %v249 = vpack.c.b16 %v201, %v200
    %v250 = vpack.c.b16 %v203, %v202
    %v251 = vpack.c.b16 %v205, %v204
    %v252 = vpack.c.b16 %v207, %v206
    %v253 = vpack.c.b16 %v209, %v208
    %v254 = vpack.c.b16 %v211, %v210
    %v255 = vpack.c.b16 %v213, %v212
    %v256 = vpack.c.b16 %v215, %v214
    %v257 = vpack.c.b16 %v217, %v216
    %v258 = vpack.c.b16 %v219, %v218
    %v259 = vpack.c.b16 %v221, %v220
    %v260 = vpack.c.b16 %v223, %v222
    %v261 = vpack.c.b16 %v225, %v224
    %v262 = vpack.c.b16 %v227, %v226
    %v263 = vpack.c.b16 %v229, %v228
    %v264 = vpack.c.b16 %v231, %v230
    %v265 = vpack.c.b16 %v233, %v232
    %298 = vmatpush.bf16.msra.mxu0 %v241
    %299 = vmatpush.bf16.msra.mxu0 %v240
    %300 = vmatpush.bf16.msra.mxu0 %v239
    %301 = vmatpush.bf16.msra.mxu0 %v238
    %302 = vmatpush.bf16.msra.mxu0 %v237
    %303 = vmatpush.bf16.msra.mxu0 %v236
    %304 = vmatpush.bf16.msra.mxu0 %v235
    %305 = vmatpush.bf16.msra.mxu0 %v234
    %306 = vmatmul.bf16.gmra.mxu0 %v98
    %v307 = vpop.f32.mrf.mxu0
    %v308 = vadd.f32 %v94, %v307
    %v309 = vpop.f32.mrf.mxu0
    %310 = vdwg.mxu0
    %311 = vmatpush.bf16.msra.mxu0 %v249
    %312 = vmatpush.bf16.msra.mxu0 %v248
    %313 = vmatpush.bf16.msra.mxu0 %v247
    %314 = vmatpush.bf16.msra.mxu0 %v246
    %315 = vmatpush.bf16.msra.mxu0 %v245
    %316 = vmatpush.bf16.msra.mxu0 %v244
    %317 = vmatpush.bf16.msra.mxu0 %v243
    %318 = vmatpush.bf16.msra.mxu0 %v242
    %319 = vmatmul.bf16.gmra.mxu0 %v99
    %v320 = vpop.f32.mrf.mxu0
    %v321 = vadd.f32 %v308, %v320
    %v322 = vpop.f32.mrf.mxu0
    %323 = vdwg.mxu0
    %324 = vmatpush.bf16.msra.mxu0 %v257
    %325 = vmatpush.bf16.msra.mxu0 %v256
    %326 = vmatpush.bf16.msra.mxu0 %v255
    %327 = vmatpush.bf16.msra.mxu0 %v254
    %328 = vmatpush.bf16.msra.mxu0 %v253
    %329 = vmatpush.bf16.msra.mxu0 %v252
    %330 = vmatpush.bf16.msra.mxu0 %v251
    %331 = vmatpush.bf16.msra.mxu0 %v250
    %332 = vmatmul.bf16.gmra.mxu0 %v100
    %v333 = vpop.f32.mrf.mxu0
    %v334 = vadd.f32 %v321, %v333
    %v335 = vpop.f32.mrf.mxu0
    %336 = vdwg.mxu0
    %337 = vmatpush.bf16.msra.mxu0 %v265
    %338 = vmatpush.bf16.msra.mxu0 %v264
    %339 = vmatpush.bf16.msra.mxu0 %v263
    %340 = vmatpush.bf16.msra.mxu0 %v262
    %341 = vmatpush.bf16.msra.mxu0 %v261
    %342 = vmatpush.bf16.msra.mxu0 %v260
    %343 = vmatpush.bf16.msra.mxu0 %v259
    %344 = vmatpush.bf16.msra.mxu0 %v258
    %345 = vmatmul.bf16.gmra.mxu0 %v101
    %v346 = vpop.f32.mrf.mxu0
    %v347 = vadd.f32 %v334, %v346
    %v348 = vpop.f32.mrf.mxu0
    %349 = vdwg.mxu0
    %v350 = vmax.f32 %v347, 0.0
    %v351 = vpack.c.bf16 %v350, %v350
    %v352 = vld [vmem:[%s3] sm:$0xf]
    %v353 = vld [vmem:[%s3 + $0x4] sm:$0xf]
    %v354 = vld [vmem:[%s3 + $0x8] sm:$0xf]
    %v355 = vld [vmem:[%s3 + $0xc] sm:$0xf]
    %v356 = vld [vmem:[%s3 + $0x10] sm:$0xf]
    %v357 = vld [vmem:[%s3 + $0x14] sm:$0xf]
    %v358 = vld [vmem:[%s3 + $0x18] sm:$0xf]
    %v359 = vld [vmem:[%s3 + $0x1c] sm:$0xf]
    %v360 = vld [vmem:[%s3 + $0x20] sm:$0xf]
    %v361 = vld [vmem:[%s3 + $0x24] sm:$0xf]
    %v362 = vld [vmem:[%s3 + $0x28] sm:$0xf]
    %v363 = vld [vmem:[%s3 + $0x2c] sm:$0xf]
    %v364 = vld [vmem:[%s3 + $0x30] sm:$0xf]
    %v365 = vld [vmem:[%s3 + $0x34] sm:$0xf]
    %v366 = vld [vmem:[%s3 + $0x38] sm:$0xf]
    %v367 = vld [vmem:[%s3 + $0x3c] sm:$0xf]
    %v368 = vld [vmem:[%s4] sm:$0x1]
    %v370 = vperm.slane %v368, 0
    %v388 = vunpack.c.l.b16 %v352
    %v389 = vunpack.c.l.b16 %v353
    %v390 = vunpack.c.l.b16 %v354
    %v391 = vunpack.c.l.b16 %v355
    %v392 = vunpack.c.l.b16 %v356
    %v393 = vunpack.c.l.b16 %v357
    %v394 = vunpack.c.l.b16 %v358
    %v395 = vunpack.c.l.b16 %v359
    %v396 = vunpack.c.l.b16 %v360
    %v397 = vunpack.c.l.b16 %v361
    %v398 = vunpack.c.l.b16 %v362
    %v399 = vunpack.c.l.b16 %v363
    %v400 = vunpack.c.l.b16 %v364
    %v401 = vunpack.c.l.b16 %v365
    %v402 = vunpack.c.l.b16 %v366
    %v403 = vunpack.c.l.b16 %v367
    %v404 = vpack.c.b16 %v389, %v388
    %v405 = vpack.c.b16 %v391, %v390
    %v406 = vpack.c.b16 %v393, %v392
    %v407 = vpack.c.b16 %v395, %v394
    %v408 = vpack.c.b16 %v397, %v396
    %v409 = vpack.c.b16 %v399, %v398
    %v410 = vpack.c.b16 %v401, %v400
    %v411 = vpack.c.b16 %v403, %v402
    %420 = vmatpush.bf16.msra.mxu0 %v411
    %421 = vmatpush.bf16.msra.mxu0 %v410
    %422 = vmatpush.bf16.msra.mxu0 %v409
    %423 = vmatpush.bf16.msra.mxu0 %v408
    %424 = vmatpush.bf16.msra.mxu0 %v407
    %425 = vmatpush.bf16.msra.mxu0 %v406
    %426 = vmatpush.bf16.msra.mxu0 %v405
    %427 = vmatpush.bf16.msra.mxu0 %v404
    %428 = vmatmul.bf16.gmra.mxu0 %v351
    %v429 = vpop.f32.mrf.mxu0
    %v430 = vadd.f32 %v370, %v429
    %v431 = vpop.f32.mrf.mxu0
    %432 = vdwg.mxu0
    %v433 = vmax.f32 %v430, 0.0
    %v434 = vpack.c.bf16 %v433, %v433
    %v435 = vld [vmem:[%s5] sm:$0xf]
    %v436 = vld [vmem:[%s5 + $0x4] sm:$0xf]
    %v437 = vld [vmem:[%s5 + $0x8] sm:$0xf]
    %v438 = vld [vmem:[%s5 + $0xc] sm:$0xf]
    %v439 = vld [vmem:[%s5 + $0x10] sm:$0xf]
    %v440 = vld [vmem:[%s5 + $0x14] sm:$0xf]
    %v441 = vld [vmem:[%s5 + $0x18] sm:$0xf]
    %v442 = vld [vmem:[%s5 + $0x1c] sm:$0xf]
    %v443 = vld [vmem:[%s5 + $0x20] sm:$0xf]
    %v444 = vld [vmem:[%s5 + $0x24] sm:$0xf]
    %v445 = vld [vmem:[%s5 + $0x28] sm:$0xf]
    %v446 = vld [vmem:[%s5 + $0x2c] sm:$0xf]
    %v447 = vld [vmem:[%s5 + $0x30] sm:$0xf]
    %v448 = vld [vmem:[%s5 + $0x34] sm:$0xf]
    %v449 = vld [vmem:[%s5 + $0x38] sm:$0xf]
    %v450 = vld [vmem:[%s5 + $0x3c] sm:$0xf]
    %v451 = vld [vmem:[%s6] sm:$0x1]
    %v453 = vperm.slane %v451, 0
    %v471 = vunpack.c.l.b16 %v435
    %v472 = vunpack.c.l.b16 %v436
    %v473 = vunpack.c.l.b16 %v437
    %v474 = vunpack.c.l.b16 %v438
    %v475 = vunpack.c.l.b16 %v439
    %v476 = vunpack.c.l.b16 %v440
    %v477 = vunpack.c.l.b16 %v441
    %v478 = vunpack.c.l.b16 %v442
    %v479 = vunpack.c.l.b16 %v443
    %v480 = vunpack.c.l.b16 %v444
    %v481 = vunpack.c.l.b16 %v445
    %v482 = vunpack.c.l.b16 %v446
    %v483 = vunpack.c.l.b16 %v447
    %v484 = vunpack.c.l.b16 %v448
    %v485 = vunpack.c.l.b16 %v449
    %v486 = vunpack.c.l.b16 %v450
    %v487 = vpack.c.b16 %v472, %v471
    %v488 = vpack.c.b16 %v474, %v473
    %v489 = vpack.c.b16 %v476, %v475
    %v490 = vpack.c.b16 %v478, %v477
    %v491 = vpack.c.b16 %v480, %v479
    %v492 = vpack.c.b16 %v482, %v481
    %v493 = vpack.c.b16 %v484, %v483
    %v494 = vpack.c.b16 %v486, %v485
    %503 = vmatpush.bf16.msra.mxu0 %v494
    %504 = vmatpush.bf16.msra.mxu0 %v493
    %505 = vmatpush.bf16.msra.mxu0 %v492
    %506 = vmatpush.bf16.msra.mxu0 %v491
    %507 = vmatpush.bf16.msra.mxu0 %v490
    %508 = vmatpush.bf16.msra.mxu0 %v489
    %509 = vmatpush.bf16.msra.mxu0 %v488
    %510 = vmatpush.bf16.msra.mxu0 %v487
    %511 = vmatmul.bf16.gmra.mxu0 %v434
    %v512 = vpop.f32.mrf.mxu0
    %v513 = vadd.f32 %v453, %v512
    %v514 = vpop.f32.mrf.mxu0
    %515 = vdwg.mxu0
    %516 = vst [vmem:[#allocation2] sm:$0x3] %v513
    // Predicated region
    $region30: #{lenet5_variant2_forward.5} parent=1 // pred_check
      _
    $region31: #{lenet5_variant2_forward.5} parent=1 // pred_check_branch
      %518 = sbr.rel (0) target = $region33
    $region32: #{lenet5_variant2_forward.5} parent=1 // pred_region
      %520 = vsyncadd [#allocation3], 0
      %s522 = sshll.u32 [#allocation2], 4
      %s523 = int_to_ptr.vmem [resolvable:$true] %s522
      %s524 = sshll.u32 %s7, 4
      %s525 = int_to_ptr.hbm [resolvable:$true] %s524
      %527 = dma.vmem_to_hbm [thread:$0]  %s523, 32, %s525, [#allocation3]
    $region33: #{lenet5_variant2_forward.5} parent=1 // pred_fallthru
      _
    // Predicated region
    $region34: #{lenet5_variant2_forward.5} parent=1 // pred_check
      _
    $region35: #{lenet5_variant2_forward.5} parent=1 // pred_check_branch
      %529 = sbr.rel (0) target = $region37
    $region36: #{lenet5_variant2_forward.5} parent=1 // pred_region
      %531 = dma.done [#allocation3], 32
    $region37: #{lenet5_variant2_forward.5} parent=1 // pred_fallthru
      _
    %532 = vsyncpa [#allocation3], 1

</llo_original>
